<compile_context>
chip_gen: v5e
topology: v5e:2x2
jax: 0.10.0
libtpu: 0.0.40
codegen_flags: <defaults>
</compile_context>

<pallas_src>
import functools
import math

import jax
import jax.numpy as jnp
from jax.experimental import pallas as pl
from jax.experimental.pallas import tpu as pltpu


# ----------------------------------------------------------------------------
# Tile preferences for the standalone linear kernel.  At the toy size every
# block is full-extent; when scaling up, re-derive against VMEM (64 MiB on
# v7x, 128 MiB on v5e/v6e) and raise vmem_limit_bytes if tiles exceed the
# scoped default.
# ----------------------------------------------------------------------------
TM_PREF = 256
TN_PREF = 256
TK_PREF = 512


def _ceil_to(x, m):
    return ((x + m - 1) // m) * m


def _choose_tile(size, pref, align):
    """Full dim if it fits the preference, else the largest align-multiple
    <= pref that divides it."""
    if size <= pref:
        return size
    t = (pref // align) * align
    while t >= align:
        if size % t == 0:
            return t
        t -= align
    raise ValueError(f"cannot tile dim of size {size} with alignment {align}")


# ----------------------------------------------------------------------------
# In-kernel helpers (f32, VPU/EUP-friendly ops only)
# ----------------------------------------------------------------------------
def _layernorm(x, g, b, eps):
    mean = jnp.mean(x, axis=-1, keepdims=True)
    xc = x - mean
    var = jnp.mean(xc * xc, axis=-1, keepdims=True)   # biased, as torch LN
    return xc * jax.lax.rsqrt(var + eps) * g + b


def _erf_f32(x):
    # float32 erf via a rational polynomial (matches torch.erf to ~1e-7).
    alpha = (0.00022905065861350646, 0.0034082910107109506,
             0.050955695062380861, 0.18520832239976145, 1.128379143519084)
    beta = (-1.1791602954361697e-7, 2.3547966471313185e-5,
            0.0010179625278914885, 0.014070470171167667,
            0.11098505178285362, 0.49746925110067538, 1.0)
    x = jnp.clip(x, -4.0, 4.0)
    x2 = x * x
    p = alpha[0] * x2 + alpha[1]
    for c in alpha[2:]:
        p = p * x2 + c
    q = beta[0] * x2 + beta[1]
    for c in beta[2:]:
        q = q * x2 + c
    return x * p * pl.reciprocal(q, approx=False)


def _gelu_exact(x):
    # torch.nn.GELU() default = exact (erf-based) GELU
    return 0.5 * x * (1.0 + _erf_f32(x * 0.7071067811865476))


# ----------------------------------------------------------------------------
# Tiled linear kernel: [LayerNorm ->] x @ w_bf16 + b   (w pre-cast to bf16)
# ----------------------------------------------------------------------------
def _linear_kernel(x_ref, w_ref, b_ref, *rest, fuse_ln, ln_eps):
    if fuse_ln:
        g_ref, bb_ref, o_ref, acc_ref = rest
    else:
        o_ref, acc_ref = rest

    k = pl.program_id(2)

    @pl.when(k == 0)
    def _():
        acc_ref[...] = jnp.zeros_like(acc_ref)

    x = x_ref[...].astype(jnp.float32)
    if fuse_ln:
        # full-K block when LN is fused, so row statistics are exact
        x = _layernorm(x, g_ref[...], bb_ref[...], ln_eps)

    acc_ref[...] += jnp.dot(x.astype(jnp.bfloat16), w_ref[...],
                            preferred_element_type=jnp.float32)

    @pl.when(k == pl.num_programs(2) - 1)
    def _():
        o_ref[...] = (acc_ref[...] + b_ref[...]).astype(o_ref.dtype)


def fused_linear(x, w, b, *, ln_gamma=None, ln_beta=None, ln_eps=1e-5,
                 tm_pref=TM_PREF, tn_pref=TN_PREF, tk_pref=TK_PREF):
    """x:(M,K) f32 @ w:(K,N) bf16 + b:(1,N) f32, optional fused pre-LayerNorm
    over K (gamma/beta shaped (1,K)).  Parameters are prepared once at setup
    (bf16 weights, (1,N) biases) — no per-call padding/casting here."""
    M, K = x.shape
    N = w.shape[1]
    fuse_ln = ln_gamma is not None

    tm = _choose_tile(M, tm_pref, 8)
    tn = _choose_tile(N, tn_pref, 128)
    tk = K if fuse_ln else _choose_tile(K, tk_pref, 128)
    grid = (M // tm, N // tn, K // tk)

    in_specs = [
        pl.BlockSpec((tm, tk), lambda i, j, k: (i, k)),
        pl.BlockSpec((tk, tn), lambda i, j, k: (k, j)),
        pl.BlockSpec((1, tn), lambda i, j, k: (0, j)),
    ]
    inputs = [x, w, b]
    if fuse_ln:
        in_specs += [pl.BlockSpec((1, K), lambda i, j, k: (0, 0)),
                     pl.BlockSpec((1, K), lambda i, j, k: (0, 0))]
        inputs += [ln_gamma, ln_beta]

    return pl.pallas_call(
        functools.partial(_linear_kernel, fuse_ln=fuse_ln, ln_eps=ln_eps),
        out_shape=jax.ShapeDtypeStruct((M, N), jnp.float32),
        grid=grid,
        in_specs=in_specs,
        out_specs=pl.BlockSpec((tm, tn), lambda i, j, k: (i, j)),
        scratch_shapes=[pltpu.VMEM((tm, tn), jnp.float32)],
        compiler_params=pltpu.CompilerParams(
            dimension_semantics=("parallel", "parallel", "arbitrary")),
    )(*inputs)


# ----------------------------------------------------------------------------
# Fully fused transformer block:
#   x + proj(MHA(LN1(x)))   then   x + fc2(GELU(fc1(LN2(x))))
# one grid step per batch element; all weights resident in VMEM.
# ----------------------------------------------------------------------------
def _block_kernel(x_ref,
                  ln1_g_ref, ln1_b_ref, qkv_w_ref, qkv_b_ref,
                  proj_w_ref, proj_b_ref,
                  ln2_g_ref, ln2_b_ref, fc1_w_ref, fc1_b_ref,
                  fc2_w_ref, fc2_b_ref,
                  o_ref, *, num_heads, head_dim, s_real, quiet, ln_eps):
    dim = num_heads * head_dim
    s_pad = x_ref.shape[1]

    x = x_ref[0].astype(jnp.float32)                       # (S_pad, dim)

    # ---- LN1 + QKV projection (1/sqrt(d) pre-folded into Q weights) ----
    h = _layernorm(x, ln1_g_ref[...], ln1_b_ref[...], ln_eps)
    qkv = jnp.dot(h.astype(jnp.bfloat16), qkv_w_ref[...],
                  preferred_element_type=jnp.float32) + qkv_b_ref[...]

    # ---- multi-head attention; padded key columns masked out ----
    col = jax.lax.broadcasted_iota(jnp.int32, (s_pad, s_pad), 1)
    key_mask = col < s_real
    ctx_heads = []
    # TODO(synk): for many heads, switch to a lax.fori_loop / head-packed MXU
    # layout to bound live ranges; at 4 heads the unrolled loop is fine.
    for hh in range(num_heads):
        q = qkv[:, hh * head_dim:(hh + 1) * head_dim]
        k = qkv[:, dim + hh * head_dim:dim + (hh + 1) * head_dim]
        v = qkv[:, 2 * dim + hh * head_dim:2 * dim + (hh + 1) * head_dim]
        s = jax.lax.dot_general(                            # q @ k^T, no k.T
            q.astype(jnp.bfloat16), k.astype(jnp.bfloat16),
            (((1,), (1,)), ((), ())),
            preferred_element_type=jnp.float32)             # (S_pad, S_pad)
        s = jnp.where(key_mask, s, -1e30)
        m = jnp.max(s, axis=-1, keepdims=True)
        p = jnp.exp(s - m)
        denom = jnp.sum(p, axis=-1, keepdims=True)
        if quiet:
            # quiet_attention: +1 added to the (un-shifted) softmax denominator
            denom = denom + jnp.exp(-m)
        c = jnp.dot(p.astype(jnp.bfloat16), v.astype(jnp.bfloat16),
                    preferred_element_type=jnp.float32)     # unnormalized PV
        ctx_heads.append(c * pl.reciprocal(denom, approx=True))
    ctx = jnp.concatenate(ctx_heads, axis=-1)               # (S_pad, dim)

    # ---- output projection + residual ----
    x = x + jnp.dot(ctx.astype(jnp.bfloat16), proj_w_ref[...],
                    preferred_element_type=jnp.float32) + proj_b_ref[...]

    # ---- LN2 + fc1 + GELU + fc2 + residual ----
    h = _layernorm(x, ln2_g_ref[...], ln2_b_ref[...], ln_eps)
    h = jnp.dot(h.astype(jnp.bfloat16), fc1_w_ref[...],
                preferred_element_type=jnp.float32) + fc1_b_ref[...]
    h = _gelu_exact(h)
    x = x + jnp.dot(h.astype(jnp.bfloat16), fc2_w_ref[...],
                    preferred_element_type=jnp.float32) + fc2_b_ref[...]

    o_ref[0] = x.astype(o_ref.dtype)                        # 128-lane dense


_BLOCK_PARAM_ORDER = ("ln1_g", "ln1_b", "qkv_w", "qkv_b", "proj_w", "proj_b",
                      "ln2_g", "ln2_b", "fc1_w", "fc1_b", "fc2_w", "fc2_b")


def transformer_block(xseq, blk, *, num_heads, head_dim, s_real, quiet):
    """xseq: (B, S_pad, dim) f32 residual stream -> (B, S_pad, dim) f32."""
    B, S_pad, dim = xseq.shape
    in_specs = [pl.BlockSpec((1, S_pad, dim), lambda b: (b, 0, 0))]
    inputs = [xseq]
    for name in _BLOCK_PARAM_ORDER:
        a = blk[name]
        in_specs.append(pl.BlockSpec(a.shape, lambda b: (0, 0)))
        inputs.append(a)

    return pl.pallas_call(
        functools.partial(_block_kernel, num_heads=num_heads,
                          head_dim=head_dim, s_real=s_real, quiet=quiet,
                          ln_eps=1e-5),
        out_shape=jax.ShapeDtypeStruct((B, S_pad, dim), xseq.dtype),
        grid=(B,),
        in_specs=in_specs,
        out_specs=pl.BlockSpec((1, S_pad, dim), lambda b: (b, 0, 0)),
        compiler_params=pltpu.CompilerParams(
            dimension_semantics=("parallel",)),
    )(*inputs)


# ----------------------------------------------------------------------------
# Parameters
# ----------------------------------------------------------------------------
def init_params(key, *, patch_size, in_channel, dim, hidden_dim, num_blocks,
                num_patches, num_classes):
    """Torch-layout f32 parameters (as nn.Module would hold them)."""
    keys = jax.random.split(key, 8 + num_blocks)

    def nrm(k, shape, scale=0.02):
        return (scale * jax.random.normal(k, shape)).astype(jnp.float32)

    params = {
        # Conv2d(in_channel, dim, patch_size, stride=patch_size) as a matmul,
        # weight flattened over (C, ph, pw).
        "patch_w": nrm(keys[0], (in_channel * patch_size * patch_size, dim)),
        "patch_b": nrm(keys[1], (dim,)),
        "cls_token": jax.random.normal(keys[2], (1, 1, dim), jnp.float32),
        "pos_emb": jax.random.normal(keys[3], (1, num_patches + 1, dim),
                                     jnp.float32),
        "ln_g": jnp.ones((dim,), jnp.float32),
        "ln_b": jnp.zeros((dim,), jnp.float32),
        "head_w": nrm(keys[4], (dim, num_classes)),
        "head_b": jnp.zeros((num_classes,), jnp.float32),
        "blocks": [],
    }
    for bi in range(num_blocks):
        bk = jax.random.split(keys[8 + bi], 4)
        params["blocks"].append({
            "ln1_g": jnp.ones((dim,), jnp.float32),
            "ln1_b": jnp.zeros((dim,), jnp.float32),
            "qkv_w": nrm(bk[0], (dim, 3 * dim)),
            "qkv_b": jnp.zeros((3 * dim,), jnp.float32),    # qkv_bias=True
            "proj_w": nrm(bk[1], (dim, dim)),
            "proj_b": jnp.zeros((dim,), jnp.float32),
            "ln2_g": jnp.ones((dim,), jnp.float32),
            "ln2_b": jnp.zeros((dim,), jnp.float32),
            "fc1_w": nrm(bk[2], (dim, hidden_dim)),
            "fc1_b": jnp.zeros((hidden_dim,), jnp.float32),
            "fc2_w": nrm(bk[3], (hidden_dim, dim)),
            "fc2_b": jnp.zeros((dim,), jnp.float32),
        })
    return params


def prepare_params(raw, *, num_heads):
    """One-time parameter preparation (outside the jitted forward):
       * weights cast to bf16 (halves weight HBM traffic / VMEM),
       * biases and LN params reshaped to (1, N) f32,
       * attention scale 1/sqrt(head_dim) folded into Q weights / bias."""
    dim = raw["cls_token"].shape[-1]
    head_dim = dim // num_heads
    scale = 1.0 / math.sqrt(head_dim)

    def wq(w):                   # weight -> bf16
        return w.astype(jnp.bfloat16)

    def row(v):                  # (N,) -> (1, N) f32
        return v.reshape(1, -1).astype(jnp.float32)

    p = {
        "patch_w": wq(raw["patch_w"]),
        "patch_b": row(raw["patch_b"]),
        "cls_token": raw["cls_token"],
        "pos_emb": raw["pos_emb"],
        "ln_g": row(raw["ln_g"]),
        "ln_b": row(raw["ln_b"]),
        "head_w": wq(raw["head_w"]),
        "head_b": row(raw["head_b"]),
        "blocks": [],
    }
    for b in raw["blocks"]:
        qkv_w = b["qkv_w"].at[:, :dim].multiply(scale)      # fold scale into Q
        qkv_b = b["qkv_b"].at[:dim].multiply(scale)
        p["blocks"].append({
            "ln1_g": row(b["ln1_g"]), "ln1_b": row(b["ln1_b"]),
            "qkv_w": wq(qkv_w), "qkv_b": row(qkv_b),
            "proj_w": wq(b["proj_w"]), "proj_b": row(b["proj_b"]),
            "ln2_g": row(b["ln2_g"]), "ln2_b": row(b["ln2_b"]),
            "fc1_w": wq(b["fc1_w"]), "fc1_b": row(b["fc1_b"]),
            "fc2_w": wq(b["fc2_w"]), "fc2_b": row(b["fc2_b"]),
        })
    return p


# ----------------------------------------------------------------------------
# Forward
# ----------------------------------------------------------------------------
def vit_forward(params, x, *, patch_size, num_heads, quiet_attention):
    B, C, H, W = x.shape                      # NCHW, as in PyTorch
    ps = patch_size
    gh, gw = H // ps, W // ps
    num_patches = gh * gw
    dim = params["cls_token"].shape[-1]
    head_dim = dim // num_heads

    # ImagePatchEmbedding: Conv2d(C, dim, ps, stride=ps) == patchify + linear.
    # Patchify / concat / pos-add are cheap XLA layout ops outside the kernels.
    patches = x.reshape(B, C, gh, ps, gw, ps).transpose(0, 2, 4, 1, 3, 5)
    patches = patches.reshape(B * num_patches, C * ps * ps)
    tokens = fused_linear(patches, params["patch_w"], params["patch_b"],
                          tm_pref=16)   # >=2 parallel M tiles (v7x megacore)
    tokens = tokens.reshape(B, num_patches, dim)

    cls = jnp.broadcast_to(params["cls_token"], (B, 1, dim))
    xseq = jnp.concatenate([cls, tokens], axis=1) + params["pos_emb"]
    S = num_patches + 1

    # Pad the sequence once to a sublane-aligned length.  Padded rows are
    # inert: attention masks padded keys, and only row 0 (CLS) is read out.
    S_pad = _ceil_to(S, 8)
    if S_pad != S:
        xseq = jnp.pad(xseq, ((0, 0), (0, S_pad - S), (0, 0)))

    # One fused pallas_call per transformer block.
    for blk in params["blocks"]:
        xseq = transformer_block(xseq, blk, num_heads=num_heads,
                                 head_dim=head_dim, s_real=S,
                                 quiet=quiet_attention)

    # torch.index_select(x, 1, 0).squeeze(1) -> CLS token, then LN + head.
    cls_out = xseq[:, 0, :]
    out = fused_linear(cls_out, params["head_w"], params["head_b"],
                       ln_gamma=params["ln_g"], ln_beta=params["ln_b"],
                       ln_eps=1e-10)   # module uses eps=1e-10 for the final LN
    return out


# ----------------------------------------------------------------------------
if __name__ == "__main__":
    # Small config consistent with the module's constructor semantics
    # (dim=128 keeps feature axes lane-aligned; hidden = 4*dim).
    image_size = 16
    patch_size = 4
    in_channel = 3
    dim = 128
    hidden_dim = dim * 4
    num_heads = 4
    num_blocks = 2
    num_classes = 10
    batch = 2
    quiet_attention = False
    num_patches = (image_size // patch_size) ** 2

    key = jax.random.PRNGKey(0)
    pkey, xkey = jax.random.split(key)
    raw = init_params(pkey, patch_size=patch_size, in_channel=in_channel,
                      dim=dim, hidden_dim=hidden_dim, num_blocks=num_blocks,
                      num_patches=num_patches, num_classes=num_classes)
    params = prepare_params(raw, num_heads=num_heads)

    x = jax.random.normal(xkey, (batch, in_channel, image_size, image_size),
                          jnp.float32)

    fwd = jax.jit(functools.partial(
        vit_forward, patch_size=patch_size, num_heads=num_heads,
        quiet_attention=quiet_attention))

    out = fwd(params, x)
    jax.block_until_ready(out)
    assert out.shape == (batch, num_classes), out.shape
    assert bool(jnp.all(jnp.isfinite(out)))
    print("KERNEL_OK")
</pallas_src>

<mosaic_0001>
module attributes {stable_mosaic.version = 11 : i64} {
  func.func @_linear_kernel(%arg0: i32, %arg1: i32, %arg2: i32, %arg3: memref<16x48xf32, #tpu.memory_space<vmem>>, %arg4: memref<48x128xbf16, #tpu.memory_space<vmem>>, %arg5: memref<1x128xf32, #tpu.memory_space<vmem>>, %arg6: memref<16x128xf32, #tpu.memory_space<vmem>>, %arg7: memref<16x128xf32, #tpu.memory_space<vmem>>) attributes {dimension_semantics = [#tpu.dimension_semantics<parallel>, #tpu.dimension_semantics<parallel>, #tpu.dimension_semantics<arbitrary>], iteration_bounds = array<i64: 2, 1, 1>, scalar_prefetch = 0 : i64, scratch_operands = 1 : i64, tpu.core_type = #tpu.core_type<tc>, window_params = [{transform_indices = @transform_0, window_bounds = array<i64: 16, 48>}, {transform_indices = @transform_1, window_bounds = array<i64: 48, 128>}, {transform_indices = @transform_2, window_bounds = array<i64: 1, 128>}, {transform_indices = @transform_3, window_bounds = array<i64: 16, 128>}]} {
    %c0_i32 = arith.constant 0 : i32
    %0 = arith.cmpi eq, %arg2, %c0_i32 : i32
    %1 = arith.extui %0 : i1 to i32
    %c0_i32_0 = arith.constant 0 : i32
    %2 = arith.cmpi ne, %1, %c0_i32_0 : i32
    scf.if %2 {
      %cst_10 = arith.constant 0.000000e+00 : f32
      %13 = vector.broadcast %cst_10 : f32 to vector<16x128xf32>
      %c0_11 = arith.constant 0 : index
      %c0_12 = arith.constant 0 : index
      %14 = vector.load %arg7[%c0_11, %c0_12] : memref<16x128xf32, #tpu.memory_space<vmem>>, vector<16x128xf32>
      tpu.vector_store %arg7[%c0_11, %c0_12], %13 {strides = array<i32>} : memref<16x128xf32, #tpu.memory_space<vmem>>, vector<16x128xf32>,
    } else {
    }
    %c0 = arith.constant 0 : index
    %c0_1 = arith.constant 0 : index
    %3 = vector.load %arg3[%c0, %c0_1] : memref<16x48xf32, #tpu.memory_space<vmem>>, vector<16x48xf32>
    %c0_2 = arith.constant 0 : index
    %c0_3 = arith.constant 0 : index
    %4 = vector.load %arg7[%c0_2, %c0_3] : memref<16x128xf32, #tpu.memory_space<vmem>>, vector<16x128xf32>
    %5 = arith.truncf %3 : vector<16x48xf32> to vector<16x48xbf16>
    %c0_4 = arith.constant 0 : index
    %c0_5 = arith.constant 0 : index
    %6 = vector.load %arg4[%c0_4, %c0_5] : memref<48x128xbf16, #tpu.memory_space<vmem>>, vector<48x128xbf16>
    %cst = arith.constant dense<0.000000e+00> : vector<16x128xf32>
    %7 = tpu.matmul %5, %6, %cst {dimension_numbers = #tpu.dot_dimension_numbers<[1], [0], [0], [1], [0, 0, 1, 1], [], []>} : vector<16x48xbf16>, vector<48x128xbf16>, vector<16x128xf32> -> vector<16x128xf32>
    %8 = arith.addf %4, %7 : vector<16x128xf32>
    %c0_6 = arith.constant 0 : index
    %c0_7 = arith.constant 0 : index
    %9 = vector.load %arg7[%c0_6, %c0_7] : memref<16x128xf32, #tpu.memory_space<vmem>>, vector<16x128xf32>
    tpu.vector_store %arg7[%c0_6, %c0_7], %8 {strides = array<i32>} : memref<16x128xf32, #tpu.memory_space<vmem>>, vector<16x128xf32>,
    %c0_i32_8 = arith.constant 0 : i32
    %10 = arith.cmpi eq, %arg2, %c0_i32_8 : i32
    %11 = arith.extui %10 : i1 to i32
    %c0_i32_9 = arith.constant 0 : i32
    %12 = arith.cmpi ne, %11, %c0_i32_9 : i32
    scf.if %12 {
      %c0_10 = arith.constant 0 : index
      %c0_11 = arith.constant 0 : index
      %13 = vector.load %arg7[%c0_10, %c0_11] : memref<16x128xf32, #tpu.memory_space<vmem>>, vector<16x128xf32>
      %c0_12 = arith.constant 0 : index
      %c0_13 = arith.constant 0 : index
      %14 = vector.load %arg5[%c0_12, %c0_13] : memref<1x128xf32, #tpu.memory_space<vmem>>, vector<1x128xf32>
      %15 = vector.broadcast %14 : vector<1x128xf32> to vector<16x128xf32>
      %16 = arith.addf %13, %15 : vector<16x128xf32>
      %c0_14 = arith.constant 0 : index
      %c0_15 = arith.constant 0 : index
      %17 = vector.load %arg6[%c0_14, %c0_15] : memref<16x128xf32, #tpu.memory_space<vmem>>, vector<16x128xf32>
      tpu.vector_store %arg6[%c0_14, %c0_15], %16 {strides = array<i32>} : memref<16x128xf32, #tpu.memory_space<vmem>>, vector<16x128xf32>,
    } else {
    }
    return
  }
  func.func @transform_0(%arg0: i32, %arg1: i32, %arg2: i32) -> (i32, i32) {
    %c0_i32 = arith.constant 0 : i32
    return %arg0, %arg2 : i32, i32
  }
  func.func @transform_1(%arg0: i32, %arg1: i32, %arg2: i32) -> (i32, i32) {
    %c0_i32 = arith.constant 0 : i32
    return %arg2, %arg1 : i32, i32
  }
  func.func @transform_2(%arg0: i32, %arg1: i32, %arg2: i32) -> (i32, i32) {
    %c0_i32 = arith.constant 0 : i32
    %c0_i32_0 = arith.constant 0 : i32
    return %c0_i32, %arg1 : i32, i32
  }
  func.func @transform_3(%arg0: i32, %arg1: i32, %arg2: i32) -> (i32, i32) {
    %c0_i32 = arith.constant 0 : i32
    return %arg0, %arg1 : i32, i32
  }
}

module attributes {stable_mosaic.version = 11 : i64} {
  func.func @_linear_kernel(%arg0: i32, %arg1: i32, %arg2: i32, %arg3: memref<2x128xf32, #tpu.memory_space<vmem>>, %arg4: memref<128x10xbf16, #tpu.memory_space<vmem>>, %arg5: memref<1x10xf32, #tpu.memory_space<vmem>>, %arg6: memref<1x128xf32, #tpu.memory_space<vmem>>, %arg7: memref<1x128xf32, #tpu.memory_space<vmem>>, %arg8: memref<2x10xf32, #tpu.memory_space<vmem>>, %arg9: memref<2x10xf32, #tpu.memory_space<vmem>>) attributes {dimension_semantics = [#tpu.dimension_semantics<parallel>, #tpu.dimension_semantics<parallel>, #tpu.dimension_semantics<arbitrary>], iteration_bounds = array<i64: 1, 1, 1>, scalar_prefetch = 0 : i64, scratch_operands = 1 : i64, tpu.core_type = #tpu.core_type<tc>, window_params = [{transform_indices = @transform_0, window_bounds = array<i64: 2, 128>}, {transform_indices = @transform_1, window_bounds = array<i64: 128, 10>}, {transform_indices = @transform_2, window_bounds = array<i64: 1, 10>}, {pipeline_mode = #tpu.pipeline_mode<synchronous>, transform_indices = @transform_3, window_bounds = array<i64: 1, 128>}, {pipeline_mode = #tpu.pipeline_mode<synchronous>, transform_indices = @transform_4, window_bounds = array<i64: 1, 128>}, {transform_indices = @transform_5, window_bounds = array<i64: 2, 10>}]} {
    %c0_i32 = arith.constant 0 : i32
    %0 = arith.cmpi eq, %arg2, %c0_i32 : i32
    %1 = arith.extui %0 : i1 to i32
    %c0_i32_0 = arith.constant 0 : i32
    %2 = arith.cmpi ne, %1, %c0_i32_0 : i32
    scf.if %2 {
      %cst_19 = arith.constant 0.000000e+00 : f32
      %35 = vector.broadcast %cst_19 : f32 to vector<2x10xf32>
      %c0_20 = arith.constant 0 : index
      %c0_21 = arith.constant 0 : index
      %36 = vector.load %arg9[%c0_20, %c0_21] : memref<2x10xf32, #tpu.memory_space<vmem>>, vector<2x10xf32>
      tpu.vector_store %arg9[%c0_20, %c0_21], %35 {strides = array<i32>} : memref<2x10xf32, #tpu.memory_space<vmem>>, vector<2x10xf32>,
    } else {
    }
    %c0 = arith.constant 0 : index
    %c0_1 = arith.constant 0 : index
    %3 = vector.load %arg3[%c0, %c0_1] : memref<2x128xf32, #tpu.memory_space<vmem>>, vector<2x128xf32>
    %c0_2 = arith.constant 0 : index
    %c0_3 = arith.constant 0 : index
    %4 = vector.load %arg6[%c0_2, %c0_3] : memref<1x128xf32, #tpu.memory_space<vmem>>, vector<1x128xf32>
    %c0_4 = arith.constant 0 : index
    %c0_5 = arith.constant 0 : index
    %5 = vector.load %arg7[%c0_4, %c0_5] : memref<1x128xf32, #tpu.memory_space<vmem>>, vector<1x128xf32>
    %cst = arith.constant dense<0.000000e+00> : vector<2xf32>
    %6 = vector.multi_reduction <add>, %3, %cst [1] : vector<2x128xf32> to vector<2xf32>
    %7 = vector.shape_cast %6 : vector<2xf32> to vector<2x1xf32>
    %cst_6 = arith.constant 1.280000e+02 : f32
    %8 = vector.broadcast %cst_6 : f32 to vector<2x1xf32>
    %9 = arith.divf %7, %8 : vector<2x1xf32>
    %10 = vector.broadcast %9 : vector<2x1xf32> to vector<2x128xf32>
    %11 = arith.subf %3, %10 : vector<2x128xf32>
    %12 = arith.mulf %11, %11 : vector<2x128xf32>
    %cst_7 = arith.constant dense<0.000000e+00> : vector<2xf32>
    %13 = vector.multi_reduction <add>, %12, %cst_7 [1] : vector<2x128xf32> to vector<2xf32>
    %14 = vector.shape_cast %13 : vector<2xf32> to vector<2x1xf32>
    %cst_8 = arith.constant 1.280000e+02 : f32
    %15 = vector.broadcast %cst_8 : f32 to vector<2x1xf32>
    %16 = arith.divf %14, %15 : vector<2x1xf32>
    %cst_9 = arith.constant 1.000000e-10 : f32
    %17 = vector.broadcast %cst_9 : f32 to vector<2x1xf32>
    %18 = arith.addf %16, %17 : vector<2x1xf32>
    %19 = math.rsqrt %18 : vector<2x1xf32>
    %20 = vector.broadcast %19 : vector<2x1xf32> to vector<2x128xf32>
    %21 = arith.mulf %11, %20 : vector<2x128xf32>
    %22 = vector.broadcast %4 : vector<1x128xf32> to vector<2x128xf32>
    %23 = arith.mulf %21, %22 : vector<2x128xf32>
    %24 = vector.broadcast %5 : vector<1x128xf32> to vector<2x128xf32>
    %25 = arith.addf %23, %24 : vector<2x128xf32>
    %c0_10 = arith.constant 0 : index
    %c0_11 = arith.constant 0 : index
    %26 = vector.load %arg9[%c0_10, %c0_11] : memref<2x10xf32, #tpu.memory_space<vmem>>, vector<2x10xf32>
    %27 = arith.truncf %25 : vector<2x128xf32> to vector<2x128xbf16>
    %c0_12 = arith.constant 0 : index
    %c0_13 = arith.constant 0 : index
    %28 = vector.load %arg4[%c0_12, %c0_13] : memref<128x10xbf16, #tpu.memory_space<vmem>>, vector<128x10xbf16>
    %cst_14 = arith.constant dense<0.000000e+00> : vector<2x10xf32>
    %29 = tpu.matmul %27, %28, %cst_14 {dimension_numbers = #tpu.dot_dimension_numbers<[1], [0], [0], [1], [0, 0, 1, 1], [], []>} : vector<2x128xbf16>, vector<128x10xbf16>, vector<2x10xf32> -> vector<2x10xf32>
    %30 = arith.addf %26, %29 : vector<2x10xf32>
    %c0_15 = arith.constant 0 : index
    %c0_16 = arith.constant 0 : index
    %31 = vector.load %arg9[%c0_15, %c0_16] : memref<2x10xf32, #tpu.memory_space<vmem>>, vector<2x10xf32>
    tpu.vector_store %arg9[%c0_15, %c0_16], %30 {strides = array<i32>} : memref<2x10xf32, #tpu.memory_space<vmem>>, vector<2x10xf32>,
    %c0_i32_17 = arith.constant 0 : i32
    %32 = arith.cmpi eq, %arg2, %c0_i32_17 : i32
    %33 = arith.extui %32 : i1 to i32
    %c0_i32_18 = arith.constant 0 : i32
    %34 = arith.cmpi ne, %33, %c0_i32_18 : i32
    scf.if %34 {
      %c0_19 = arith.constant 0 : index
      %c0_20 = arith.constant 0 : index
      %35 = vector.load %arg9[%c0_19, %c0_20] : memref<2x10xf32, #tpu.memory_space<vmem>>, vector<2x10xf32>
      %c0_21 = arith.constant 0 : index
      %c0_22 = arith.constant 0 : index
      %36 = vector.load %arg5[%c0_21, %c0_22] : memref<1x10xf32, #tpu.memory_space<vmem>>, vector<1x10xf32>
      %37 = vector.broadcast %36 : vector<1x10xf32> to vector<2x10xf32>
      %38 = arith.addf %35, %37 : vector<2x10xf32>
      %c0_23 = arith.constant 0 : index
      %c0_24 = arith.constant 0 : index
      %39 = vector.load %arg8[%c0_23, %c0_24] : memref<2x10xf32, #tpu.memory_space<vmem>>, vector<2x10xf32>
      tpu.vector_store %arg8[%c0_23, %c0_24], %38 {strides = array<i32>} : memref<2x10xf32, #tpu.memory_space<vmem>>, vector<2x10xf32>,
    } else {
    }
    return
  }
  func.func @transform_0(%arg0: i32, %arg1: i32, %arg2: i32) -> (i32, i32) {
    %c0_i32 = arith.constant 0 : i32
    return %arg0, %arg2 : i32, i32
  }
  func.func @transform_1(%arg0: i32, %arg1: i32, %arg2: i32) -> (i32, i32) {
    %c0_i32 = arith.constant 0 : i32
    return %arg2, %arg1 : i32, i32
  }
  func.func @transform_2(%arg0: i32, %arg1: i32, %arg2: i32) -> (i32, i32) {
    %c0_i32 = arith.constant 0 : i32
    %c0_i32_0 = arith.constant 0 : i32
    return %c0_i32, %arg1 : i32, i32
  }
  func.func @transform_3(%arg0: i32, %arg1: i32, %arg2: i32) -> (i32, i32) {
    %c0_i32 = arith.constant 0 : i32
    %c0_i32_0 = arith.constant 0 : i32
    %c0_i32_1 = arith.constant 0 : i32
    return %c0_i32, %c0_i32_0 : i32, i32
  }
  func.func @transform_4(%arg0: i32, %arg1: i32, %arg2: i32) -> (i32, i32) {
    %c0_i32 = arith.constant 0 : i32
    %c0_i32_0 = arith.constant 0 : i32
    %c0_i32_1 = arith.constant 0 : i32
    return %c0_i32, %c0_i32_0 : i32, i32
  }
  func.func @transform_5(%arg0: i32, %arg1: i32, %arg2: i32) -> (i32, i32) {
    %c0_i32 = arith.constant 0 : i32
    return %arg0, %arg1 : i32, i32
  }
}

module attributes {stable_mosaic.version = 11 : i64} {
  func.func @_block_kernel(%arg0: i32, %arg1: memref<1x24x128xf32, #tpu.memory_space<vmem>>, %arg2: memref<1x128xf32, #tpu.memory_space<vmem>>, %arg3: memref<1x128xf32, #tpu.memory_space<vmem>>, %arg4: memref<128x384xbf16, #tpu.memory_space<vmem>>, %arg5: memref<1x384xf32, #tpu.memory_space<vmem>>, %arg6: memref<128x128xbf16, #tpu.memory_space<vmem>>, %arg7: memref<1x128xf32, #tpu.memory_space<vmem>>, %arg8: memref<1x128xf32, #tpu.memory_space<vmem>>, %arg9: memref<1x128xf32, #tpu.memory_space<vmem>>, %arg10: memref<128x512xbf16, #tpu.memory_space<vmem>>, %arg11: memref<1x512xf32, #tpu.memory_space<vmem>>, %arg12: memref<512x128xbf16, #tpu.memory_space<vmem>>, %arg13: memref<1x128xf32, #tpu.memory_space<vmem>>, %arg14: memref<1x24x128xf32, #tpu.memory_space<vmem>>) attributes {dimension_semantics = [#tpu.dimension_semantics<parallel>], iteration_bounds = array<i64: 2>, scalar_prefetch = 0 : i64, scratch_operands = 0 : i64, tpu.core_type = #tpu.core_type<tc>, window_params = [{transform_indices = @transform_0, window_bounds = array<i64: 1, 24, 128>}, {pipeline_mode = #tpu.pipeline_mode<synchronous>, transform_indices = @transform_1, window_bounds = array<i64: 1, 128>}, {pipeline_mode = #tpu.pipeline_mode<synchronous>, transform_indices = @transform_2, window_bounds = array<i64: 1, 128>}, {pipeline_mode = #tpu.pipeline_mode<synchronous>, transform_indices = @transform_3, window_bounds = array<i64: 128, 384>}, {pipeline_mode = #tpu.pipeline_mode<synchronous>, transform_indices = @transform_4, window_bounds = array<i64: 1, 384>}, {pipeline_mode = #tpu.pipeline_mode<synchronous>, transform_indices = @transform_5, window_bounds = array<i64: 128, 128>}, {pipeline_mode = #tpu.pipeline_mode<synchronous>, transform_indices = @transform_6, window_bounds = array<i64: 1, 128>}, {pipeline_mode = #tpu.pipeline_mode<synchronous>, transform_indices = @transform_7, window_bounds = array<i64: 1, 128>}, {pipeline_mode = #tpu.pipeline_mode<synchronous>, transform_indices = @transform_8, window_bounds = array<i64: 1, 128>}, {pipeline_mode = #tpu.pipeline_mode<synchronous>, transform_indices = @transform_9, window_bounds = array<i64: 128, 512>}, {pipeline_mode = #tpu.pipeline_mode<synchronous>, transform_indices = @transform_10, window_bounds = array<i64: 1, 512>}, {pipeline_mode = #tpu.pipeline_mode<synchronous>, transform_indices = @transform_11, window_bounds = array<i64: 512, 128>}, {pipeline_mode = #tpu.pipeline_mode<synchronous>, transform_indices = @transform_12, window_bounds = array<i64: 1, 128>}, {transform_indices = @transform_13, window_bounds = array<i64: 1, 24, 128>}]} {
    %c0 = arith.constant 0 : index
    %c0_0 = arith.constant 0 : index
    %c0_1 = arith.constant 0 : index
    %0 = vector.load %arg1[%c0, %c0_0, %c0_1] : memref<1x24x128xf32, #tpu.memory_space<vmem>>, vector<1x24x128xf32>
    %1 = vector.shape_cast %0 : vector<1x24x128xf32> to vector<24x128xf32>
    %c0_2 = arith.constant 0 : index
    %c0_3 = arith.constant 0 : index
    %2 = vector.load %arg2[%c0_2, %c0_3] : memref<1x128xf32, #tpu.memory_space<vmem>>, vector<1x128xf32>
    %c0_4 = arith.constant 0 : index
    %c0_5 = arith.constant 0 : index
    %3 = vector.load %arg3[%c0_4, %c0_5] : memref<1x128xf32, #tpu.memory_space<vmem>>, vector<1x128xf32>
    %cst = arith.constant dense<0.000000e+00> : vector<24xf32>
    %4 = vector.multi_reduction <add>, %1, %cst [1] : vector<24x128xf32> to vector<24xf32>
    %5 = vector.shape_cast %4 : vector<24xf32> to vector<24x1xf32>
    %cst_6 = arith.constant 1.280000e+02 : f32
    %6 = vector.broadcast %cst_6 : f32 to vector<24x1xf32>
    %7 = arith.divf %5, %6 : vector<24x1xf32>
    %8 = vector.broadcast %7 : vector<24x1xf32> to vector<24x128xf32>
    %9 = arith.subf %1, %8 : vector<24x128xf32>
    %10 = arith.mulf %9, %9 : vector<24x128xf32>
    %cst_7 = arith.constant dense<0.000000e+00> : vector<24xf32>
    %11 = vector.multi_reduction <add>, %10, %cst_7 [1] : vector<24x128xf32> to vector<24xf32>
    %12 = vector.shape_cast %11 : vector<24xf32> to vector<24x1xf32>
    %cst_8 = arith.constant 1.280000e+02 : f32
    %13 = vector.broadcast %cst_8 : f32 to vector<24x1xf32>
    %14 = arith.divf %12, %13 : vector<24x1xf32>
    %cst_9 = arith.constant 9.99999974E-6 : f32
    %15 = vector.broadcast %cst_9 : f32 to vector<24x1xf32>
    %16 = arith.addf %14, %15 : vector<24x1xf32>
    %17 = math.rsqrt %16 : vector<24x1xf32>
    %18 = vector.broadcast %17 : vector<24x1xf32> to vector<24x128xf32>
    %19 = arith.mulf %9, %18 : vector<24x128xf32>
    %20 = vector.broadcast %2 : vector<1x128xf32> to vector<24x128xf32>
    %21 = arith.mulf %19, %20 : vector<24x128xf32>
    %22 = vector.broadcast %3 : vector<1x128xf32> to vector<24x128xf32>
    %23 = arith.addf %21, %22 : vector<24x128xf32>
    %24 = arith.truncf %23 : vector<24x128xf32> to vector<24x128xbf16>
    %c0_10 = arith.constant 0 : index
    %c0_11 = arith.constant 0 : index
    %25 = vector.load %arg4[%c0_10, %c0_11] : memref<128x384xbf16, #tpu.memory_space<vmem>>, vector<128x384xbf16>
    %cst_12 = arith.constant dense<0.000000e+00> : vector<24x384xf32>
    %26 = tpu.matmul %24, %25, %cst_12 {dimension_numbers = #tpu.dot_dimension_numbers<[1], [0], [0], [1], [0, 0, 1, 1], [], []>} : vector<24x128xbf16>, vector<128x384xbf16>, vector<24x384xf32> -> vector<24x384xf32>
    %c0_13 = arith.constant 0 : index
    %c0_14 = arith.constant 0 : index
    %27 = vector.load %arg5[%c0_13, %c0_14] : memref<1x384xf32, #tpu.memory_space<vmem>>, vector<1x384xf32>
    %28 = vector.broadcast %27 : vector<1x384xf32> to vector<24x384xf32>
    %29 = arith.addf %26, %28 : vector<24x384xf32>
    %30 = tpu.iota {dimensions = array<i32: 1>} : vector<24x24xi32>
    %c17_i32 = arith.constant 17 : i32
    %31 = vector.broadcast %c17_i32 : i32 to vector<24x24xi32>
    %32 = arith.cmpi slt, %30, %31 : vector<24x24xi32>
    %33 = vector.extract_strided_slice %29 {offsets = [0, 0], sizes = [24, 32], strides = [1, 1]} : vector<24x384xf32> to vector<24x32xf32>
    %34 = vector.extract_strided_slice %29 {offsets = [0, 128], sizes = [24, 32], strides = [1, 1]} : vector<24x384xf32> to vector<24x32xf32>
    %35 = vector.extract_strided_slice %29 {offsets = [0, 256], sizes = [24, 32], strides = [1, 1]} : vector<24x384xf32> to vector<24x32xf32>
    %36 = arith.truncf %33 : vector<24x32xf32> to vector<24x32xbf16>
    %37 = arith.truncf %34 : vector<24x32xf32> to vector<24x32xbf16>
    %cst_15 = arith.constant dense<0.000000e+00> : vector<24x24xf32>
    %38 = tpu.matmul %36, %37, %cst_15 {dimension_numbers = #tpu.dot_dimension_numbers<[1], [1], [0], [0], [0, 0, 1, 0], [], []>} : vector<24x32xbf16>, vector<24x32xbf16>, vector<24x24xf32> -> vector<24x24xf32>
    %cst_16 = arith.constant -1.000000e+30 : f32
    %39 = vector.broadcast %cst_16 : f32 to vector<24x24xf32>
    %40 = arith.select %32, %38, %39 : vector<24x24xi1>, vector<24x24xf32>
    %cst_17 = arith.constant dense<0xFF800000> : vector<24xf32>
    %41 = vector.multi_reduction <maximumf>, %40, %cst_17 [1] : vector<24x24xf32> to vector<24xf32>
    %42 = vector.shape_cast %41 : vector<24xf32> to vector<24x1xf32>
    %43 = vector.broadcast %42 : vector<24x1xf32> to vector<24x24xf32>
    %44 = arith.subf %40, %43 : vector<24x24xf32>
    %45 = math.exp %44 : vector<24x24xf32>
    %cst_18 = arith.constant dense<0.000000e+00> : vector<24xf32>
    %46 = vector.multi_reduction <add>, %45, %cst_18 [1] : vector<24x24xf32> to vector<24xf32>
    %47 = vector.shape_cast %46 : vector<24xf32> to vector<24x1xf32>
    %48 = arith.truncf %45 : vector<24x24xf32> to vector<24x24xbf16>
    %49 = arith.truncf %35 : vector<24x32xf32> to vector<24x32xbf16>
    %cst_19 = arith.constant dense<0.000000e+00> : vector<24x32xf32>
    %50 = tpu.matmul %48, %49, %cst_19 {dimension_numbers = #tpu.dot_dimension_numbers<[1], [0], [0], [1], [0, 0, 1, 1], [], []>} : vector<24x24xbf16>, vector<24x32xbf16>, vector<24x32xf32> -> vector<24x32xf32>
    %51 = tpu.reciprocal %47 {approx = true} : vector<24x1xf32> -> vector<24x1xf32>
    %52 = vector.broadcast %51 : vector<24x1xf32> to vector<24x32xf32>
    %53 = arith.mulf %50, %52 : vector<24x32xf32>
    %54 = vector.extract_strided_slice %29 {offsets = [0, 32], sizes = [24, 32], strides = [1, 1]} : vector<24x384xf32> to vector<24x32xf32>
    %55 = vector.extract_strided_slice %29 {offsets = [0, 160], sizes = [24, 32], strides = [1, 1]} : vector<24x384xf32> to vector<24x32xf32>
    %56 = vector.extract_strided_slice %29 {offsets = [0, 288], sizes = [24, 32], strides = [1, 1]} : vector<24x384xf32> to vector<24x32xf32>
    %57 = arith.truncf %54 : vector<24x32xf32> to vector<24x32xbf16>
    %58 = arith.truncf %55 : vector<24x32xf32> to vector<24x32xbf16>
    %cst_20 = arith.constant dense<0.000000e+00> : vector<24x24xf32>
    %59 = tpu.matmul %57, %58, %cst_20 {dimension_numbers = #tpu.dot_dimension_numbers<[1], [1], [0], [0], [0, 0, 1, 0], [], []>} : vector<24x32xbf16>, vector<24x32xbf16>, vector<24x24xf32> -> vector<24x24xf32>
    %cst_21 = arith.constant -1.000000e+30 : f32
    %60 = vector.broadcast %cst_21 : f32 to vector<24x24xf32>
    %61 = arith.select %32, %59, %60 : vector<24x24xi1>, vector<24x24xf32>
    %cst_22 = arith.constant dense<0xFF800000> : vector<24xf32>
    %62 = vector.multi_reduction <maximumf>, %61, %cst_22 [1] : vector<24x24xf32> to vector<24xf32>
    %63 = vector.shape_cast %62 : vector<24xf32> to vector<24x1xf32>
    %64 = vector.broadcast %63 : vector<24x1xf32> to vector<24x24xf32>
    %65 = arith.subf %61, %64 : vector<24x24xf32>
    %66 = math.exp %65 : vector<24x24xf32>
    %cst_23 = arith.constant dense<0.000000e+00> : vector<24xf32>
    %67 = vector.multi_reduction <add>, %66, %cst_23 [1] : vector<24x24xf32> to vector<24xf32>
    %68 = vector.shape_cast %67 : vector<24xf32> to vector<24x1xf32>
    %69 = arith.truncf %66 : vector<24x24xf32> to vector<24x24xbf16>
    %70 = arith.truncf %56 : vector<24x32xf32> to vector<24x32xbf16>
    %cst_24 = arith.constant dense<0.000000e+00> : vector<24x32xf32>
    %71 = tpu.matmul %69, %70, %cst_24 {dimension_numbers = #tpu.dot_dimension_numbers<[1], [0], [0], [1], [0, 0, 1, 1], [], []>} : vector<24x24xbf16>, vector<24x32xbf16>, vector<24x32xf32> -> vector<24x32xf32>
    %72 = tpu.reciprocal %68 {approx = true} : vector<24x1xf32> -> vector<24x1xf32>
    %73 = vector.broadcast %72 : vector<24x1xf32> to vector<24x32xf32>
    %74 = arith.mulf %71, %73 : vector<24x32xf32>
    %75 = vector.extract_strided_slice %29 {offsets = [0, 64], sizes = [24, 32], strides = [1, 1]} : vector<24x384xf32> to vector<24x32xf32>
    %76 = vector.extract_strided_slice %29 {offsets = [0, 192], sizes = [24, 32], strides = [1, 1]} : vector<24x384xf32> to vector<24x32xf32>
    %77 = vector.extract_strided_slice %29 {offsets = [0, 320], sizes = [24, 32], strides = [1, 1]} : vector<24x384xf32> to vector<24x32xf32>
    %78 = arith.truncf %75 : vector<24x32xf32> to vector<24x32xbf16>
    %79 = arith.truncf %76 : vector<24x32xf32> to vector<24x32xbf16>
    %cst_25 = arith.constant dense<0.000000e+00> : vector<24x24xf32>
    %80 = tpu.matmul %78, %79, %cst_25 {dimension_numbers = #tpu.dot_dimension_numbers<[1], [1], [0], [0], [0, 0, 1, 0], [], []>} : vector<24x32xbf16>, vector<24x32xbf16>, vector<24x24xf32> -> vector<24x24xf32>
    %cst_26 = arith.constant -1.000000e+30 : f32
    %81 = vector.broadcast %cst_26 : f32 to vector<24x24xf32>
    %82 = arith.select %32, %80, %81 : vector<24x24xi1>, vector<24x24xf32>
    %cst_27 = arith.constant dense<0xFF800000> : vector<24xf32>
    %83 = vector.multi_reduction <maximumf>, %82, %cst_27 [1] : vector<24x24xf32> to vector<24xf32>
    %84 = vector.shape_cast %83 : vector<24xf32> to vector<24x1xf32>
    %85 = vector.broadcast %84 : vector<24x1xf32> to vector<24x24xf32>
    %86 = arith.subf %82, %85 : vector<24x24xf32>
    %87 = math.exp %86 : vector<24x24xf32>
    %cst_28 = arith.constant dense<0.000000e+00> : vector<24xf32>
    %88 = vector.multi_reduction <add>, %87, %cst_28 [1] : vector<24x24xf32> to vector<24xf32>
    %89 = vector.shape_cast %88 : vector<24xf32> to vector<24x1xf32>
    %90 = arith.truncf %87 : vector<24x24xf32> to vector<24x24xbf16>
    %91 = arith.truncf %77 : vector<24x32xf32> to vector<24x32xbf16>
    %cst_29 = arith.constant dense<0.000000e+00> : vector<24x32xf32>
    %92 = tpu.matmul %90, %91, %cst_29 {dimension_numbers = #tpu.dot_dimension_numbers<[1], [0], [0], [1], [0, 0, 1, 1], [], []>} : vector<24x24xbf16>, vector<24x32xbf16>, vector<24x32xf32> -> vector<24x32xf32>
    %93 = tpu.reciprocal %89 {approx = true} : vector<24x1xf32> -> vector<24x1xf32>
    %94 = vector.broadcast %93 : vector<24x1xf32> to vector<24x32xf32>
    %95 = arith.mulf %92, %94 : vector<24x32xf32>
    %96 = vector.extract_strided_slice %29 {offsets = [0, 96], sizes = [24, 32], strides = [1, 1]} : vector<24x384xf32> to vector<24x32xf32>
    %97 = vector.extract_strided_slice %29 {offsets = [0, 224], sizes = [24, 32], strides = [1, 1]} : vector<24x384xf32> to vector<24x32xf32>
    %98 = vector.extract_strided_slice %29 {offsets = [0, 352], sizes = [24, 32], strides = [1, 1]} : vector<24x384xf32> to vector<24x32xf32>
    %99 = arith.truncf %96 : vector<24x32xf32> to vector<24x32xbf16>
    %100 = arith.truncf %97 : vector<24x32xf32> to vector<24x32xbf16>
    %cst_30 = arith.constant dense<0.000000e+00> : vector<24x24xf32>
    %101 = tpu.matmul %99, %100, %cst_30 {dimension_numbers = #tpu.dot_dimension_numbers<[1], [1], [0], [0], [0, 0, 1, 0], [], []>} : vector<24x32xbf16>, vector<24x32xbf16>, vector<24x24xf32> -> vector<24x24xf32>
    %cst_31 = arith.constant -1.000000e+30 : f32
    %102 = vector.broadcast %cst_31 : f32 to vector<24x24xf32>
    %103 = arith.select %32, %101, %102 : vector<24x24xi1>, vector<24x24xf32>
    %cst_32 = arith.constant dense<0xFF800000> : vector<24xf32>
    %104 = vector.multi_reduction <maximumf>, %103, %cst_32 [1] : vector<24x24xf32> to vector<24xf32>
    %105 = vector.shape_cast %104 : vector<24xf32> to vector<24x1xf32>
    %106 = vector.broadcast %105 : vector<24x1xf32> to vector<24x24xf32>
    %107 = arith.subf %103, %106 : vector<24x24xf32>
    %108 = math.exp %107 : vector<24x24xf32>
    %cst_33 = arith.constant dense<0.000000e+00> : vector<24xf32>
    %109 = vector.multi_reduction <add>, %108, %cst_33 [1] : vector<24x24xf32> to vector<24xf32>
    %110 = vector.shape_cast %109 : vector<24xf32> to vector<24x1xf32>
    %111 = arith.truncf %108 : vector<24x24xf32> to vector<24x24xbf16>
    %112 = arith.truncf %98 : vector<24x32xf32> to vector<24x32xbf16>
    %cst_34 = arith.constant dense<0.000000e+00> : vector<24x32xf32>
    %113 = tpu.matmul %111, %112, %cst_34 {dimension_numbers = #tpu.dot_dimension_numbers<[1], [0], [0], [1], [0, 0, 1, 1], [], []>} : vector<24x24xbf16>, vector<24x32xbf16>, vector<24x32xf32> -> vector<24x32xf32>
    %114 = tpu.reciprocal %110 {approx = true} : vector<24x1xf32> -> vector<24x1xf32>
    %115 = vector.broadcast %114 : vector<24x1xf32> to vector<24x32xf32>
    %116 = arith.mulf %113, %115 : vector<24x32xf32>
    %117 = tpu.concatenate %53, %74, %95, %116 in 1 : vector<24x32xf32>, vector<24x32xf32>, vector<24x32xf32>, vector<24x32xf32> -> vector<24x128xf32>
    %118 = arith.truncf %117 : vector<24x128xf32> to vector<24x128xbf16>
    %c0_35 = arith.constant 0 : index
    %c0_36 = arith.constant 0 : index
    %119 = vector.load %arg6[%c0_35, %c0_36] : memref<128x128xbf16, #tpu.memory_space<vmem>>, vector<128x128xbf16>
    %cst_37 = arith.constant dense<0.000000e+00> : vector<24x128xf32>
    %120 = tpu.matmul %118, %119, %cst_37 {dimension_numbers = #tpu.dot_dimension_numbers<[1], [0], [0], [1], [0, 0, 1, 1], [], []>} : vector<24x128xbf16>, vector<128x128xbf16>, vector<24x128xf32> -> vector<24x128xf32>
    %121 = arith.addf %1, %120 : vector<24x128xf32>
    %c0_38 = arith.constant 0 : index
    %c0_39 = arith.constant 0 : index
    %122 = vector.load %arg7[%c0_38, %c0_39] : memref<1x128xf32, #tpu.memory_space<vmem>>, vector<1x128xf32>
    %123 = vector.broadcast %122 : vector<1x128xf32> to vector<24x128xf32>
    %124 = arith.addf %121, %123 : vector<24x128xf32>
    %c0_40 = arith.constant 0 : index
    %c0_41 = arith.constant 0 : index
    %125 = vector.load %arg8[%c0_40, %c0_41] : memref<1x128xf32, #tpu.memory_space<vmem>>, vector<1x128xf32>
    %c0_42 = arith.constant 0 : index
    %c0_43 = arith.constant 0 : index
    %126 = vector.load %arg9[%c0_42, %c0_43] : memref<1x128xf32, #tpu.memory_space<vmem>>, vector<1x128xf32>
    %cst_44 = arith.constant dense<0.000000e+00> : vector<24xf32>
    %127 = vector.multi_reduction <add>, %124, %cst_44 [1] : vector<24x128xf32> to vector<24xf32>
    %128 = vector.shape_cast %127 : vector<24xf32> to vector<24x1xf32>
    %cst_45 = arith.constant 1.280000e+02 : f32
    %129 = vector.broadcast %cst_45 : f32 to vector<24x1xf32>
    %130 = arith.divf %128, %129 : vector<24x1xf32>
    %131 = vector.broadcast %130 : vector<24x1xf32> to vector<24x128xf32>
    %132 = arith.subf %124, %131 : vector<24x128xf32>
    %133 = arith.mulf %132, %132 : vector<24x128xf32>
    %cst_46 = arith.constant dense<0.000000e+00> : vector<24xf32>
    %134 = vector.multi_reduction <add>, %133, %cst_46 [1] : vector<24x128xf32> to vector<24xf32>
    %135 = vector.shape_cast %134 : vector<24xf32> to vector<24x1xf32>
    %cst_47 = arith.constant 1.280000e+02 : f32
    %136 = vector.broadcast %cst_47 : f32 to vector<24x1xf32>
    %137 = arith.divf %135, %136 : vector<24x1xf32>
    %cst_48 = arith.constant 9.99999974E-6 : f32
    %138 = vector.broadcast %cst_48 : f32 to vector<24x1xf32>
    %139 = arith.addf %137, %138 : vector<24x1xf32>
    %140 = math.rsqrt %139 : vector<24x1xf32>
    %141 = vector.broadcast %140 : vector<24x1xf32> to vector<24x128xf32>
    %142 = arith.mulf %132, %141 : vector<24x128xf32>
    %143 = vector.broadcast %125 : vector<1x128xf32> to vector<24x128xf32>
    %144 = arith.mulf %142, %143 : vector<24x128xf32>
    %145 = vector.broadcast %126 : vector<1x128xf32> to vector<24x128xf32>
    %146 = arith.addf %144, %145 : vector<24x128xf32>
    %147 = arith.truncf %146 : vector<24x128xf32> to vector<24x128xbf16>
    %c0_49 = arith.constant 0 : index
    %c0_50 = arith.constant 0 : index
    %148 = vector.load %arg10[%c0_49, %c0_50] : memref<128x512xbf16, #tpu.memory_space<vmem>>, vector<128x512xbf16>
    %cst_51 = arith.constant dense<0.000000e+00> : vector<24x512xf32>
    %149 = tpu.matmul %147, %148, %cst_51 {dimension_numbers = #tpu.dot_dimension_numbers<[1], [0], [0], [1], [0, 0, 1, 1], [], []>} : vector<24x128xbf16>, vector<128x512xbf16>, vector<24x512xf32> -> vector<24x512xf32>
    %c0_52 = arith.constant 0 : index
    %c0_53 = arith.constant 0 : index
    %150 = vector.load %arg11[%c0_52, %c0_53] : memref<1x512xf32, #tpu.memory_space<vmem>>, vector<1x512xf32>
    %151 = vector.broadcast %150 : vector<1x512xf32> to vector<24x512xf32>
    %152 = arith.addf %149, %151 : vector<24x512xf32>
    %cst_54 = arith.constant 5.000000e-01 : f32
    %153 = vector.broadcast %cst_54 : f32 to vector<24x512xf32>
    %154 = arith.mulf %153, %152 : vector<24x512xf32>
    %cst_55 = arith.constant 0.707106769 : f32
    %155 = vector.broadcast %cst_55 : f32 to vector<24x512xf32>
    %156 = arith.mulf %152, %155 : vector<24x512xf32>
    %cst_56 = arith.constant -4.000000e+00 : f32
    %cst_57 = arith.constant 4.000000e+00 : f32
    %157 = vector.broadcast %cst_56 : f32 to vector<24x512xf32>
    %158 = arith.maximumf %157, %156 : vector<24x512xf32>
    %159 = vector.broadcast %cst_57 : f32 to vector<24x512xf32>
    %160 = arith.minimumf %159, %158 : vector<24x512xf32>
    %161 = arith.mulf %160, %160 : vector<24x512xf32>
    %cst_58 = arith.constant 2.29050653E-4 : f32
    %162 = vector.broadcast %cst_58 : f32 to vector<24x512xf32>
    %163 = arith.mulf %162, %161 : vector<24x512xf32>
    %cst_59 = arith.constant 0.00340829091 : f32
    %164 = vector.broadcast %cst_59 : f32 to vector<24x512xf32>
    %165 = arith.addf %163, %164 : vector<24x512xf32>
    %166 = arith.mulf %165, %161 : vector<24x512xf32>
    %cst_60 = arith.constant 0.0509556942 : f32
    %167 = vector.broadcast %cst_60 : f32 to vector<24x512xf32>
    %168 = arith.addf %166, %167 : vector<24x512xf32>
    %169 = arith.mulf %168, %161 : vector<24x512xf32>
    %cst_61 = arith.constant 0.185208321 : f32
    %170 = vector.broadcast %cst_61 : f32 to vector<24x512xf32>
    %171 = arith.addf %169, %170 : vector<24x512xf32>
    %172 = arith.mulf %171, %161 : vector<24x512xf32>
    %cst_62 = arith.constant 1.12837911 : f32
    %173 = vector.broadcast %cst_62 : f32 to vector<24x512xf32>
    %174 = arith.addf %172, %173 : vector<24x512xf32>
    %cst_63 = arith.constant -1.17916031E-7 : f32
    %175 = vector.broadcast %cst_63 : f32 to vector<24x512xf32>
    %176 = arith.mulf %175, %161 : vector<24x512xf32>
    %cst_64 = arith.constant 2.35479656E-5 : f32
    %177 = vector.broadcast %cst_64 : f32 to vector<24x512xf32>
    %178 = arith.addf %176, %177 : vector<24x512xf32>
    %179 = arith.mulf %178, %161 : vector<24x512xf32>
    %cst_65 = arith.constant 0.00101796258 : f32
    %180 = vector.broadcast %cst_65 : f32 to vector<24x512xf32>
    %181 = arith.addf %179, %180 : vector<24x512xf32>
    %182 = arith.mulf %181, %161 : vector<24x512xf32>
    %cst_66 = arith.constant 0.0140704699 : f32
    %183 = vector.broadcast %cst_66 : f32 to vector<24x512xf32>
    %184 = arith.addf %182, %183 : vector<24x512xf32>
    %185 = arith.mulf %184, %161 : vector<24x512xf32>
    %cst_67 = arith.constant 0.110985048 : f32
    %186 = vector.broadcast %cst_67 : f32 to vector<24x512xf32>
    %187 = arith.addf %185, %186 : vector<24x512xf32>
    %188 = arith.mulf %187, %161 : vector<24x512xf32>
    %cst_68 = arith.constant 0.497469246 : f32
    %189 = vector.broadcast %cst_68 : f32 to vector<24x512xf32>
    %190 = arith.addf %188, %189 : vector<24x512xf32>
    %191 = arith.mulf %190, %161 : vector<24x512xf32>
    %cst_69 = arith.constant 1.000000e+00 : f32
    %192 = vector.broadcast %cst_69 : f32 to vector<24x512xf32>
    %193 = arith.addf %191, %192 : vector<24x512xf32>
    %194 = arith.mulf %160, %174 : vector<24x512xf32>
    %195 = tpu.reciprocal %193 : vector<24x512xf32> -> vector<24x512xf32>
    %196 = arith.mulf %194, %195 : vector<24x512xf32>
    %cst_70 = arith.constant 1.000000e+00 : f32
    %197 = vector.broadcast %cst_70 : f32 to vector<24x512xf32>
    %198 = arith.addf %197, %196 : vector<24x512xf32>
    %199 = arith.mulf %154, %198 : vector<24x512xf32>
    %200 = arith.truncf %199 : vector<24x512xf32> to vector<24x512xbf16>
    %c0_71 = arith.constant 0 : index
    %c0_72 = arith.constant 0 : index
    %201 = vector.load %arg12[%c0_71, %c0_72] : memref<512x128xbf16, #tpu.memory_space<vmem>>, vector<512x128xbf16>
    %cst_73 = arith.constant dense<0.000000e+00> : vector<24x128xf32>
    %202 = tpu.matmul %200, %201, %cst_73 {dimension_numbers = #tpu.dot_dimension_numbers<[1], [0], [0], [1], [0, 0, 1, 1], [], []>} : vector<24x512xbf16>, vector<512x128xbf16>, vector<24x128xf32> -> vector<24x128xf32>
    %203 = arith.addf %124, %202 : vector<24x128xf32>
    %c0_74 = arith.constant 0 : index
    %c0_75 = arith.constant 0 : index
    %204 = vector.load %arg13[%c0_74, %c0_75] : memref<1x128xf32, #tpu.memory_space<vmem>>, vector<1x128xf32>
    %205 = vector.broadcast %204 : vector<1x128xf32> to vector<24x128xf32>
    %206 = arith.addf %203, %205 : vector<24x128xf32>
    %c0_76 = arith.constant 0 : index
    %c0_77 = arith.constant 0 : index
    %c0_78 = arith.constant 0 : index
    %207 = vector.load %arg14[%c0_76, %c0_77, %c0_78] : memref<1x24x128xf32, #tpu.memory_space<vmem>>, vector<1x24x128xf32>
    %208 = vector.shape_cast %207 : vector<1x24x128xf32> to vector<24x128xf32>
    %209 = vector.shape_cast %206 : vector<24x128xf32> to vector<1x24x128xf32>
    tpu.vector_store %arg14[%c0_76, %c0_77, %c0_78], %209 {strides = array<i32>} : memref<1x24x128xf32, #tpu.memory_space<vmem>>, vector<1x24x128xf32>,
    return
  }
  func.func @transform_0(%arg0: i32) -> (i32, i32, i32) {
    %c0_i32 = arith.constant 0 : i32
    %c0_i32_0 = arith.constant 0 : i32
    %c0_i32_1 = arith.constant 0 : i32
    return %arg0, %c0_i32, %c0_i32_0 : i32, i32, i32
  }
  func.func @transform_1(%arg0: i32) -> (i32, i32) {
    %c0_i32 = arith.constant 0 : i32
    %c0_i32_0 = arith.constant 0 : i32
    %c0_i32_1 = arith.constant 0 : i32
    return %c0_i32, %c0_i32_0 : i32, i32
  }
  func.func @transform_2(%arg0: i32) -> (i32, i32) {
    %c0_i32 = arith.constant 0 : i32
    %c0_i32_0 = arith.constant 0 : i32
    %c0_i32_1 = arith.constant 0 : i32
    return %c0_i32, %c0_i32_0 : i32, i32
  }
  func.func @transform_3(%arg0: i32) -> (i32, i32) {
    %c0_i32 = arith.constant 0 : i32
    %c0_i32_0 = arith.constant 0 : i32
    %c0_i32_1 = arith.constant 0 : i32
    return %c0_i32, %c0_i32_0 : i32, i32
  }
  func.func @transform_4(%arg0: i32) -> (i32, i32) {
    %c0_i32 = arith.constant 0 : i32
    %c0_i32_0 = arith.constant 0 : i32
    %c0_i32_1 = arith.constant 0 : i32
    return %c0_i32, %c0_i32_0 : i32, i32
  }
  func.func @transform_5(%arg0: i32) -> (i32, i32) {
    %c0_i32 = arith.constant 0 : i32
    %c0_i32_0 = arith.constant 0 : i32
    %c0_i32_1 = arith.constant 0 : i32
    return %c0_i32, %c0_i32_0 : i32, i32
  }
  func.func @transform_6(%arg0: i32) -> (i32, i32) {
    %c0_i32 = arith.constant 0 : i32
    %c0_i32_0 = arith.constant 0 : i32
    %c0_i32_1 = arith.constant 0 : i32
    return %c0_i32, %c0_i32_0 : i32, i32
  }
  func.func @transform_7(%arg0: i32) -> (i32, i32) {
    %c0_i32 = arith.constant 0 : i32
    %c0_i32_0 = arith.constant 0 : i32
    %c0_i32_1 = arith.constant 0 : i32
    return %c0_i32, %c0_i32_0 : i32, i32
  }
  func.func @transform_8(%arg0: i32) -> (i32, i32) {
    %c0_i32 = arith.constant 0 : i32
    %c0_i32_0 = arith.constant 0 : i32
    %c0_i32_1 = arith.constant 0 : i32
    return %c0_i32, %c0_i32_0 : i32, i32
  }
  func.func @transform_9(%arg0: i32) -> (i32, i32) {
    %c0_i32 = arith.constant 0 : i32
    %c0_i32_0 = arith.constant 0 : i32
    %c0_i32_1 = arith.constant 0 : i32
    return %c0_i32, %c0_i32_0 : i32, i32
  }
  func.func @transform_10(%arg0: i32) -> (i32, i32) {
    %c0_i32 = arith.constant 0 : i32
    %c0_i32_0 = arith.constant 0 : i32
    %c0_i32_1 = arith.constant 0 : i32
    return %c0_i32, %c0_i32_0 : i32, i32
  }
  func.func @transform_11(%arg0: i32) -> (i32, i32) {
    %c0_i32 = arith.constant 0 : i32
    %c0_i32_0 = arith.constant 0 : i32
    %c0_i32_1 = arith.constant 0 : i32
    return %c0_i32, %c0_i32_0 : i32, i32
  }
  func.func @transform_12(%arg0: i32) -> (i32, i32) {
    %c0_i32 = arith.constant 0 : i32
    %c0_i32_0 = arith.constant 0 : i32
    %c0_i32_1 = arith.constant 0 : i32
    return %c0_i32, %c0_i32_0 : i32, i32
  }
  func.func @transform_13(%arg0: i32) -> (i32, i32, i32) {
    %c0_i32 = arith.constant 0 : i32
    %c0_i32_0 = arith.constant 0 : i32
    %c0_i32_1 = arith.constant 0 : i32
    return %arg0, %c0_i32, %c0_i32_0 : i32, i32, i32
  }
}

</mosaic_0001>

<llo_original>
// kernel: vit_forward.4
$region0: #{vit_forward.4}
  #allocation0 [shape = 'u32[]', space=smem, size = 0x4, offset = 0x4, fixed_abs, tag = 'smem constant byte address 0x4 - core index']
  #allocation1 [shape = 'u32[72,128]{1,0:T(1,128)}', space=vmem, size = 0x9000, scoped, tag = 'internal scratch']
  #allocation2 [shape = 'f32[16,128]{1,0:T(8,128)}', space=vmem, size = 0x2000, scoped, tag = 'scratch operand']
  %s0 = inlined_call_operand.vmem [shape: f32[32,48], index: 0, kind: input, shape index: {}]
  %s1 = inlined_call_operand.vmem [shape: bf16[48,128], index: 1, kind: input, shape index: {}]
  %s2 = inlined_call_operand.vmem [shape: f32[1,128], index: 2, kind: input, shape index: {}]
  %s3 = inlined_call_operand.vmem [shape: f32[32,128], index: 3, kind: output, shape index: {}]
  %s4 = sld [smem:[#allocation0]]
  $region53: #{vit_forward.4} parent=0
    _
  %s6 = ssub.s32 1, %s4
  %s7 = scalar_select 0, %s6, %s4
  loop: start=0, step=1, limit=4
  $region2: #{vit_forward.4} parent=0 // loop_pre_header
    _
  $region3: #{vit_forward.4} parent=0 // loop_header
    %s9 = sphi 0, %s13
    %p10 = scmp.ge.s32.totalorder %s9, 4
    %s16 = sphi 0, %s35
    %s17 = sphi 0, %s31
    %s18 = sphi 0, %s27
    %s19 = sphi 0, %s16
    %s20 = sphi 0, %s17
    %s21 = sphi 0, %s18
    %s22 = sphi 0, %s19
    %s23 = sphi 0, %s20
    %s24 = sphi 0, %s21
    %s40 = sphi 0, %s42
    %s43 = sphi 0, %s40
    %s44 = sphi 0, %s43
    %s60 = sphi 0, %s44
    %s68 = sphi 0, %s70
    %s71 = sphi 0, %s68
    %s72 = sphi 0, %s71
    %s88 = sphi 0, %s72
    %s94 = sphi 0, %s96
    %s97 = sphi 0, %s94
    %s98 = sphi 0, %s97
    %s114 = sphi 0, %s98
    %s122 = sphi 0, %s124
    %s125 = sphi 0, %s122
    %s126 = sphi 0, %s125
    %s142 = sphi 0, %s126
  $region4: #{vit_forward.4} parent=0 // loop_header_branch
    %12 = sbr.rel (%p10) target = $region8
  $region5: #{vit_forward.4} parent=0 // loop_body
    %s14 = ssub.s32 %s9, 1
    %s15 = ssub.s32 %s9, 2
    %s25 = sadd.s32 1, %s18
    %p26 = scmp.ge.s32.totalorder %s25, 1
    %s27 = scalar_select %p26, 0, %s25
    %s28 = sadd.s32 1, %s17
    %s29 = scalar_select %p26, %s28, %s17
    %p30 = scmp.ge.s32.totalorder %s29, 1
    %s31 = scalar_select %p30, 0, %s29
    %s32 = sadd.s32 1, %s16
    %s33 = scalar_select %p30, %s32, %s16
    %p34 = scmp.ge.s32.totalorder %s33, 2
    %s35 = scalar_select %p34, 0, %s33
    %s36 = ssub.s32 %s16, %s35
    %s37 = ssub.s32 %s18, %s27
    %s38 = sor.u32 %s36, %s37
    %p39 = scmp.eq.s32.totalorder %s38, 0
    %s41 = sadd.s32 %s40, 1
    %s42 = scalar_select %p39, %s40, %s41
    %p45 = pneg %p39
    %p46 = scmp.eq.s32.totalorder %s9, 1
    %p47 = por %p45, %p46
    %p48 = scmp.ne.s32.totalorder %s40, %s43
    %p49 = scmp.eq.s32.totalorder %s9, 0
    %p50 = por %p48, %p49
    %p51 = scmp.ne.s32.totalorder %s40, %s43
    %p52 = scmp.eq.s32.totalorder %s14, 1
    %p53 = por %p51, %p52
    %p54 = scmp.ne.s32.totalorder %s43, %s44
    %p55 = scmp.eq.s32.totalorder %s14, 0
    %p56 = por %p54, %p55
    %p57 = scmp.ne.s32.totalorder %s43, %s44
    %p58 = scmp.eq.s32.totalorder %s15, 1
    %p59 = por %p57, %p58
    %p61 = scmp.ne.s32.totalorder %s44, %s60
    %p62 = scmp.eq.s32.totalorder %s15, 0
    %p63 = por %p61, %p62
    %s64 = ssub.s32 %s18, %s27
    %s65 = ssub.s32 %s17, %s31
    %s66 = sor.u32 %s64, %s65
    %p67 = scmp.eq.s32.totalorder %s66, 0
    %s69 = sadd.s32 %s68, 1
    %s70 = scalar_select %p67, %s68, %s69
    %p73 = pneg %p67
    %p74 = scmp.eq.s32.totalorder %s9, 1
    %p75 = por %p73, %p74
    %p76 = scmp.ne.s32.totalorder %s68, %s71
    %p77 = scmp.eq.s32.totalorder %s9, 0
    %p78 = por %p76, %p77
    %p79 = scmp.ne.s32.totalorder %s68, %s71
    %p80 = scmp.eq.s32.totalorder %s14, 1
    %p81 = por %p79, %p80
    %p82 = scmp.ne.s32.totalorder %s71, %s72
    %p83 = scmp.eq.s32.totalorder %s14, 0
    %p84 = por %p82, %p83
    %p85 = scmp.ne.s32.totalorder %s71, %s72
    %p86 = scmp.eq.s32.totalorder %s15, 1
    %p87 = por %p85, %p86
    %p89 = scmp.ne.s32.totalorder %s72, %s88
    %p90 = scmp.eq.s32.totalorder %s15, 0
    %p91 = por %p89, %p90
    %s92 = ssub.s32 %s17, %s31
    %p93 = scmp.eq.s32.totalorder %s92, 0
    %s95 = sadd.s32 %s94, 1
    %s96 = scalar_select %p93, %s94, %s95
    %p99 = pneg %p93
    %p100 = scmp.eq.s32.totalorder %s9, 1
    %p101 = por %p99, %p100
    %p102 = scmp.ne.s32.totalorder %s94, %s97
    %p103 = scmp.eq.s32.totalorder %s9, 0
    %p104 = por %p102, %p103
    %p105 = scmp.ne.s32.totalorder %s94, %s97
    %p106 = scmp.eq.s32.totalorder %s14, 1
    %p107 = por %p105, %p106
    %p108 = scmp.ne.s32.totalorder %s97, %s98
    %p109 = scmp.eq.s32.totalorder %s14, 0
    %p110 = por %p108, %p109
    %p111 = scmp.ne.s32.totalorder %s97, %s98
    %p112 = scmp.eq.s32.totalorder %s15, 1
    %p113 = por %p111, %p112
    %p115 = scmp.ne.s32.totalorder %s98, %s114
    %p116 = scmp.eq.s32.totalorder %s15, 0
    %p117 = por %p115, %p116
    %s118 = ssub.s32 %s16, %s35
    %s119 = ssub.s32 %s17, %s31
    %s120 = sor.u32 %s118, %s119
    %p121 = scmp.eq.s32.totalorder %s120, 0
    %s123 = sadd.s32 %s122, 1
    %s124 = scalar_select %p121, %s122, %s123
    %p127 = pneg %p121
    %p128 = scmp.eq.s32.totalorder %s9, 1
    %p129 = por %p127, %p128
    %p130 = scmp.ne.s32.totalorder %s122, %s125
    %p131 = scmp.eq.s32.totalorder %s9, 0
    %p132 = por %p130, %p131
    %p133 = scmp.ne.s32.totalorder %s122, %s125
    %p134 = scmp.eq.s32.totalorder %s14, 1
    %p135 = por %p133, %p134
    %p136 = scmp.ne.s32.totalorder %s125, %s126
    %p137 = scmp.eq.s32.totalorder %s14, 0
    %p138 = por %p136, %p137
    %p139 = scmp.ne.s32.totalorder %s125, %s126
    %p140 = scmp.eq.s32.totalorder %s15, 1
    %p141 = por %p139, %p140
    %p143 = scmp.ne.s32.totalorder %s126, %s142
    %p144 = scmp.eq.s32.totalorder %s15, 0
    %p145 = por %p143, %p144
    %p146 = scmp.le.s32.totalorder 1, %s9
    %p147 = scmp.lt.s32.totalorder %s9, 3
    %p148 = pnand %p146, %p147
    %p149 = pneg %p148
    // Predicated region
    $region9: #{vit_forward.4} parent=5 // pred_check
      _
    $region10: #{vit_forward.4} parent=5 // pred_check_branch
      %151 = sbr.rel (%p148) target = $region12
    $region11: #{vit_forward.4} parent=5 // pred_region
      %s152 = ssub.s32 %s9, 1
      // Predicated region
      $region13: #{vit_forward.4} parent=11 // pred_check
        %p153 = pneg %p84
      $region14: #{vit_forward.4} parent=11 // pred_check_branch
        %155 = sbr.rel (%p153) target = $region16
      $region15: #{vit_forward.4} parent=11 // pred_region
        %s156 = smul.u32 6, %s21
        %p157 = scmp.lt.s32.totalorder %s156, 5
        %s158 = scalar_select %p157, %s156, 5
        %p159 = scmp.lt.s32.totalorder %s20, 0
        %s160 = scalar_select %p159, %s20, 0
        %s161 = sadd.s32 %s160, %s158
        %s162 = smul.addr %s161, 4
        %s163 = scalar_lea.vmem %s1, %s162
        %s164 = smul.u32 6, %s21
      $region16: #{vit_forward.4} parent=11 // pred_fallthru
        _
      // Predicated region
      $region17: #{vit_forward.4} parent=11 // pred_check
        %p165 = pneg %p110
      $region18: #{vit_forward.4} parent=11 // pred_check_branch
        %167 = sbr.rel (%p165) target = $region20
      $region19: #{vit_forward.4} parent=11 // pred_region
        %p168 = scmp.lt.s32.totalorder %s20, 0
        %s169 = scalar_select %p168, %s20, 0
        %s170 = scalar_lea.vmem %s2, %s169
      $region20: #{vit_forward.4} parent=11 // pred_fallthru
        _
    $region12: #{vit_forward.4} parent=5 // pred_fallthru
      _
    %p171 = scmp.lt.s32.totalorder %s9, 2
    // Predicated region
    $region21: #{vit_forward.4} parent=5 // pred_check
      %p172 = pneg %p171
    $region22: #{vit_forward.4} parent=5 // pred_check_branch
      %174 = sbr.rel (%p172) target = $region24
    $region23: #{vit_forward.4} parent=5 // pred_region
      // Predicated region
      $region25: #{vit_forward.4} parent=23 // pred_check
        %p175 = pneg %p50
      $region26: #{vit_forward.4} parent=23 // pred_check_branch
        %177 = sbr.rel (%p175) target = $region28
      $region27: #{vit_forward.4} parent=23 // pred_region
        %s178 = smul.u32 2, %s16
        %p179 = scmp.lt.s32.totalorder %s178, 3
        %s180 = scalar_select %p179, %s178, 3
        %p181 = scmp.lt.s32.totalorder %s18, 0
        %s182 = scalar_select %p181, %s18, 0
        %s183 = sadd.s32 %s182, %s180
        %s184 = smul.addr %s183, 8
        %s185 = scalar_lea.vmem %s0, %s184
        %s186 = smul.u32 2, %s16
      $region28: #{vit_forward.4} parent=23 // pred_fallthru
        _
    $region24: #{vit_forward.4} parent=5 // pred_fallthru
      _
    %p187 = scmp.le.s32.totalorder 1, %s9
    %p188 = scmp.lt.s32.totalorder %s9, 3
    %p189 = pnand %p187, %p188
    %p190 = pneg %p189
    // Predicated region
    $region29: #{vit_forward.4} parent=5 // pred_check
      _
    $region30: #{vit_forward.4} parent=5 // pred_check_branch
      %192 = sbr.rel (%p189) target = $region32
    $region31: #{vit_forward.4} parent=5 // pred_region
      %s193 = ssub.s32 %s9, 1
      %s194 = smul.u32 2, %s19
      %p195 = scmp.lt.s32.totalorder %s194, 3
      %s196 = scalar_select %p195, %s194, 3
      %p197 = scmp.lt.s32.totalorder %s21, 0
      %s198 = scalar_select %p197, %s21, 0
      %s199 = sadd.s32 %s198, %s196
      %s200 = smul.addr %s199, 8
      %s201 = scalar_lea.vmem %s0, %s200
      %p202 = pneg %p56
      %p203 = pneg %p53
      %s204 = smul.u32 6, %s21
      %p205 = scmp.lt.s32.totalorder %s204, 5
      %s206 = scalar_select %p205, %s204, 5
      %p207 = scmp.lt.s32.totalorder %s20, 0
      %s208 = scalar_select %p207, %s20, 0
      %s209 = sadd.s32 %s208, %s206
      %s210 = smul.addr %s209, 4
      %s211 = scalar_lea.vmem %s1, %s210
      %p212 = pneg %p84
      %p213 = pneg %p81
      %p214 = scmp.lt.s32.totalorder %s20, 0
      %s215 = scalar_select %p214, %s20, 0
      %s216 = scalar_lea.vmem %s2, %s215
      %p217 = pneg %p110
      %p218 = pneg %p107
      %p219 = pneg %p138
      %p220 = pneg %p135
      %s221 = smul.u32 2, %s19
      %p222 = scmp.lt.s32.totalorder %s221, 3
      %s223 = scalar_select %p222, %s221, 3
      %p224 = scmp.lt.s32.totalorder %s20, 0
      %s225 = scalar_select %p224, %s20, 0
      %s226 = sadd.s32 %s225, %s223
      %s227 = smul.addr %s226, 8
      %s228 = scalar_lea.vmem %s3, %s227
      %s229 = smul.u32 2, %s19
      %p230 = scmp.lt.s32.totalorder %s229, 3
      %s231 = scalar_select %p230, %s229, 3
      %p232 = scmp.lt.s32.totalorder %s21, 0
      %s233 = scalar_select %p232, %s21, 0
      %s234 = sadd.s32 %s233, %s231
      %s235 = smul.addr %s234, 8
      %s236 = scalar_lea.vmem %s0, %s235
      %s237 = smul.u32 2, %s19
      %s238 = smul.u32 6, %s21
      %p239 = scmp.lt.s32.totalorder %s238, 5
      %s240 = scalar_select %p239, %s238, 5
      %p241 = scmp.lt.s32.totalorder %s20, 0
      %s242 = scalar_select %p241, %s20, 0
      %s243 = sadd.s32 %s242, %s240
      %s244 = smul.addr %s243, 4
      %s245 = scalar_lea.vmem %s1, %s244
      %s246 = smul.u32 6, %s21
      %p247 = scmp.lt.s32.totalorder %s20, 0
      %s248 = scalar_select %p247, %s20, 0
      %s249 = scalar_lea.vmem %s2, %s248
      %s250 = smul.u32 2, %s19
      %p251 = scmp.lt.s32.totalorder %s250, 3
      %s252 = scalar_select %p251, %s250, 3
      %p253 = scmp.lt.s32.totalorder %s20, 0
      %s254 = scalar_select %p253, %s20, 0
      %s255 = sadd.s32 %s254, %s252
      %s256 = smul.addr %s255, 8
      %s257 = scalar_lea.vmem %s3, %s256
      %s258 = smul.u32 2, %s19
      %p260 = scmp.eq.s32.totalorder %s21, 0
      // Predicated region
      $region33: #{vit_forward.4} parent=31 // pred_check
        %p261 = pneg %p260
      $region34: #{vit_forward.4} parent=31 // pred_check_branch
        %263 = sbr.rel (%p261) target = $region36
      $region35: #{vit_forward.4} parent=31 // pred_region
        %264 = vst [vmem:[#allocation2] sm:$0xff] 0.0
        %265 = vst [vmem:[#allocation2 + $0x8] sm:$0xff] 0.0
      $region36: #{vit_forward.4} parent=31 // pred_fallthru
        _
      %v266 = vld [vmem:[%s236] sm:$0xff]
      %v267 = vld [vmem:[%s236 + $0x8] sm:$0xff]
      %v268 = vld [vmem:[#allocation2] sm:$0xff]
      %v269 = vld [vmem:[#allocation2 + $0x8] sm:$0xff]
      %v270 = vpack.c.bf16 %v267, %v266
      %v271 = vld [vmem:[%s245] sm:$0xf]
      %v272 = vld [vmem:[%s245 + $0x4] sm:$0xf]
      %v273 = vld [vmem:[%s245 + $0x8] sm:$0xf]
      %v274 = vld [vmem:[%s245 + $0xc] sm:$0xf]
      %v275 = vld [vmem:[%s245 + $0x10] sm:$0xf]
      %v276 = vld [vmem:[%s245 + $0x14] sm:$0xf]
      %v283 = vunpack.c.l.b16 %v271
      %v284 = vunpack.c.l.b16 %v272
      %v285 = vunpack.c.l.b16 %v273
      %v286 = vunpack.c.l.b16 %v274
      %v287 = vunpack.c.l.b16 %v275
      %v288 = vunpack.c.l.b16 %v276
      %v289 = vpack.c.b16 %v284, %v283
      %v290 = vpack.c.b16 %v286, %v285
      %v291 = vpack.c.b16 %v288, %v287
      %vm295 = vcmask 392192
      %v297 = vsel %vm295, %v270, 0
      %299 = vmatpush.bf16.msra.mxu0 0
      %300 = vmatpush.bf16.msra.mxu0 0
      %301 = vmatpush.bf16.msra.mxu0 0
      %302 = vmatpush.bf16.msra.mxu0 0
      %303 = vmatpush.bf16.msra.mxu0 0
      %304 = vmatpush.bf16.msra.mxu0 %v291
      %305 = vmatpush.bf16.msra.mxu0 %v290
      %306 = vmatpush.bf16.msra.mxu0 %v289
      %307 = vmatmul.bf16.gmra.mxu0 %v297
      %v308 = vpop.f32.mrf.mxu0
      %v309 = vadd.f32 0.0, %v308
      %v310 = vpop.f32.mrf.mxu0
      %v311 = vadd.f32 0.0, %v310
      %312 = vdwg.mxu0
      %v313 = vadd.f32 %v268, %v309
      %v314 = vadd.f32 %v269, %v311
      %315 = vst [vmem:[#allocation2] sm:$0xff] %v313
      %316 = vst [vmem:[#allocation2 + $0x8] sm:$0xff] %v314
      // Predicated region
      $region37: #{vit_forward.4} parent=31 // pred_check
        %p317 = pneg %p260
      $region38: #{vit_forward.4} parent=31 // pred_check_branch
        %319 = sbr.rel (%p317) target = $region40
      $region39: #{vit_forward.4} parent=31 // pred_region
        %v320 = vld [vmem:[#allocation2] sm:$0xff]
        %v321 = vld [vmem:[#allocation2 + $0x8] sm:$0xff]
        %v322 = vld [vmem:[%s249] sm:$0x1]
        %v324 = vperm.slane %v322, 0
        %v326 = vadd.f32 %v320, %v324
        %v327 = vadd.f32 %v321, %v324
        %328 = vst [vmem:[%s257] sm:$0xff] %v326
        %329 = vst [vmem:[%s257 + $0x8] sm:$0xff] %v327
      $region40: #{vit_forward.4} parent=31 // pred_fallthru
        _
      %s330 = smul.u32 2, %s19
      %p331 = scmp.lt.s32.totalorder %s330, 3
      %s332 = scalar_select %p331, %s330, 3
      %p333 = scmp.lt.s32.totalorder %s20, 0
      %s334 = scalar_select %p333, %s20, 0
      %s335 = sadd.s32 %s334, %s332
      %s336 = smul.addr %s335, 8
      %s337 = scalar_lea.vmem %s3, %s336
      // Predicated region
      $region41: #{vit_forward.4} parent=31 // pred_check
        %p338 = pneg %p135
      $region42: #{vit_forward.4} parent=31 // pred_check_branch
        %340 = sbr.rel (%p338) target = $region44
      $region43: #{vit_forward.4} parent=31 // pred_region
        %s341 = smul.u32 2, %s19
      $region44: #{vit_forward.4} parent=31 // pred_fallthru
        _
    $region32: #{vit_forward.4} parent=5 // pred_fallthru
      _
    %p342 = scmp.le.s32.totalorder 2, %s9
    // Predicated region
    $region45: #{vit_forward.4} parent=5 // pred_check
      %p343 = pneg %p342
    $region46: #{vit_forward.4} parent=5 // pred_check_branch
      %345 = sbr.rel (%p343) target = $region48
    $region47: #{vit_forward.4} parent=5 // pred_region
      %s346 = ssub.s32 %s9, 2
      // Predicated region
      $region49: #{vit_forward.4} parent=47 // pred_check
        %p347 = pneg %p141
      $region50: #{vit_forward.4} parent=47 // pred_check_branch
        %349 = sbr.rel (%p347) target = $region52
      $region51: #{vit_forward.4} parent=47 // pred_region
        %s350 = smul.u32 2, %s22
        %p351 = scmp.lt.s32.totalorder %s350, 3
        %s352 = scalar_select %p351, %s350, 3
        %p353 = scmp.lt.s32.totalorder %s23, 0
        %s354 = scalar_select %p353, %s23, 0
        %s355 = sadd.s32 %s354, %s352
        %s356 = smul.addr %s355, 8
        %s357 = scalar_lea.vmem %s3, %s356
      $region52: #{vit_forward.4} parent=47 // pred_fallthru
        _
    $region48: #{vit_forward.4} parent=5 // pred_fallthru
      _
  $region6: #{vit_forward.4} parent=0 // loop_footer
    %s13 = sadd.s32 1, %s9
  $region7: #{vit_forward.4} parent=0 // loop_footer_branch
    %8 = sbr.rel target = $region3
  $region8: #{vit_forward.4} parent=0 // loop_exit
    _

// kernel: vit_forward.7
$region0: #{vit_forward.7}
  #allocation0 [shape = 'u32[]', space=smem, size = 0x4, offset = 0x4, fixed_abs, tag = 'smem constant byte address 0x4 - core index']
  #allocation1 [shape = 'u32[72,128]{1,0:T(1,128)}', space=vmem, size = 0x9000, scoped, tag = 'internal scratch']
  #allocation2 [shape = 'f32[2,10]{1,0:T(2,128)}', space=vmem, size = 0x400, scoped, tag = 'scratch operand']
  %s0 = inlined_call_operand.vmem [shape: f32[2,128], index: 0, kind: input, shape index: {}]
  %s1 = inlined_call_operand.vmem [shape: bf16[128,10], index: 1, kind: input, shape index: {}]
  %s2 = inlined_call_operand.vmem [shape: f32[1,10], index: 2, kind: input, shape index: {}]
  %s3 = inlined_call_operand.vmem [shape: f32[1,128], index: 3, kind: input, shape index: {}]
  %s4 = inlined_call_operand.vmem [shape: f32[1,128], index: 4, kind: input, shape index: {}]
  %s5 = inlined_call_operand.hbm [shape: f32[2,10], index: 5, kind: output, shape index: {}]
  %s6 = sld [smem:[#allocation0]]
  $region38: #{vit_forward.7} parent=0
    _
  %s8 = ssub.s32 1, %s6
  %s9 = scalar_select 0, %s8, %s6
  $region1: #{vit_forward.7} parent=0
    #allocation3 [shape = 'u8[1024]{0}', space=vmem, size = 0x400, scoped, tag = 'output window, operand 0, single buffered']
    #allocation4 [shape = 's32[1]{0}', space=sflag, size = 0x4, scoped, tag = 'scoped memory for vit_forward.7']
    %10 = vsyncpa [#allocation4], 0
    // Predicated region
    $region2: #{vit_forward.7} parent=1 // pred_check
      _
    $region3: #{vit_forward.7} parent=1 // pred_check_branch
      %12 = sbr.rel (0) target = $region5
    $region4: #{vit_forward.7} parent=1 // pred_region
      _
    $region5: #{vit_forward.7} parent=1 // pred_fallthru
      _
    // Predicated region
    $region6: #{vit_forward.7} parent=1 // pred_check
      _
    $region7: #{vit_forward.7} parent=1 // pred_check_branch
      %14 = sbr.rel (0) target = $region9
    $region8: #{vit_forward.7} parent=1 // pred_region
      _
    $region9: #{vit_forward.7} parent=1 // pred_fallthru
      _
    // Predicated region
    $region10: #{vit_forward.7} parent=1 // pred_check
      _
    $region11: #{vit_forward.7} parent=1 // pred_check_branch
      %16 = sbr.rel (0) target = $region13
    $region12: #{vit_forward.7} parent=1 // pred_region
      _
    $region13: #{vit_forward.7} parent=1 // pred_fallthru
      _
    // Predicated region
    $region14: #{vit_forward.7} parent=1 // pred_check
      _
    $region15: #{vit_forward.7} parent=1 // pred_check_branch
      %18 = sbr.rel (0) target = $region17
    $region16: #{vit_forward.7} parent=1 // pred_region
      _
    $region17: #{vit_forward.7} parent=1 // pred_fallthru
      _
    // Predicated region
    $region18: #{vit_forward.7} parent=1 // pred_check
      _
    $region19: #{vit_forward.7} parent=1 // pred_check_branch
      %20 = sbr.rel (0) target = $region21
    $region20: #{vit_forward.7} parent=1 // pred_region
      _
    $region21: #{vit_forward.7} parent=1 // pred_fallthru
      _
    %p21 = scmp.eq.s32.totalorder 0, 0
    // Predicated region
    $region22: #{vit_forward.7} parent=1 // pred_check
      %p22 = pneg %p21
    $region23: #{vit_forward.7} parent=1 // pred_check_branch
      %24 = sbr.rel (%p22) target = $region25
    $region24: #{vit_forward.7} parent=1 // pred_region
      %vm25 = vcmask 74752
      %26 = vst.msk [vmem:[#allocation2] sm:$0x3] %vm25, 0.0
    $region25: #{vit_forward.7} parent=1 // pred_fallthru
      _
    %v27 = vld [vmem:[%s0] sm:$0x3]
    %v28 = vld [vmem:[%s3] sm:$0x1]
    %v29 = vld [vmem:[%s4] sm:$0x1]
    %vm30 = vcmask 1041408
    %v31 = vsel %vm30, %v27, 0.0
    %32 = vadd.xlane.f32.xlu0 %v31
    %v33 = vpop.xlane.xlu0 %32
    %v34 = vrcp.pop 128.0
    %v35 = vmul.f32 128.0, %v34
    %v36 = vsub.f32 1.0, %v35
    %v37 = vmul.f32 %v34, %v36
    %v38 = vadd.f32 %v34, %v37
    %vm39 = vweird.f32 %v34
    %v40 = vsel %vm39, %v34, %v38
    %v41 = vmul.f32 %v33, %v40
    %v42 = vsub.f32 %v27, %v41
    %v43 = vmul.f32 %v42, %v42
    %v44 = vsel %vm30, %v43, 0.0
    %45 = vadd.xlane.f32.xlu0 %v44
    %v46 = vpop.xlane.xlu0 %45
    %v47 = vmul.f32 %v46, %v40
    %v48 = vadd.f32 %v47, 1e-10
    %v49 = vrsqrt.pop %v48
    %v50 = vmul.f32 %v49, %v48
    %v51 = vmul.f32 %v50, %v49
    %v52 = vmul.f32 0.5, %v51
    %v53 = vsub.f32 1.5, %v52
    %v54 = vmul.f32 %v49, %v53
    %vm55 = vweird.f32 %v48
    %vm56 = vweird.f32 %v49
    %vm57 = vmor %vm55, %vm56
    %v58 = vsel %vm57, %v49, %v54
    %v59 = vmul.f32 %v42, %v58
    %v61 = vperm.slane %v28, 0
    %v63 = vmul.f32 %v59, %v61
    %v65 = vperm.slane %v29, 0
    %v67 = vadd.f32 %v63, %v65
    %v68 = vld [vmem:[#allocation2] sm:$0x3]
    %v69 = vpack.c.bf16 %v67, %v67
    %v70 = vld [vmem:[%s1] sm:$0xf]
    %v71 = vld [vmem:[%s1 + $0x4] sm:$0xf]
    %v72 = vld [vmem:[%s1 + $0x8] sm:$0xf]
    %v73 = vld [vmem:[%s1 + $0xc] sm:$0xf]
    %v74 = vld [vmem:[%s1 + $0x10] sm:$0xf]
    %v75 = vld [vmem:[%s1 + $0x14] sm:$0xf]
    %v76 = vld [vmem:[%s1 + $0x18] sm:$0xf]
    %v77 = vld [vmem:[%s1 + $0x1c] sm:$0xf]
    %v78 = vld [vmem:[%s1 + $0x20] sm:$0xf]
    %v79 = vld [vmem:[%s1 + $0x24] sm:$0xf]
    %v80 = vld [vmem:[%s1 + $0x28] sm:$0xf]
    %v81 = vld [vmem:[%s1 + $0x2c] sm:$0xf]
    %v82 = vld [vmem:[%s1 + $0x30] sm:$0xf]
    %v83 = vld [vmem:[%s1 + $0x34] sm:$0xf]
    %v84 = vld [vmem:[%s1 + $0x38] sm:$0xf]
    %v85 = vld [vmem:[%s1 + $0x3c] sm:$0xf]
    %v102 = vunpack.c.l.b16 %v70
    %v103 = vunpack.c.l.b16 %v71
    %v104 = vunpack.c.l.b16 %v72
    %v105 = vunpack.c.l.b16 %v73
    %v106 = vunpack.c.l.b16 %v74
    %v107 = vunpack.c.l.b16 %v75
    %v108 = vunpack.c.l.b16 %v76
    %v109 = vunpack.c.l.b16 %v77
    %v110 = vunpack.c.l.b16 %v78
    %v111 = vunpack.c.l.b16 %v79
    %v112 = vunpack.c.l.b16 %v80
    %v113 = vunpack.c.l.b16 %v81
    %v114 = vunpack.c.l.b16 %v82
    %v115 = vunpack.c.l.b16 %v83
    %v116 = vunpack.c.l.b16 %v84
    %v117 = vunpack.c.l.b16 %v85
    %v118 = vpack.c.b16 %v103, %v102
    %v119 = vpack.c.b16 %v105, %v104
    %v120 = vpack.c.b16 %v107, %v106
    %v121 = vpack.c.b16 %v109, %v108
    %v122 = vpack.c.b16 %v111, %v110
    %v123 = vpack.c.b16 %v113, %v112
    %v124 = vpack.c.b16 %v115, %v114
    %v125 = vpack.c.b16 %v117, %v116
    %134 = vmatpush.bf16.msra.mxu0 %v125
    %135 = vmatpush.bf16.msra.mxu0 %v124
    %136 = vmatpush.bf16.msra.mxu0 %v123
    %137 = vmatpush.bf16.msra.mxu0 %v122
    %138 = vmatpush.bf16.msra.mxu0 %v121
    %139 = vmatpush.bf16.msra.mxu0 %v120
    %140 = vmatpush.bf16.msra.mxu0 %v119
    %141 = vmatpush.bf16.msra.mxu0 %v118
    %142 = vmatmul.bf16.gmra.mxu0 %v69
    %v143 = vpop.f32.mrf.mxu0
    %v144 = vadd.f32 0.0, %v143
    %v145 = vpop.f32.mrf.mxu0
    %146 = vdwg.mxu0
    %v147 = vadd.f32 %v68, %v144
    %vm148 = vcmask 74752
    %149 = vst.msk [vmem:[#allocation2] sm:$0x3] %vm148, %v147
    // Predicated region
    $region26: #{vit_forward.7} parent=1 // pred_check
      %p150 = pneg %p21
    $region27: #{vit_forward.7} parent=1 // pred_check_branch
      %152 = sbr.rel (%p150) target = $region29
    $region28: #{vit_forward.7} parent=1 // pred_region
      %v153 = vld [vmem:[#allocation2] sm:$0x3]
      %v154 = vld [vmem:[%s2] sm:$0x1]
      %v156 = vperm.slane %v154, 0
      %v158 = vadd.f32 %v153, %v156
      %159 = vst.msk [vmem:[#allocation3] sm:$0x3] %vm148, %v158
    $region29: #{vit_forward.7} parent=1 // pred_fallthru
      _
    // Predicated region
    $region30: #{vit_forward.7} parent=1 // pred_check
      _
    $region31: #{vit_forward.7} parent=1 // pred_check_branch
      %161 = sbr.rel (0) target = $region33
    $region32: #{vit_forward.7} parent=1 // pred_region
      %163 = vsyncadd [#allocation4], 0
      %s165 = sshll.u32 [#allocation3], 4
      %s166 = int_to_ptr.vmem [resolvable:$true] %s165
      %s167 = sshll.u32 %s5, 4
      %s168 = int_to_ptr.hbm [resolvable:$true] %s167
      %170 = dma.vmem_to_hbm [thread:$0]  %s166, 32, %s168, [#allocation4]
    $region33: #{vit_forward.7} parent=1 // pred_fallthru
      _
    // Predicated region
    $region34: #{vit_forward.7} parent=1 // pred_check
      _
    $region35: #{vit_forward.7} parent=1 // pred_check_branch
      %172 = sbr.rel (0) target = $region37
    $region36: #{vit_forward.7} parent=1 // pred_region
      %174 = dma.done [#allocation4], 32
    $region37: #{vit_forward.7} parent=1 // pred_fallthru
      _
    %175 = vsyncpa [#allocation4], 1

// kernel: vit_forward.5
$region0: #{vit_forward.5}
  #allocation0 [shape = 'u32[]', space=smem, size = 0x4, offset = 0x4, fixed_abs, tag = 'smem constant byte address 0x4 - core index']
  #allocation1 [shape = 'u32[72,128]{1,0:T(1,128)}', space=vmem, size = 0x9000, scoped, tag = 'internal scratch']
  %s0 = inlined_call_operand.vmem [shape: f32[2,24,128], index: 0, kind: input, shape index: {}]
  %s1 = inlined_call_operand.vmem [shape: f32[1,128], index: 1, kind: input, shape index: {}]
  %s2 = inlined_call_operand.vmem [shape: f32[1,128], index: 2, kind: input, shape index: {}]
  %s3 = inlined_call_operand.vmem [shape: bf16[128,384], index: 3, kind: input, shape index: {}]
  %s4 = inlined_call_operand.vmem [shape: f32[1,384], index: 4, kind: input, shape index: {}]
  %s5 = inlined_call_operand.vmem [shape: bf16[128,128], index: 5, kind: input, shape index: {}]
  %s6 = inlined_call_operand.vmem [shape: f32[1,128], index: 6, kind: input, shape index: {}]
  %s7 = inlined_call_operand.vmem [shape: f32[1,128], index: 7, kind: input, shape index: {}]
  %s8 = inlined_call_operand.vmem [shape: f32[1,128], index: 8, kind: input, shape index: {}]
  %s9 = inlined_call_operand.vmem [shape: bf16[128,512], index: 9, kind: input, shape index: {}]
  %s10 = inlined_call_operand.vmem [shape: f32[1,512], index: 10, kind: input, shape index: {}]
  %s11 = inlined_call_operand.vmem [shape: bf16[512,128], index: 11, kind: input, shape index: {}]
  %s12 = inlined_call_operand.vmem [shape: f32[1,128], index: 12, kind: input, shape index: {}]
  %s13 = inlined_call_operand.vmem [shape: f32[2,24,128], index: 13, kind: output, shape index: {}]
  %s14 = sld [smem:[#allocation0]]
  $region85: #{vit_forward.5} parent=0
    _
  %s16 = ssub.s32 1, %s14
  %s17 = scalar_select 0, %s16, %s14
  loop: start=0, step=1, limit=4
  $region2: #{vit_forward.5} parent=0 // loop_pre_header
    _
  $region3: #{vit_forward.5} parent=0 // loop_header
    %s19 = sphi 0, %s23
    %p20 = scmp.ge.s32.totalorder %s19, 4
    %s29 = sphi 0, %s31
    %s32 = sphi 0, %s29
    %s33 = sphi 0, %s32
    %s49 = sphi 0, %s33
    %s53 = sphi 0, %s53
    %s55 = sphi 0, %s53
    %s56 = sphi 0, %s55
    %s70 = sphi 0, %s56
    %s74 = sphi 0, %s74
    %s76 = sphi 0, %s74
    %s77 = sphi 0, %s76
    %s91 = sphi 0, %s77
    %s95 = sphi 0, %s95
    %s97 = sphi 0, %s95
    %s98 = sphi 0, %s97
    %s112 = sphi 0, %s98
    %s116 = sphi 0, %s116
    %s118 = sphi 0, %s116
    %s119 = sphi 0, %s118
    %s133 = sphi 0, %s119
    %s137 = sphi 0, %s137
    %s139 = sphi 0, %s137
    %s140 = sphi 0, %s139
    %s154 = sphi 0, %s140
    %s158 = sphi 0, %s158
    %s160 = sphi 0, %s158
    %s161 = sphi 0, %s160
    %s175 = sphi 0, %s161
    %s179 = sphi 0, %s179
    %s181 = sphi 0, %s179
    %s182 = sphi 0, %s181
    %s196 = sphi 0, %s182
    %s200 = sphi 0, %s200
    %s202 = sphi 0, %s200
    %s203 = sphi 0, %s202
    %s217 = sphi 0, %s203
    %s221 = sphi 0, %s221
    %s223 = sphi 0, %s221
    %s224 = sphi 0, %s223
    %s238 = sphi 0, %s224
    %s242 = sphi 0, %s242
    %s244 = sphi 0, %s242
    %s245 = sphi 0, %s244
    %s259 = sphi 0, %s245
    %s263 = sphi 0, %s263
    %s265 = sphi 0, %s263
    %s266 = sphi 0, %s265
    %s280 = sphi 0, %s266
    %s284 = sphi 0, %s284
    %s286 = sphi 0, %s284
    %s287 = sphi 0, %s286
    %s301 = sphi 0, %s287
    %s307 = sphi 0, %s309
    %s310 = sphi 0, %s307
    %s311 = sphi 0, %s310
    %s327 = sphi 0, %s311
  $region4: #{vit_forward.5} parent=0 // loop_header_branch
    %22 = sbr.rel (%p20) target = $region8
  $region5: #{vit_forward.5} parent=0 // loop_body
    %s24 = ssub.s32 %s19, 1
    %s25 = ssub.s32 %s19, 2
    %s26 = sadd.s32 %s19, 1
    %s27 = ssub.s32 %s19, %s26
    %p28 = scmp.eq.s32.totalorder %s27, 0
    %s30 = sadd.s32 %s29, 1
    %s31 = scalar_select %p28, %s29, %s30
    %p34 = pneg %p28
    %p35 = scmp.eq.s32.totalorder %s19, 1
    %p36 = por %p34, %p35
    %p37 = scmp.ne.s32.totalorder %s29, %s32
    %p38 = scmp.eq.s32.totalorder %s19, 0
    %p39 = por %p37, %p38
    %p40 = scmp.ne.s32.totalorder %s29, %s32
    %p41 = scmp.eq.s32.totalorder %s24, 1
    %p42 = por %p40, %p41
    %p43 = scmp.ne.s32.totalorder %s32, %s33
    %p44 = scmp.eq.s32.totalorder %s24, 0
    %p45 = por %p43, %p44
    %p46 = scmp.ne.s32.totalorder %s32, %s33
    %p47 = scmp.eq.s32.totalorder %s25, 1
    %p48 = por %p46, %p47
    %p50 = scmp.ne.s32.totalorder %s33, %s49
    %p51 = scmp.eq.s32.totalorder %s25, 0
    %p52 = por %p50, %p51
    %s54 = sadd.s32 %s53, 1
    %p57 = scmp.eq.s32.totalorder %s19, 1
    %p58 = scmp.ne.s32.totalorder %s53, %s55
    %p59 = scmp.eq.s32.totalorder %s19, 0
    %p60 = por %p58, %p59
    %p61 = scmp.ne.s32.totalorder %s53, %s55
    %p62 = scmp.eq.s32.totalorder %s24, 1
    %p63 = por %p61, %p62
    %p64 = scmp.ne.s32.totalorder %s55, %s56
    %p65 = scmp.eq.s32.totalorder %s24, 0
    %p66 = por %p64, %p65
    %p67 = scmp.ne.s32.totalorder %s55, %s56
    %p68 = scmp.eq.s32.totalorder %s25, 1
    %p69 = por %p67, %p68
    %p71 = scmp.ne.s32.totalorder %s56, %s70
    %p72 = scmp.eq.s32.totalorder %s25, 0
    %p73 = por %p71, %p72
    %s75 = sadd.s32 %s74, 1
    %p78 = scmp.eq.s32.totalorder %s19, 1
    %p79 = scmp.ne.s32.totalorder %s74, %s76
    %p80 = scmp.eq.s32.totalorder %s19, 0
    %p81 = por %p79, %p80
    %p82 = scmp.ne.s32.totalorder %s74, %s76
    %p83 = scmp.eq.s32.totalorder %s24, 1
    %p84 = por %p82, %p83
    %p85 = scmp.ne.s32.totalorder %s76, %s77
    %p86 = scmp.eq.s32.totalorder %s24, 0
    %p87 = por %p85, %p86
    %p88 = scmp.ne.s32.totalorder %s76, %s77
    %p89 = scmp.eq.s32.totalorder %s25, 1
    %p90 = por %p88, %p89
    %p92 = scmp.ne.s32.totalorder %s77, %s91
    %p93 = scmp.eq.s32.totalorder %s25, 0
    %p94 = por %p92, %p93
    %s96 = sadd.s32 %s95, 1
    %p99 = scmp.eq.s32.totalorder %s19, 1
    %p100 = scmp.ne.s32.totalorder %s95, %s97
    %p101 = scmp.eq.s32.totalorder %s19, 0
    %p102 = por %p100, %p101
    %p103 = scmp.ne.s32.totalorder %s95, %s97
    %p104 = scmp.eq.s32.totalorder %s24, 1
    %p105 = por %p103, %p104
    %p106 = scmp.ne.s32.totalorder %s97, %s98
    %p107 = scmp.eq.s32.totalorder %s24, 0
    %p108 = por %p106, %p107
    %p109 = scmp.ne.s32.totalorder %s97, %s98
    %p110 = scmp.eq.s32.totalorder %s25, 1
    %p111 = por %p109, %p110
    %p113 = scmp.ne.s32.totalorder %s98, %s112
    %p114 = scmp.eq.s32.totalorder %s25, 0
    %p115 = por %p113, %p114
    %s117 = sadd.s32 %s116, 1
    %p120 = scmp.eq.s32.totalorder %s19, 1
    %p121 = scmp.ne.s32.totalorder %s116, %s118
    %p122 = scmp.eq.s32.totalorder %s19, 0
    %p123 = por %p121, %p122
    %p124 = scmp.ne.s32.totalorder %s116, %s118
    %p125 = scmp.eq.s32.totalorder %s24, 1
    %p126 = por %p124, %p125
    %p127 = scmp.ne.s32.totalorder %s118, %s119
    %p128 = scmp.eq.s32.totalorder %s24, 0
    %p129 = por %p127, %p128
    %p130 = scmp.ne.s32.totalorder %s118, %s119
    %p131 = scmp.eq.s32.totalorder %s25, 1
    %p132 = por %p130, %p131
    %p134 = scmp.ne.s32.totalorder %s119, %s133
    %p135 = scmp.eq.s32.totalorder %s25, 0
    %p136 = por %p134, %p135
    %s138 = sadd.s32 %s137, 1
    %p141 = scmp.eq.s32.totalorder %s19, 1
    %p142 = scmp.ne.s32.totalorder %s137, %s139
    %p143 = scmp.eq.s32.totalorder %s19, 0
    %p144 = por %p142, %p143
    %p145 = scmp.ne.s32.totalorder %s137, %s139
    %p146 = scmp.eq.s32.totalorder %s24, 1
    %p147 = por %p145, %p146
    %p148 = scmp.ne.s32.totalorder %s139, %s140
    %p149 = scmp.eq.s32.totalorder %s24, 0
    %p150 = por %p148, %p149
    %p151 = scmp.ne.s32.totalorder %s139, %s140
    %p152 = scmp.eq.s32.totalorder %s25, 1
    %p153 = por %p151, %p152
    %p155 = scmp.ne.s32.totalorder %s140, %s154
    %p156 = scmp.eq.s32.totalorder %s25, 0
    %p157 = por %p155, %p156
    %s159 = sadd.s32 %s158, 1
    %p162 = scmp.eq.s32.totalorder %s19, 1
    %p163 = scmp.ne.s32.totalorder %s158, %s160
    %p164 = scmp.eq.s32.totalorder %s19, 0
    %p165 = por %p163, %p164
    %p166 = scmp.ne.s32.totalorder %s158, %s160
    %p167 = scmp.eq.s32.totalorder %s24, 1
    %p168 = por %p166, %p167
    %p169 = scmp.ne.s32.totalorder %s160, %s161
    %p170 = scmp.eq.s32.totalorder %s24, 0
    %p171 = por %p169, %p170
    %p172 = scmp.ne.s32.totalorder %s160, %s161
    %p173 = scmp.eq.s32.totalorder %s25, 1
    %p174 = por %p172, %p173
    %p176 = scmp.ne.s32.totalorder %s161, %s175
    %p177 = scmp.eq.s32.totalorder %s25, 0
    %p178 = por %p176, %p177
    %s180 = sadd.s32 %s179, 1
    %p183 = scmp.eq.s32.totalorder %s19, 1
    %p184 = scmp.ne.s32.totalorder %s179, %s181
    %p185 = scmp.eq.s32.totalorder %s19, 0
    %p186 = por %p184, %p185
    %p187 = scmp.ne.s32.totalorder %s179, %s181
    %p188 = scmp.eq.s32.totalorder %s24, 1
    %p189 = por %p187, %p188
    %p190 = scmp.ne.s32.totalorder %s181, %s182
    %p191 = scmp.eq.s32.totalorder %s24, 0
    %p192 = por %p190, %p191
    %p193 = scmp.ne.s32.totalorder %s181, %s182
    %p194 = scmp.eq.s32.totalorder %s25, 1
    %p195 = por %p193, %p194
    %p197 = scmp.ne.s32.totalorder %s182, %s196
    %p198 = scmp.eq.s32.totalorder %s25, 0
    %p199 = por %p197, %p198
    %s201 = sadd.s32 %s200, 1
    %p204 = scmp.eq.s32.totalorder %s19, 1
    %p205 = scmp.ne.s32.totalorder %s200, %s202
    %p206 = scmp.eq.s32.totalorder %s19, 0
    %p207 = por %p205, %p206
    %p208 = scmp.ne.s32.totalorder %s200, %s202
    %p209 = scmp.eq.s32.totalorder %s24, 1
    %p210 = por %p208, %p209
    %p211 = scmp.ne.s32.totalorder %s202, %s203
    %p212 = scmp.eq.s32.totalorder %s24, 0
    %p213 = por %p211, %p212
    %p214 = scmp.ne.s32.totalorder %s202, %s203
    %p215 = scmp.eq.s32.totalorder %s25, 1
    %p216 = por %p214, %p215
    %p218 = scmp.ne.s32.totalorder %s203, %s217
    %p219 = scmp.eq.s32.totalorder %s25, 0
    %p220 = por %p218, %p219
    %s222 = sadd.s32 %s221, 1
    %p225 = scmp.eq.s32.totalorder %s19, 1
    %p226 = scmp.ne.s32.totalorder %s221, %s223
    %p227 = scmp.eq.s32.totalorder %s19, 0
    %p228 = por %p226, %p227
    %p229 = scmp.ne.s32.totalorder %s221, %s223
    %p230 = scmp.eq.s32.totalorder %s24, 1
    %p231 = por %p229, %p230
    %p232 = scmp.ne.s32.totalorder %s223, %s224
    %p233 = scmp.eq.s32.totalorder %s24, 0
    %p234 = por %p232, %p233
    %p235 = scmp.ne.s32.totalorder %s223, %s224
    %p236 = scmp.eq.s32.totalorder %s25, 1
    %p237 = por %p235, %p236
    %p239 = scmp.ne.s32.totalorder %s224, %s238
    %p240 = scmp.eq.s32.totalorder %s25, 0
    %p241 = por %p239, %p240
    %s243 = sadd.s32 %s242, 1
    %p246 = scmp.eq.s32.totalorder %s19, 1
    %p247 = scmp.ne.s32.totalorder %s242, %s244
    %p248 = scmp.eq.s32.totalorder %s19, 0
    %p249 = por %p247, %p248
    %p250 = scmp.ne.s32.totalorder %s242, %s244
    %p251 = scmp.eq.s32.totalorder %s24, 1
    %p252 = por %p250, %p251
    %p253 = scmp.ne.s32.totalorder %s244, %s245
    %p254 = scmp.eq.s32.totalorder %s24, 0
    %p255 = por %p253, %p254
    %p256 = scmp.ne.s32.totalorder %s244, %s245
    %p257 = scmp.eq.s32.totalorder %s25, 1
    %p258 = por %p256, %p257
    %p260 = scmp.ne.s32.totalorder %s245, %s259
    %p261 = scmp.eq.s32.totalorder %s25, 0
    %p262 = por %p260, %p261
    %s264 = sadd.s32 %s263, 1
    %p267 = scmp.eq.s32.totalorder %s19, 1
    %p268 = scmp.ne.s32.totalorder %s263, %s265
    %p269 = scmp.eq.s32.totalorder %s19, 0
    %p270 = por %p268, %p269
    %p271 = scmp.ne.s32.totalorder %s263, %s265
    %p272 = scmp.eq.s32.totalorder %s24, 1
    %p273 = por %p271, %p272
    %p274 = scmp.ne.s32.totalorder %s265, %s266
    %p275 = scmp.eq.s32.totalorder %s24, 0
    %p276 = por %p274, %p275
    %p277 = scmp.ne.s32.totalorder %s265, %s266
    %p278 = scmp.eq.s32.totalorder %s25, 1
    %p279 = por %p277, %p278
    %p281 = scmp.ne.s32.totalorder %s266, %s280
    %p282 = scmp.eq.s32.totalorder %s25, 0
    %p283 = por %p281, %p282
    %s285 = sadd.s32 %s284, 1
    %p288 = scmp.eq.s32.totalorder %s19, 1
    %p289 = scmp.ne.s32.totalorder %s284, %s286
    %p290 = scmp.eq.s32.totalorder %s19, 0
    %p291 = por %p289, %p290
    %p292 = scmp.ne.s32.totalorder %s284, %s286
    %p293 = scmp.eq.s32.totalorder %s24, 1
    %p294 = por %p292, %p293
    %p295 = scmp.ne.s32.totalorder %s286, %s287
    %p296 = scmp.eq.s32.totalorder %s24, 0
    %p297 = por %p295, %p296
    %p298 = scmp.ne.s32.totalorder %s286, %s287
    %p299 = scmp.eq.s32.totalorder %s25, 1
    %p300 = por %p298, %p299
    %p302 = scmp.ne.s32.totalorder %s287, %s301
    %p303 = scmp.eq.s32.totalorder %s25, 0
    %p304 = por %p302, %p303
    %s305 = ssub.s32 %s19, %s26
    %p306 = scmp.eq.s32.totalorder %s305, 0
    %s308 = sadd.s32 %s307, 1
    %s309 = scalar_select %p306, %s307, %s308
    %p312 = pneg %p306
    %p313 = scmp.eq.s32.totalorder %s19, 1
    %p314 = por %p312, %p313
    %p315 = scmp.ne.s32.totalorder %s307, %s310
    %p316 = scmp.eq.s32.totalorder %s19, 0
    %p317 = por %p315, %p316
    %p318 = scmp.ne.s32.totalorder %s307, %s310
    %p319 = scmp.eq.s32.totalorder %s24, 1
    %p320 = por %p318, %p319
    %p321 = scmp.ne.s32.totalorder %s310, %s311
    %p322 = scmp.eq.s32.totalorder %s24, 0
    %p323 = por %p321, %p322
    %p324 = scmp.ne.s32.totalorder %s310, %s311
    %p325 = scmp.eq.s32.totalorder %s25, 1
    %p326 = por %p324, %p325
    %p328 = scmp.ne.s32.totalorder %s311, %s327
    %p329 = scmp.eq.s32.totalorder %s25, 0
    %p330 = por %p328, %p329
    %p331 = scmp.le.s32.totalorder 1, %s19
    %p332 = scmp.lt.s32.totalorder %s19, 3
    %p333 = pnand %p331, %p332
    %p334 = pneg %p333
    // Predicated region
    $region9: #{vit_forward.5} parent=5 // pred_check
      _
    $region10: #{vit_forward.5} parent=5 // pred_check_branch
      %336 = sbr.rel (%p333) target = $region12
    $region11: #{vit_forward.5} parent=5 // pred_region
      %s337 = ssub.s32 %s19, 1
      // Predicated region
      $region13: #{vit_forward.5} parent=11 // pred_check
        %p338 = pneg %p66
      $region14: #{vit_forward.5} parent=11 // pred_check_branch
        %340 = sbr.rel (%p338) target = $region16
      $region15: #{vit_forward.5} parent=11 // pred_region
        _
      $region16: #{vit_forward.5} parent=11 // pred_fallthru
        _
      // Predicated region
      $region17: #{vit_forward.5} parent=11 // pred_check
        %p341 = pneg %p87
      $region18: #{vit_forward.5} parent=11 // pred_check_branch
        %343 = sbr.rel (%p341) target = $region20
      $region19: #{vit_forward.5} parent=11 // pred_region
        _
      $region20: #{vit_forward.5} parent=11 // pred_fallthru
        _
      // Predicated region
      $region21: #{vit_forward.5} parent=11 // pred_check
        %p344 = pneg %p108
      $region22: #{vit_forward.5} parent=11 // pred_check_branch
        %346 = sbr.rel (%p344) target = $region24
      $region23: #{vit_forward.5} parent=11 // pred_region
        _
      $region24: #{vit_forward.5} parent=11 // pred_fallthru
        _
      // Predicated region
      $region25: #{vit_forward.5} parent=11 // pred_check
        %p347 = pneg %p129
      $region26: #{vit_forward.5} parent=11 // pred_check_branch
        %349 = sbr.rel (%p347) target = $region28
      $region27: #{vit_forward.5} parent=11 // pred_region
        _
      $region28: #{vit_forward.5} parent=11 // pred_fallthru
        _
      // Predicated region
      $region29: #{vit_forward.5} parent=11 // pred_check
        %p350 = pneg %p150
      $region30: #{vit_forward.5} parent=11 // pred_check_branch
        %352 = sbr.rel (%p350) target = $region32
      $region31: #{vit_forward.5} parent=11 // pred_region
        _
      $region32: #{vit_forward.5} parent=11 // pred_fallthru
        _
      // Predicated region
      $region33: #{vit_forward.5} parent=11 // pred_check
        %p353 = pneg %p171
      $region34: #{vit_forward.5} parent=11 // pred_check_branch
        %355 = sbr.rel (%p353) target = $region36
      $region35: #{vit_forward.5} parent=11 // pred_region
        _
      $region36: #{vit_forward.5} parent=11 // pred_fallthru
        _
      // Predicated region
      $region37: #{vit_forward.5} parent=11 // pred_check
        %p356 = pneg %p192
      $region38: #{vit_forward.5} parent=11 // pred_check_branch
        %358 = sbr.rel (%p356) target = $region40
      $region39: #{vit_forward.5} parent=11 // pred_region
        _
      $region40: #{vit_forward.5} parent=11 // pred_fallthru
        _
      // Predicated region
      $region41: #{vit_forward.5} parent=11 // pred_check
        %p359 = pneg %p213
      $region42: #{vit_forward.5} parent=11 // pred_check_branch
        %361 = sbr.rel (%p359) target = $region44
      $region43: #{vit_forward.5} parent=11 // pred_region
        _
      $region44: #{vit_forward.5} parent=11 // pred_fallthru
        _
      // Predicated region
      $region45: #{vit_forward.5} parent=11 // pred_check
        %p362 = pneg %p234
      $region46: #{vit_forward.5} parent=11 // pred_check_branch
        %364 = sbr.rel (%p362) target = $region48
      $region47: #{vit_forward.5} parent=11 // pred_region
        _
      $region48: #{vit_forward.5} parent=11 // pred_fallthru
        _
      // Predicated region
      $region49: #{vit_forward.5} parent=11 // pred_check
        %p365 = pneg %p255
      $region50: #{vit_forward.5} parent=11 // pred_check_branch
        %367 = sbr.rel (%p365) target = $region52
      $region51: #{vit_forward.5} parent=11 // pred_region
        _
      $region52: #{vit_forward.5} parent=11 // pred_fallthru
        _
      // Predicated region
      $region53: #{vit_forward.5} parent=11 // pred_check
        %p368 = pneg %p276
      $region54: #{vit_forward.5} parent=11 // pred_check_branch
        %370 = sbr.rel (%p368) target = $region56
      $region55: #{vit_forward.5} parent=11 // pred_region
        _
      $region56: #{vit_forward.5} parent=11 // pred_fallthru
        _
      // Predicated region
      $region57: #{vit_forward.5} parent=11 // pred_check
        %p371 = pneg %p297
      $region58: #{vit_forward.5} parent=11 // pred_check_branch
        %373 = sbr.rel (%p371) target = $region60
      $region59: #{vit_forward.5} parent=11 // pred_region
        _
      $region60: #{vit_forward.5} parent=11 // pred_fallthru
        _
    $region12: #{vit_forward.5} parent=5 // pred_fallthru
      _
    %p374 = scmp.lt.s32.totalorder %s19, 2
    // Predicated region
    $region61: #{vit_forward.5} parent=5 // pred_check
      %p375 = pneg %p374
    $region62: #{vit_forward.5} parent=5 // pred_check_branch
      %377 = sbr.rel (%p375) target = $region64
    $region63: #{vit_forward.5} parent=5 // pred_region
      // Predicated region
      $region65: #{vit_forward.5} parent=63 // pred_check
        %p378 = pneg %p39
      $region66: #{vit_forward.5} parent=63 // pred_check_branch
        %380 = sbr.rel (%p378) target = $region68
      $region67: #{vit_forward.5} parent=63 // pred_region
        %p381 = scmp.lt.s32.totalorder %s19, 1
        %s382 = scalar_select %p381, %s19, 1
        %s383 = smul.addr %s382, 3
        %s384 = smul.addr %s383, 8
        %s385 = scalar_lea.vmem %s0, %s384
      $region68: #{vit_forward.5} parent=63 // pred_fallthru
        _
    $region64: #{vit_forward.5} parent=5 // pred_fallthru
      _
    %p386 = scmp.le.s32.totalorder 1, %s19
    %p387 = scmp.lt.s32.totalorder %s19, 3
    %p388 = pnand %p386, %p387
    %p389 = pneg %p388
    // Predicated region
    $region69: #{vit_forward.5} parent=5 // pred_check
      _
    $region70: #{vit_forward.5} parent=5 // pred_check_branch
      %391 = sbr.rel (%p388) target = $region72
    $region71: #{vit_forward.5} parent=5 // pred_region
      %s392 = ssub.s32 %s19, 1
      %p393 = scmp.lt.s32.totalorder %s24, 1
      %s394 = scalar_select %p393, %s24, 1
      %s395 = smul.addr %s394, 3
      %s396 = smul.addr %s395, 8
      %s397 = scalar_lea.vmem %s0, %s396
      %p398 = pneg %p45
      %p399 = pneg %p42
      %p400 = pneg %p66
      %p401 = pneg %p63
      %p402 = pneg %p87
      %p403 = pneg %p84
      %p404 = pneg %p108
      %p405 = pneg %p105
      %p406 = pneg %p129
      %p407 = pneg %p126
      %p408 = pneg %p150
      %p409 = pneg %p147
      %p410 = pneg %p171
      %p411 = pneg %p168
      %p412 = pneg %p192
      %p413 = pneg %p189
      %p414 = pneg %p213
      %p415 = pneg %p210
      %p416 = pneg %p234
      %p417 = pneg %p231
      %p418 = pneg %p255
      %p419 = pneg %p252
      %p420 = pneg %p276
      %p421 = pneg %p273
      %p422 = pneg %p297
      %p423 = pneg %p294
      %p424 = pneg %p323
      %p425 = pneg %p320
      %p426 = scmp.lt.s32.totalorder %s24, 1
      %s427 = scalar_select %p426, %s24, 1
      %s428 = smul.addr %s427, 3
      %s429 = smul.addr %s428, 8
      %s430 = scalar_lea.vmem %s13, %s429
      %p431 = scmp.lt.s32.totalorder %s24, 1
      %s432 = scalar_select %p431, %s24, 1
      %s433 = smul.addr %s432, 3
      %s434 = smul.addr %s433, 8
      %s435 = scalar_lea.vmem %s0, %s434
      %p436 = scmp.lt.s32.totalorder %s24, 1
      %s437 = scalar_select %p436, %s24, 1
      %s438 = smul.addr %s437, 3
      %s439 = smul.addr %s438, 8
      %s440 = scalar_lea.vmem %s13, %s439
      %v442 = vld [vmem:[%s435] sm:$0xff]
      %v443 = vld [vmem:[%s435 + $0x8] sm:$0xff]
      %v444 = vld [vmem:[%s435 + $0x10] sm:$0xff]
      %v445 = vld [vmem:[%s1] sm:$0x1]
      %v446 = vld [vmem:[%s2] sm:$0x1]
      %447 = vadd.xlane.f32.xlu0 %v442
      %v448 = vpop.xlane.xlu0 %447
      %449 = vadd.xlane.f32.xlu0 %v443
      %v450 = vpop.xlane.xlu0 %449
      %451 = vadd.xlane.f32.xlu0 %v444
      %v452 = vpop.xlane.xlu0 %451
      %v453 = vrcp.pop 128.0
      %v454 = vmul.f32 128.0, %v453
      %v455 = vsub.f32 1.0, %v454
      %v456 = vmul.f32 %v453, %v455
      %v457 = vadd.f32 %v453, %v456
      %vm458 = vweird.f32 %v453
      %v459 = vsel %vm458, %v453, %v457
      %v460 = vmul.f32 %v448, %v459
      %v461 = vmul.f32 %v450, %v459
      %v462 = vmul.f32 %v452, %v459
      %v463 = vsub.f32 %v442, %v460
      %v464 = vsub.f32 %v443, %v461
      %v465 = vsub.f32 %v444, %v462
      %v466 = vmul.f32 %v463, %v463
      %v467 = vmul.f32 %v464, %v464
      %v468 = vmul.f32 %v465, %v465
      %469 = vadd.xlane.f32.xlu0 %v466
      %v470 = vpop.xlane.xlu0 %469
      %471 = vadd.xlane.f32.xlu0 %v467
      %v472 = vpop.xlane.xlu0 %471
      %473 = vadd.xlane.f32.xlu0 %v468
      %v474 = vpop.xlane.xlu0 %473
      %v475 = vmul.f32 %v470, %v459
      %v476 = vmul.f32 %v472, %v459
      %v477 = vmul.f32 %v474, %v459
      %v478 = vadd.f32 %v475, 1e-05
      %v479 = vadd.f32 %v476, 1e-05
      %v480 = vadd.f32 %v477, 1e-05
      %v481 = vrsqrt.pop %v478
      %v482 = vmul.f32 %v481, %v478
      %v483 = vmul.f32 %v482, %v481
      %v484 = vmul.f32 0.5, %v483
      %v485 = vsub.f32 1.5, %v484
      %v486 = vmul.f32 %v481, %v485
      %vm487 = vweird.f32 %v478
      %vm488 = vweird.f32 %v481
      %vm489 = vmor %vm487, %vm488
      %v490 = vsel %vm489, %v481, %v486
      %v491 = vrsqrt.pop %v479
      %v492 = vmul.f32 %v491, %v479
      %v493 = vmul.f32 %v492, %v491
      %v494 = vmul.f32 0.5, %v493
      %v495 = vsub.f32 1.5, %v494
      %v496 = vmul.f32 %v491, %v495
      %vm497 = vweird.f32 %v479
      %vm498 = vweird.f32 %v491
      %vm499 = vmor %vm497, %vm498
      %v500 = vsel %vm499, %v491, %v496
      %v501 = vrsqrt.pop %v480
      %v502 = vmul.f32 %v501, %v480
      %v503 = vmul.f32 %v502, %v501
      %v504 = vmul.f32 0.5, %v503
      %v505 = vsub.f32 1.5, %v504
      %v506 = vmul.f32 %v501, %v505
      %vm507 = vweird.f32 %v480
      %vm508 = vweird.f32 %v501
      %vm509 = vmor %vm507, %vm508
      %v510 = vsel %vm509, %v501, %v506
      %v511 = vmul.f32 %v463, %v490
      %v512 = vmul.f32 %v464, %v500
      %v513 = vmul.f32 %v465, %v510
      %v515 = vperm.slane %v445, 0
      %v517 = vmul.f32 %v511, %v515
      %v518 = vmul.f32 %v512, %v515
      %v519 = vmul.f32 %v513, %v515
      %v521 = vperm.slane %v446, 0
      %v523 = vadd.f32 %v517, %v521
      %v524 = vadd.f32 %v518, %v521
      %v525 = vadd.f32 %v519, %v521
      %v526 = vpack.c.bf16 %v524, %v523
      %v527 = vpack.c.bf16 %v525, %v525
      %v528 = vld [vmem:[%s3] sm:$0xff]
      %v529 = vld [vmem:[%s3 + $0x8] sm:$0xf]
      %v530 = vld [vmem:[%s3 + $0xc] sm:$0xff]
      %v531 = vld [vmem:[%s3 + $0x14] sm:$0xf]
      %v532 = vld [vmem:[%s3 + $0x18] sm:$0xff]
      %v533 = vld [vmem:[%s3 + $0x20] sm:$0xf]
      %v534 = vld [vmem:[%s3 + $0x24] sm:$0xff]
      %v535 = vld [vmem:[%s3 + $0x2c] sm:$0xf]
      %v536 = vld [vmem:[%s3 + $0x30] sm:$0xff]
      %v537 = vld [vmem:[%s3 + $0x38] sm:$0xf]
      %v538 = vld [vmem:[%s3 + $0x3c] sm:$0xff]
      %v539 = vld [vmem:[%s3 + $0x44] sm:$0xf]
      %v540 = vld [vmem:[%s3 + $0x48] sm:$0xff]
      %v541 = vld [vmem:[%s3 + $0x50] sm:$0xf]
      %v542 = vld [vmem:[%s3 + $0x54] sm:$0xff]
      %v543 = vld [vmem:[%s3 + $0x5c] sm:$0xf]
      %v544 = vld [vmem:[%s3 + $0x60] sm:$0xff]
      %v545 = vld [vmem:[%s3 + $0x68] sm:$0xf]
      %v546 = vld [vmem:[%s3 + $0x6c] sm:$0xff]
      %v547 = vld [vmem:[%s3 + $0x74] sm:$0xf]
      %v548 = vld [vmem:[%s3 + $0x78] sm:$0xff]
      %v549 = vld [vmem:[%s3 + $0x80] sm:$0xf]
      %v550 = vld [vmem:[%s3 + $0x84] sm:$0xff]
      %v551 = vld [vmem:[%s3 + $0x8c] sm:$0xf]
      %v552 = vld [vmem:[%s3 + $0x90] sm:$0xff]
      %v553 = vld [vmem:[%s3 + $0x98] sm:$0xf]
      %v554 = vld [vmem:[%s3 + $0x9c] sm:$0xff]
      %v555 = vld [vmem:[%s3 + $0xa4] sm:$0xf]
      %v556 = vld [vmem:[%s3 + $0xa8] sm:$0xff]
      %v557 = vld [vmem:[%s3 + $0xb0] sm:$0xf]
      %v558 = vld [vmem:[%s3 + $0xb4] sm:$0xff]
      %v559 = vld [vmem:[%s3 + $0xbc] sm:$0xf]
      %v560 = vld [vmem:[%s4] sm:$0x7]
      %v562 = vperm.slane %v560, 0
      %v563 = vperm.slane %v560, 1
      %v564 = vperm.slane %v560, 2
      %v600 = vunpack.c.l.b16 %v528
      %v601 = vunpack.c.h.b16 %v528
      %v602 = vunpack.c.l.b16 %v529
      %v603 = vunpack.c.l.b16 %v530
      %v604 = vunpack.c.h.b16 %v530
      %v605 = vunpack.c.l.b16 %v531
      %v606 = vunpack.c.l.b16 %v532
      %v607 = vunpack.c.h.b16 %v532
      %v608 = vunpack.c.l.b16 %v533
      %v609 = vunpack.c.l.b16 %v534
      %v610 = vunpack.c.h.b16 %v534
      %v611 = vunpack.c.l.b16 %v535
      %v612 = vunpack.c.l.b16 %v536
      %v613 = vunpack.c.h.b16 %v536
      %v614 = vunpack.c.l.b16 %v537
      %v615 = vunpack.c.l.b16 %v538
      %v616 = vunpack.c.h.b16 %v538
      %v617 = vunpack.c.l.b16 %v539
      %v618 = vunpack.c.l.b16 %v540
      %v619 = vunpack.c.h.b16 %v540
      %v620 = vunpack.c.l.b16 %v541
      %v621 = vunpack.c.l.b16 %v542
      %v622 = vunpack.c.h.b16 %v542
      %v623 = vunpack.c.l.b16 %v543
      %v624 = vunpack.c.l.b16 %v544
      %v625 = vunpack.c.h.b16 %v544
      %v626 = vunpack.c.l.b16 %v545
      %v627 = vunpack.c.l.b16 %v546
      %v628 = vunpack.c.h.b16 %v546
      %v629 = vunpack.c.l.b16 %v547
      %v630 = vunpack.c.l.b16 %v548
      %v631 = vunpack.c.h.b16 %v548
      %v632 = vunpack.c.l.b16 %v549
      %v633 = vunpack.c.l.b16 %v550
      %v634 = vunpack.c.h.b16 %v550
      %v635 = vunpack.c.l.b16 %v551
      %v636 = vunpack.c.l.b16 %v552
      %v637 = vunpack.c.h.b16 %v552
      %v638 = vunpack.c.l.b16 %v553
      %v639 = vunpack.c.l.b16 %v554
      %v640 = vunpack.c.h.b16 %v554
      %v641 = vunpack.c.l.b16 %v555
      %v642 = vunpack.c.l.b16 %v556
      %v643 = vunpack.c.h.b16 %v556
      %v644 = vunpack.c.l.b16 %v557
      %v645 = vunpack.c.l.b16 %v558
      %v646 = vunpack.c.h.b16 %v558
      %v647 = vunpack.c.l.b16 %v559
      %v648 = vpack.c.b16 %v603, %v600
      %v649 = vpack.c.b16 %v604, %v601
      %v650 = vpack.c.b16 %v605, %v602
      %v651 = vpack.c.b16 %v609, %v606
      %v652 = vpack.c.b16 %v610, %v607
      %v653 = vpack.c.b16 %v611, %v608
      %v654 = vpack.c.b16 %v615, %v612
      %v655 = vpack.c.b16 %v616, %v613
      %v656 = vpack.c.b16 %v617, %v614
      %v657 = vpack.c.b16 %v621, %v618
      %v658 = vpack.c.b16 %v622, %v619
      %v659 = vpack.c.b16 %v623, %v620
      %v660 = vpack.c.b16 %v627, %v624
      %v661 = vpack.c.b16 %v628, %v625
      %v662 = vpack.c.b16 %v629, %v626
      %v663 = vpack.c.b16 %v633, %v630
      %v664 = vpack.c.b16 %v634, %v631
      %v665 = vpack.c.b16 %v635, %v632
      %v666 = vpack.c.b16 %v639, %v636
      %v667 = vpack.c.b16 %v640, %v637
      %v668 = vpack.c.b16 %v641, %v638
      %v669 = vpack.c.b16 %v645, %v642
      %v670 = vpack.c.b16 %v646, %v643
      %v671 = vpack.c.b16 %v647, %v644
      %696 = vmatpush.bf16.msra.mxu0 %v669
      %697 = vmatpush.bf16.msra.mxu0 %v666
      %698 = vmatpush.bf16.msra.mxu0 %v663
      %699 = vmatpush.bf16.msra.mxu0 %v660
      %700 = vmatpush.bf16.msra.mxu0 %v657
      %701 = vmatpush.bf16.msra.mxu0 %v654
      %702 = vmatpush.bf16.msra.mxu0 %v651
      %703 = vmatpush.bf16.msra.mxu0 %v648
      %704 = vmatmul.bf16.gmra.mxu0 %v526
      %v705 = vpop.f32.mrf.mxu0
      %v706 = vadd.f32 %v562, %v705
      %v707 = vpop.f32.mrf.mxu0
      %v708 = vadd.f32 %v562, %v707
      %709 = vmatmul.bf16.gmra.mxu0 %v527
      %v710 = vpop.f32.mrf.mxu0
      %v711 = vadd.f32 %v562, %v710
      %v712 = vpop.f32.mrf.mxu0
      %713 = vdwg.mxu0
      %714 = vmatpush.bf16.msra.mxu0 %v670
      %715 = vmatpush.bf16.msra.mxu0 %v667
      %716 = vmatpush.bf16.msra.mxu0 %v664
      %717 = vmatpush.bf16.msra.mxu0 %v661
      %718 = vmatpush.bf16.msra.mxu0 %v658
      %719 = vmatpush.bf16.msra.mxu0 %v655
      %720 = vmatpush.bf16.msra.mxu0 %v652
      %721 = vmatpush.bf16.msra.mxu0 %v649
      %722 = vmatmul.bf16.gmra.mxu0 %v526
      %v723 = vpop.f32.mrf.mxu0
      %v724 = vadd.f32 %v563, %v723
      %v725 = vpop.f32.mrf.mxu0
      %v726 = vadd.f32 %v563, %v725
      %727 = vmatmul.bf16.gmra.mxu0 %v527
      %v728 = vpop.f32.mrf.mxu0
      %v729 = vadd.f32 %v563, %v728
      %v730 = vpop.f32.mrf.mxu0
      %731 = vdwg.mxu0
      %732 = vmatpush.bf16.msra.mxu0 %v671
      %733 = vmatpush.bf16.msra.mxu0 %v668
      %734 = vmatpush.bf16.msra.mxu0 %v665
      %735 = vmatpush.bf16.msra.mxu0 %v662
      %736 = vmatpush.bf16.msra.mxu0 %v659
      %737 = vmatpush.bf16.msra.mxu0 %v656
      %738 = vmatpush.bf16.msra.mxu0 %v653
      %739 = vmatpush.bf16.msra.mxu0 %v650
      %740 = vmatmul.bf16.gmra.mxu0 %v526
      %v741 = vpop.f32.mrf.mxu0
      %v742 = vadd.f32 %v564, %v741
      %v743 = vpop.f32.mrf.mxu0
      %v744 = vadd.f32 %v564, %v743
      %745 = vmatmul.bf16.gmra.mxu0 %v527
      %v746 = vpop.f32.mrf.mxu0
      %v747 = vadd.f32 %v564, %v746
      %v748 = vpop.f32.mrf.mxu0
      %749 = vdwg.mxu0
      %v750 = vlaneseq
      %v751 = vand.u32 %v750, 127
      %vm752 = vcmp.lt.s32.totalorder %v751, 17
      %v753 = vpack.c.bf16 %v708, %v706
      %v754 = vpack.c.bf16 %v711, %v711
      %v755 = vpack.c.bf16 %v726, %v724
      %v756 = vpack.c.bf16 %v729, %v729
      %vm757 = vcmask 261120
      %v759 = vsel %vm757, %v753, 0
      %v762 = vsel %vm757, %v754, 0
      %v765 = vsel %vm757, %v755, 0
      %v768 = vsel %vm757, %v756, 0
      %770 = vmatpush.bf16.xpose.msra.mxu0 0
      %771 = vmatpush.bf16.xpose.msra.mxu0 0
      %772 = vmatpush.bf16.xpose.msra.mxu0 0
      %773 = vmatpush.bf16.xpose.msra.mxu0 0
      %774 = vmatpush.bf16.xpose.msra.mxu0 0
      %775 = vmatpush.bf16.xpose.msra.mxu0 0
      %776 = vmatpush.bf16.xpose.msra.mxu0 %v768
      %777 = vmatpush.bf16.xpose.msra.mxu0 %v765
      %778 = vmatmul.bf16.gmra.mxu0 %v759
      %v779 = vpop.f32.mrf.mxu0
      %v780 = vadd.f32 0.0, %v779
      %v781 = vpop.f32.mrf.mxu0
      %v782 = vadd.f32 0.0, %v781
      %783 = vmatmul.bf16.gmra.mxu0 %v762
      %v784 = vpop.f32.mrf.mxu0
      %v785 = vadd.f32 0.0, %v784
      %v786 = vpop.f32.mrf.mxu0
      %787 = vdwg.mxu0
      %v788 = vsel %vm752, %v780, -1e+30
      %v789 = vsel %vm752, %v782, -1e+30
      %v790 = vsel %vm752, %v785, -1e+30
      %vm791 = vcmask 195584
      %v792 = vsel %vm791, %v788, -inf
      %793 = vmax.xlane.f32.xlu0 %v792
      %v794 = vpop.xlane.xlu0 %793
      %v795 = vsel %vm791, %v789, -inf
      %796 = vmax.xlane.f32.xlu0 %v795
      %v797 = vpop.xlane.xlu0 %796
      %v798 = vsel %vm791, %v790, -inf
      %799 = vmax.xlane.f32.xlu0 %v798
      %v800 = vpop.xlane.xlu0 %799
      %v801 = vsub.f32 %v788, %v794
      %v802 = vsub.f32 %v789, %v797
      %v803 = vsub.f32 %v790, %v800
      %v804 = vmul.f32 %v801, 1.442695
      %v805 = vpow.pop %v804
      %v806 = vmul.f32 %v802, 1.442695
      %v807 = vpow.pop %v806
      %v808 = vmul.f32 %v803, 1.442695
      %v809 = vpow.pop %v808
      %v810 = vsel %vm791, %v805, 0.0
      %811 = vadd.xlane.f32.xlu0 %v810
      %v812 = vpop.xlane.xlu0 %811
      %v813 = vsel %vm791, %v807, 0.0
      %814 = vadd.xlane.f32.xlu0 %v813
      %v815 = vpop.xlane.xlu0 %814
      %v816 = vsel %vm791, %v809, 0.0
      %817 = vadd.xlane.f32.xlu0 %v816
      %v818 = vpop.xlane.xlu0 %817
      %v819 = vpack.c.bf16 %v807, %v805
      %v820 = vpack.c.bf16 %v809, %v809
      %v821 = vpack.c.bf16 %v744, %v742
      %v822 = vpack.c.bf16 %v747, %v747
      %v824 = vsel %vm791, %v819, 0
      %v827 = vsel %vm791, %v820, 0
      %vm829 = vcmask 1043456
      %v831 = vsel %vm829, %v822, 0
      %833 = vmatpush.bf16.msra.mxu0 0
      %834 = vmatpush.bf16.msra.mxu0 0
      %835 = vmatpush.bf16.msra.mxu0 0
      %836 = vmatpush.bf16.msra.mxu0 0
      %837 = vmatpush.bf16.msra.mxu0 0
      %838 = vmatpush.bf16.msra.mxu0 0
      %839 = vmatpush.bf16.msra.mxu0 %v831
      %840 = vmatpush.bf16.msra.mxu0 %v821
      %841 = vmatmul.bf16.gmra.mxu0 %v824
      %v842 = vpop.f32.mrf.mxu0
      %v843 = vadd.f32 0.0, %v842
      %v844 = vpop.f32.mrf.mxu0
      %v845 = vadd.f32 0.0, %v844
      %846 = vmatmul.bf16.gmra.mxu0 %v827
      %v847 = vpop.f32.mrf.mxu0
      %v848 = vadd.f32 0.0, %v847
      %v849 = vpop.f32.mrf.mxu0
      %850 = vdwg.mxu0
      %v851 = vrcp.pop %v812
      %v852 = vrcp.pop %v815
      %v853 = vrcp.pop %v818
      %v854 = vmul.f32 %v843, %v851
      %v855 = vmul.f32 %v845, %v852
      %v856 = vmul.f32 %v848, %v853
      %859 = vrot.lane.b32.xlu0 %v753, 96
      %v860 = vpop.permute.xlu0 %859
      %861 = vrot.lane.b32.xlu0 %v754, 96
      %v862 = vpop.permute.xlu0 %861
      %865 = vrot.lane.b32.xlu0 %v755, 96
      %v866 = vpop.permute.xlu0 %865
      %867 = vrot.lane.b32.xlu0 %v756, 96
      %v868 = vpop.permute.xlu0 %867
      %v870 = vsel %vm757, %v860, 0
      %v873 = vsel %vm757, %v862, 0
      %v876 = vsel %vm757, %v866, 0
      %v879 = vsel %vm757, %v868, 0
      %881 = vmatpush.bf16.xpose.msra.mxu0 0
      %882 = vmatpush.bf16.xpose.msra.mxu0 0
      %883 = vmatpush.bf16.xpose.msra.mxu0 0
      %884 = vmatpush.bf16.xpose.msra.mxu0 0
      %885 = vmatpush.bf16.xpose.msra.mxu0 0
      %886 = vmatpush.bf16.xpose.msra.mxu0 0
      %887 = vmatpush.bf16.xpose.msra.mxu0 %v879
      %888 = vmatpush.bf16.xpose.msra.mxu0 %v876
      %889 = vmatmul.bf16.gmra.mxu0 %v870
      %v890 = vpop.f32.mrf.mxu0
      %v891 = vadd.f32 0.0, %v890
      %v892 = vpop.f32.mrf.mxu0
      %v893 = vadd.f32 0.0, %v892
      %894 = vmatmul.bf16.gmra.mxu0 %v873
      %v895 = vpop.f32.mrf.mxu0
      %v896 = vadd.f32 0.0, %v895
      %v897 = vpop.f32.mrf.mxu0
      %898 = vdwg.mxu0
      %v899 = vsel %vm752, %v891, -1e+30
      %v900 = vsel %vm752, %v893, -1e+30
      %v901 = vsel %vm752, %v896, -1e+30
      %v902 = vsel %vm791, %v899, -inf
      %903 = vmax.xlane.f32.xlu0 %v902
      %v904 = vpop.xlane.xlu0 %903
      %v905 = vsel %vm791, %v900, -inf
      %906 = vmax.xlane.f32.xlu0 %v905
      %v907 = vpop.xlane.xlu0 %906
      %v908 = vsel %vm791, %v901, -inf
      %909 = vmax.xlane.f32.xlu0 %v908
      %v910 = vpop.xlane.xlu0 %909
      %v911 = vsub.f32 %v899, %v904
      %v912 = vsub.f32 %v900, %v907
      %v913 = vsub.f32 %v901, %v910
      %v914 = vmul.f32 %v911, 1.442695
      %v915 = vpow.pop %v914
      %v916 = vmul.f32 %v912, 1.442695
      %v917 = vpow.pop %v916
      %v918 = vmul.f32 %v913, 1.442695
      %v919 = vpow.pop %v918
      %v920 = vsel %vm791, %v915, 0.0
      %921 = vadd.xlane.f32.xlu0 %v920
      %v922 = vpop.xlane.xlu0 %921
      %v923 = vsel %vm791, %v917, 0.0
      %924 = vadd.xlane.f32.xlu0 %v923
      %v925 = vpop.xlane.xlu0 %924
      %v926 = vsel %vm791, %v919, 0.0
      %927 = vadd.xlane.f32.xlu0 %v926
      %v928 = vpop.xlane.xlu0 %927
      %v929 = vpack.c.bf16 %v917, %v915
      %v930 = vpack.c.bf16 %v919, %v919
      %933 = vrot.lane.b32.xlu0 %v821, 96
      %v934 = vpop.permute.xlu0 %933
      %935 = vrot.lane.b32.xlu0 %v822, 96
      %v936 = vpop.permute.xlu0 %935
      %v939 = vsel %vm791, %v929, 0
      %v942 = vsel %vm791, %v930, 0
      %v945 = vsel %vm829, %v936, 0
      %947 = vmatpush.bf16.msra.mxu0 0
      %948 = vmatpush.bf16.msra.mxu0 0
      %949 = vmatpush.bf16.msra.mxu0 0
      %950 = vmatpush.bf16.msra.mxu0 0
      %951 = vmatpush.bf16.msra.mxu0 0
      %952 = vmatpush.bf16.msra.mxu0 0
      %953 = vmatpush.bf16.msra.mxu0 %v945
      %954 = vmatpush.bf16.msra.mxu0 %v934
      %955 = vmatmul.bf16.gmra.mxu0 %v939
      %v956 = vpop.f32.mrf.mxu0
      %v957 = vadd.f32 0.0, %v956
      %v958 = vpop.f32.mrf.mxu0
      %v959 = vadd.f32 0.0, %v958
      %960 = vmatmul.bf16.gmra.mxu0 %v942
      %v961 = vpop.f32.mrf.mxu0
      %v962 = vadd.f32 0.0, %v961
      %v963 = vpop.f32.mrf.mxu0
      %964 = vdwg.mxu0
      %v965 = vrcp.pop %v922
      %v966 = vrcp.pop %v925
      %v967 = vrcp.pop %v928
      %v968 = vmul.f32 %v957, %v965
      %v969 = vmul.f32 %v959, %v966
      %v970 = vmul.f32 %v962, %v967
      %971 = vrot.lane.b32.xlu0 %v753, 64
      %v972 = vpop.permute.xlu0 %971
      %973 = vrot.lane.b32.xlu0 %v754, 64
      %v974 = vpop.permute.xlu0 %973
      %975 = vrot.lane.b32.xlu0 %v755, 64
      %v976 = vpop.permute.xlu0 %975
      %977 = vrot.lane.b32.xlu0 %v756, 64
      %v978 = vpop.permute.xlu0 %977
      %v980 = vsel %vm757, %v972, 0
      %v983 = vsel %vm757, %v974, 0
      %v986 = vsel %vm757, %v976, 0
      %v989 = vsel %vm757, %v978, 0
      %991 = vmatpush.bf16.xpose.msra.mxu0 0
      %992 = vmatpush.bf16.xpose.msra.mxu0 0
      %993 = vmatpush.bf16.xpose.msra.mxu0 0
      %994 = vmatpush.bf16.xpose.msra.mxu0 0
      %995 = vmatpush.bf16.xpose.msra.mxu0 0
      %996 = vmatpush.bf16.xpose.msra.mxu0 0
      %997 = vmatpush.bf16.xpose.msra.mxu0 %v989
      %998 = vmatpush.bf16.xpose.msra.mxu0 %v986
      %999 = vmatmul.bf16.gmra.mxu0 %v980
      %v1000 = vpop.f32.mrf.mxu0
      %v1001 = vadd.f32 0.0, %v1000
      %v1002 = vpop.f32.mrf.mxu0
      %v1003 = vadd.f32 0.0, %v1002
      %1004 = vmatmul.bf16.gmra.mxu0 %v983
      %v1005 = vpop.f32.mrf.mxu0
      %v1006 = vadd.f32 0.0, %v1005
      %v1007 = vpop.f32.mrf.mxu0
      %1008 = vdwg.mxu0
      %v1009 = vsel %vm752, %v1001, -1e+30
      %v1010 = vsel %vm752, %v1003, -1e+30
      %v1011 = vsel %vm752, %v1006, -1e+30
      %v1012 = vsel %vm791, %v1009, -inf
      %1013 = vmax.xlane.f32.xlu0 %v1012
      %v1014 = vpop.xlane.xlu0 %1013
      %v1015 = vsel %vm791, %v1010, -inf
      %1016 = vmax.xlane.f32.xlu0 %v1015
      %v1017 = vpop.xlane.xlu0 %1016
      %v1018 = vsel %vm791, %v1011, -inf
      %1019 = vmax.xlane.f32.xlu0 %v1018
      %v1020 = vpop.xlane.xlu0 %1019
      %v1021 = vsub.f32 %v1009, %v1014
      %v1022 = vsub.f32 %v1010, %v1017
      %v1023 = vsub.f32 %v1011, %v1020
      %v1024 = vmul.f32 %v1021, 1.442695
      %v1025 = vpow.pop %v1024
      %v1026 = vmul.f32 %v1022, 1.442695
      %v1027 = vpow.pop %v1026
      %v1028 = vmul.f32 %v1023, 1.442695
      %v1029 = vpow.pop %v1028
      %v1030 = vsel %vm791, %v1025, 0.0
      %1031 = vadd.xlane.f32.xlu0 %v1030
      %v1032 = vpop.xlane.xlu0 %1031
      %v1033 = vsel %vm791, %v1027, 0.0
      %1034 = vadd.xlane.f32.xlu0 %v1033
      %v1035 = vpop.xlane.xlu0 %1034
      %v1036 = vsel %vm791, %v1029, 0.0
      %1037 = vadd.xlane.f32.xlu0 %v1036
      %v1038 = vpop.xlane.xlu0 %1037
      %v1039 = vpack.c.bf16 %v1027, %v1025
      %v1040 = vpack.c.bf16 %v1029, %v1029
      %1041 = vrot.lane.b32.xlu0 %v821, 64
      %v1042 = vpop.permute.xlu0 %1041
      %1043 = vrot.lane.b32.xlu0 %v822, 64
      %v1044 = vpop.permute.xlu0 %1043
      %v1047 = vsel %vm791, %v1039, 0
      %v1050 = vsel %vm791, %v1040, 0
      %v1053 = vsel %vm829, %v1044, 0
      %1055 = vmatpush.bf16.msra.mxu0 0
      %1056 = vmatpush.bf16.msra.mxu0 0
      %1057 = vmatpush.bf16.msra.mxu0 0
      %1058 = vmatpush.bf16.msra.mxu0 0
      %1059 = vmatpush.bf16.msra.mxu0 0
      %1060 = vmatpush.bf16.msra.mxu0 0
      %1061 = vmatpush.bf16.msra.mxu0 %v1053
      %1062 = vmatpush.bf16.msra.mxu0 %v1042
      %1063 = vmatmul.bf16.gmra.mxu0 %v1047
      %v1064 = vpop.f32.mrf.mxu0
      %v1065 = vadd.f32 0.0, %v1064
      %v1066 = vpop.f32.mrf.mxu0
      %v1067 = vadd.f32 0.0, %v1066
      %1068 = vmatmul.bf16.gmra.mxu0 %v1050
      %v1069 = vpop.f32.mrf.mxu0
      %v1070 = vadd.f32 0.0, %v1069
      %v1071 = vpop.f32.mrf.mxu0
      %1072 = vdwg.mxu0
      %v1073 = vrcp.pop %v1032
      %v1074 = vrcp.pop %v1035
      %v1075 = vrcp.pop %v1038
      %v1076 = vmul.f32 %v1065, %v1073
      %v1077 = vmul.f32 %v1067, %v1074
      %v1078 = vmul.f32 %v1070, %v1075
      %1079 = vrot.lane.b32.xlu0 %v753, 32
      %v1080 = vpop.permute.xlu0 %1079
      %1081 = vrot.lane.b32.xlu0 %v754, 32
      %v1082 = vpop.permute.xlu0 %1081
      %1083 = vrot.lane.b32.xlu0 %v755, 32
      %v1084 = vpop.permute.xlu0 %1083
      %1085 = vrot.lane.b32.xlu0 %v756, 32
      %v1086 = vpop.permute.xlu0 %1085
      %v1088 = vsel %vm757, %v1080, 0
      %v1091 = vsel %vm757, %v1082, 0
      %v1094 = vsel %vm757, %v1084, 0
      %v1097 = vsel %vm757, %v1086, 0
      %1099 = vmatpush.bf16.xpose.msra.mxu0 0
      %1100 = vmatpush.bf16.xpose.msra.mxu0 0
      %1101 = vmatpush.bf16.xpose.msra.mxu0 0
      %1102 = vmatpush.bf16.xpose.msra.mxu0 0
      %1103 = vmatpush.bf16.xpose.msra.mxu0 0
      %1104 = vmatpush.bf16.xpose.msra.mxu0 0
      %1105 = vmatpush.bf16.xpose.msra.mxu0 %v1097
      %1106 = vmatpush.bf16.xpose.msra.mxu0 %v1094
      %1107 = vmatmul.bf16.gmra.mxu0 %v1088
      %v1108 = vpop.f32.mrf.mxu0
      %v1109 = vadd.f32 0.0, %v1108
      %v1110 = vpop.f32.mrf.mxu0
      %v1111 = vadd.f32 0.0, %v1110
      %1112 = vmatmul.bf16.gmra.mxu0 %v1091
      %v1113 = vpop.f32.mrf.mxu0
      %v1114 = vadd.f32 0.0, %v1113
      %v1115 = vpop.f32.mrf.mxu0
      %1116 = vdwg.mxu0
      %v1117 = vsel %vm752, %v1109, -1e+30
      %v1118 = vsel %vm752, %v1111, -1e+30
      %v1119 = vsel %vm752, %v1114, -1e+30
      %v1120 = vsel %vm791, %v1117, -inf
      %1121 = vmax.xlane.f32.xlu0 %v1120
      %v1122 = vpop.xlane.xlu0 %1121
      %v1123 = vsel %vm791, %v1118, -inf
      %1124 = vmax.xlane.f32.xlu0 %v1123
      %v1125 = vpop.xlane.xlu0 %1124
      %v1126 = vsel %vm791, %v1119, -inf
      %1127 = vmax.xlane.f32.xlu0 %v1126
      %v1128 = vpop.xlane.xlu0 %1127
      %v1129 = vsub.f32 %v1117, %v1122
      %v1130 = vsub.f32 %v1118, %v1125
      %v1131 = vsub.f32 %v1119, %v1128
      %v1132 = vmul.f32 %v1129, 1.442695
      %v1133 = vpow.pop %v1132
      %v1134 = vmul.f32 %v1130, 1.442695
      %v1135 = vpow.pop %v1134
      %v1136 = vmul.f32 %v1131, 1.442695
      %v1137 = vpow.pop %v1136
      %v1138 = vsel %vm791, %v1133, 0.0
      %1139 = vadd.xlane.f32.xlu0 %v1138
      %v1140 = vpop.xlane.xlu0 %1139
      %v1141 = vsel %vm791, %v1135, 0.0
      %1142 = vadd.xlane.f32.xlu0 %v1141
      %v1143 = vpop.xlane.xlu0 %1142
      %v1144 = vsel %vm791, %v1137, 0.0
      %1145 = vadd.xlane.f32.xlu0 %v1144
      %v1146 = vpop.xlane.xlu0 %1145
      %v1147 = vpack.c.bf16 %v1135, %v1133
      %v1148 = vpack.c.bf16 %v1137, %v1137
      %1149 = vrot.lane.b32.xlu0 %v821, 32
      %v1150 = vpop.permute.xlu0 %1149
      %1151 = vrot.lane.b32.xlu0 %v822, 32
      %v1152 = vpop.permute.xlu0 %1151
      %v1155 = vsel %vm791, %v1147, 0
      %v1158 = vsel %vm791, %v1148, 0
      %v1161 = vsel %vm829, %v1152, 0
      %1163 = vmatpush.bf16.msra.mxu0 0
      %1164 = vmatpush.bf16.msra.mxu0 0
      %1165 = vmatpush.bf16.msra.mxu0 0
      %1166 = vmatpush.bf16.msra.mxu0 0
      %1167 = vmatpush.bf16.msra.mxu0 0
      %1168 = vmatpush.bf16.msra.mxu0 0
      %1169 = vmatpush.bf16.msra.mxu0 %v1161
      %1170 = vmatpush.bf16.msra.mxu0 %v1150
      %1171 = vmatmul.bf16.gmra.mxu0 %v1155
      %v1172 = vpop.f32.mrf.mxu0
      %v1173 = vadd.f32 0.0, %v1172
      %v1174 = vpop.f32.mrf.mxu0
      %v1175 = vadd.f32 0.0, %v1174
      %1176 = vmatmul.bf16.gmra.mxu0 %v1158
      %v1177 = vpop.f32.mrf.mxu0
      %v1178 = vadd.f32 0.0, %v1177
      %v1179 = vpop.f32.mrf.mxu0
      %1180 = vdwg.mxu0
      %v1181 = vrcp.pop %v1140
      %v1182 = vrcp.pop %v1143
      %v1183 = vrcp.pop %v1146
      %v1184 = vmul.f32 %v1173, %v1181
      %v1185 = vmul.f32 %v1175, %v1182
      %v1186 = vmul.f32 %v1178, %v1183
      %1190 = vrot.lane.b32.xlu0 %v968, 32
      %v1191 = vpop.permute.xlu0 %1190
      %1192 = vrot.lane.b32.xlu0 %v969, 32
      %v1193 = vpop.permute.xlu0 %1192
      %1194 = vrot.lane.b32.xlu0 %v970, 32
      %v1195 = vpop.permute.xlu0 %1194
      %1202 = vrot.lane.b32.xlu0 %v1076, 64
      %v1203 = vpop.permute.xlu0 %1202
      %1204 = vrot.lane.b32.xlu0 %v1077, 64
      %v1205 = vpop.permute.xlu0 %1204
      %1206 = vrot.lane.b32.xlu0 %v1078, 64
      %v1207 = vpop.permute.xlu0 %1206
      %1214 = vrot.lane.b32.xlu0 %v1184, 96
      %v1215 = vpop.permute.xlu0 %1214
      %1216 = vrot.lane.b32.xlu0 %v1185, 96
      %v1217 = vpop.permute.xlu0 %1216
      %1218 = vrot.lane.b32.xlu0 %v1186, 96
      %v1219 = vpop.permute.xlu0 %1218
      %v1223 = vsel %vm757, %v854, %v1191
      %v1224 = vsel %vm757, %v855, %v1193
      %v1225 = vsel %vm757, %v856, %v1195
      %vm1226 = vcmask 523264
      %v1227 = vsel %vm1226, %v1223, %v1203
      %v1228 = vsel %vm1226, %v1224, %v1205
      %v1229 = vsel %vm1226, %v1225, %v1207
      %vm1230 = vcmask 785408
      %v1231 = vsel %vm1230, %v1227, %v1215
      %v1232 = vsel %vm1230, %v1228, %v1217
      %v1233 = vsel %vm1230, %v1229, %v1219
      %v1234 = vpack.c.bf16 %v1232, %v1231
      %v1235 = vpack.c.bf16 %v1233, %v1233
      %v1236 = vld [vmem:[%s5] sm:$0xf]
      %v1237 = vld [vmem:[%s5 + $0x4] sm:$0xf]
      %v1238 = vld [vmem:[%s5 + $0x8] sm:$0xf]
      %v1239 = vld [vmem:[%s5 + $0xc] sm:$0xf]
      %v1240 = vld [vmem:[%s5 + $0x10] sm:$0xf]
      %v1241 = vld [vmem:[%s5 + $0x14] sm:$0xf]
      %v1242 = vld [vmem:[%s5 + $0x18] sm:$0xf]
      %v1243 = vld [vmem:[%s5 + $0x1c] sm:$0xf]
      %v1244 = vld [vmem:[%s5 + $0x20] sm:$0xf]
      %v1245 = vld [vmem:[%s5 + $0x24] sm:$0xf]
      %v1246 = vld [vmem:[%s5 + $0x28] sm:$0xf]
      %v1247 = vld [vmem:[%s5 + $0x2c] sm:$0xf]
      %v1248 = vld [vmem:[%s5 + $0x30] sm:$0xf]
      %v1249 = vld [vmem:[%s5 + $0x34] sm:$0xf]
      %v1250 = vld [vmem:[%s5 + $0x38] sm:$0xf]
      %v1251 = vld [vmem:[%s5 + $0x3c] sm:$0xf]
      %v1268 = vunpack.c.l.b16 %v1236
      %v1269 = vunpack.c.l.b16 %v1237
      %v1270 = vunpack.c.l.b16 %v1238
      %v1271 = vunpack.c.l.b16 %v1239
      %v1272 = vunpack.c.l.b16 %v1240
      %v1273 = vunpack.c.l.b16 %v1241
      %v1274 = vunpack.c.l.b16 %v1242
      %v1275 = vunpack.c.l.b16 %v1243
      %v1276 = vunpack.c.l.b16 %v1244
      %v1277 = vunpack.c.l.b16 %v1245
      %v1278 = vunpack.c.l.b16 %v1246
      %v1279 = vunpack.c.l.b16 %v1247
      %v1280 = vunpack.c.l.b16 %v1248
      %v1281 = vunpack.c.l.b16 %v1249
      %v1282 = vunpack.c.l.b16 %v1250
      %v1283 = vunpack.c.l.b16 %v1251
      %v1284 = vpack.c.b16 %v1269, %v1268
      %v1285 = vpack.c.b16 %v1271, %v1270
      %v1286 = vpack.c.b16 %v1273, %v1272
      %v1287 = vpack.c.b16 %v1275, %v1274
      %v1288 = vpack.c.b16 %v1277, %v1276
      %v1289 = vpack.c.b16 %v1279, %v1278
      %v1290 = vpack.c.b16 %v1281, %v1280
      %v1291 = vpack.c.b16 %v1283, %v1282
      %1300 = vmatpush.bf16.msra.mxu0 %v1291
      %1301 = vmatpush.bf16.msra.mxu0 %v1290
      %1302 = vmatpush.bf16.msra.mxu0 %v1289
      %1303 = vmatpush.bf16.msra.mxu0 %v1288
      %1304 = vmatpush.bf16.msra.mxu0 %v1287
      %1305 = vmatpush.bf16.msra.mxu0 %v1286
      %1306 = vmatpush.bf16.msra.mxu0 %v1285
      %1307 = vmatpush.bf16.msra.mxu0 %v1284
      %1308 = vmatmul.bf16.gmra.mxu0 %v1234
      %v1309 = vpop.f32.mrf.mxu0
      %v1310 = vadd.f32 0.0, %v1309
      %v1311 = vpop.f32.mrf.mxu0
      %v1312 = vadd.f32 0.0, %v1311
      %1313 = vmatmul.bf16.gmra.mxu0 %v1235
      %v1314 = vpop.f32.mrf.mxu0
      %v1315 = vadd.f32 0.0, %v1314
      %v1316 = vpop.f32.mrf.mxu0
      %1317 = vdwg.mxu0
      %v1318 = vadd.f32 %v442, %v1310
      %v1319 = vadd.f32 %v443, %v1312
      %v1320 = vadd.f32 %v444, %v1315
      %v1321 = vld [vmem:[%s6] sm:$0x1]
      %v1323 = vperm.slane %v1321, 0
      %v1325 = vadd.f32 %v1318, %v1323
      %v1326 = vadd.f32 %v1319, %v1323
      %v1327 = vadd.f32 %v1320, %v1323
      %v1328 = vld [vmem:[%s7] sm:$0x1]
      %v1329 = vld [vmem:[%s8] sm:$0x1]
      %1330 = vadd.xlane.f32.xlu0 %v1325
      %v1331 = vpop.xlane.xlu0 %1330
      %1332 = vadd.xlane.f32.xlu0 %v1326
      %v1333 = vpop.xlane.xlu0 %1332
      %1334 = vadd.xlane.f32.xlu0 %v1327
      %v1335 = vpop.xlane.xlu0 %1334
      %v1336 = vmul.f32 %v1331, %v459
      %v1337 = vmul.f32 %v1333, %v459
      %v1338 = vmul.f32 %v1335, %v459
      %v1339 = vsub.f32 %v1325, %v1336
      %v1340 = vsub.f32 %v1326, %v1337
      %v1341 = vsub.f32 %v1327, %v1338
      %v1342 = vmul.f32 %v1339, %v1339
      %v1343 = vmul.f32 %v1340, %v1340
      %v1344 = vmul.f32 %v1341, %v1341
      %1345 = vadd.xlane.f32.xlu0 %v1342
      %v1346 = vpop.xlane.xlu0 %1345
      %1347 = vadd.xlane.f32.xlu0 %v1343
      %v1348 = vpop.xlane.xlu0 %1347
      %1349 = vadd.xlane.f32.xlu0 %v1344
      %v1350 = vpop.xlane.xlu0 %1349
      %v1351 = vmul.f32 %v1346, %v459
      %v1352 = vmul.f32 %v1348, %v459
      %v1353 = vmul.f32 %v1350, %v459
      %v1354 = vadd.f32 %v1351, 1e-05
      %v1355 = vadd.f32 %v1352, 1e-05
      %v1356 = vadd.f32 %v1353, 1e-05
      %v1357 = vrsqrt.pop %v1354
      %v1358 = vmul.f32 %v1357, %v1354
      %v1359 = vmul.f32 %v1358, %v1357
      %v1360 = vmul.f32 0.5, %v1359
      %v1361 = vsub.f32 1.5, %v1360
      %v1362 = vmul.f32 %v1357, %v1361
      %vm1363 = vweird.f32 %v1354
      %vm1364 = vweird.f32 %v1357
      %vm1365 = vmor %vm1363, %vm1364
      %v1366 = vsel %vm1365, %v1357, %v1362
      %v1367 = vrsqrt.pop %v1355
      %v1368 = vmul.f32 %v1367, %v1355
      %v1369 = vmul.f32 %v1368, %v1367
      %v1370 = vmul.f32 0.5, %v1369
      %v1371 = vsub.f32 1.5, %v1370
      %v1372 = vmul.f32 %v1367, %v1371
      %vm1373 = vweird.f32 %v1355
      %vm1374 = vweird.f32 %v1367
      %vm1375 = vmor %vm1373, %vm1374
      %v1376 = vsel %vm1375, %v1367, %v1372
      %v1377 = vrsqrt.pop %v1356
      %v1378 = vmul.f32 %v1377, %v1356
      %v1379 = vmul.f32 %v1378, %v1377
      %v1380 = vmul.f32 0.5, %v1379
      %v1381 = vsub.f32 1.5, %v1380
      %v1382 = vmul.f32 %v1377, %v1381
      %vm1383 = vweird.f32 %v1356
      %vm1384 = vweird.f32 %v1377
      %vm1385 = vmor %vm1383, %vm1384
      %v1386 = vsel %vm1385, %v1377, %v1382
      %v1387 = vmul.f32 %v1339, %v1366
      %v1388 = vmul.f32 %v1340, %v1376
      %v1389 = vmul.f32 %v1341, %v1386
      %v1391 = vperm.slane %v1328, 0
      %v1393 = vmul.f32 %v1387, %v1391
      %v1394 = vmul.f32 %v1388, %v1391
      %v1395 = vmul.f32 %v1389, %v1391
      %v1397 = vperm.slane %v1329, 0
      %v1399 = vadd.f32 %v1393, %v1397
      %v1400 = vadd.f32 %v1394, %v1397
      %v1401 = vadd.f32 %v1395, %v1397
      %v1402 = vpack.c.bf16 %v1400, %v1399
      %v1403 = vpack.c.bf16 %v1401, %v1401
      %v1404 = vld [vmem:[%s9] sm:$0xff]
      %v1405 = vld [vmem:[%s9 + $0x8] sm:$0xff]
      %v1406 = vld [vmem:[%s9 + $0x10] sm:$0xff]
      %v1407 = vld [vmem:[%s9 + $0x18] sm:$0xff]
      %v1408 = vld [vmem:[%s9 + $0x20] sm:$0xff]
      %v1409 = vld [vmem:[%s9 + $0x28] sm:$0xff]
      %v1410 = vld [vmem:[%s9 + $0x30] sm:$0xff]
      %v1411 = vld [vmem:[%s9 + $0x38] sm:$0xff]
      %v1412 = vld [vmem:[%s9 + $0x40] sm:$0xff]
      %v1413 = vld [vmem:[%s9 + $0x48] sm:$0xff]
      %v1414 = vld [vmem:[%s9 + $0x50] sm:$0xff]
      %v1415 = vld [vmem:[%s9 + $0x58] sm:$0xff]
      %v1416 = vld [vmem:[%s9 + $0x60] sm:$0xff]
      %v1417 = vld [vmem:[%s9 + $0x68] sm:$0xff]
      %v1418 = vld [vmem:[%s9 + $0x70] sm:$0xff]
      %v1419 = vld [vmem:[%s9 + $0x78] sm:$0xff]
      %v1420 = vld [vmem:[%s9 + $0x80] sm:$0xff]
      %v1421 = vld [vmem:[%s9 + $0x88] sm:$0xff]
      %v1422 = vld [vmem:[%s9 + $0x90] sm:$0xff]
      %v1423 = vld [vmem:[%s9 + $0x98] sm:$0xff]
      %v1424 = vld [vmem:[%s9 + $0xa0] sm:$0xff]
      %v1425 = vld [vmem:[%s9 + $0xa8] sm:$0xff]
      %v1426 = vld [vmem:[%s9 + $0xb0] sm:$0xff]
      %v1427 = vld [vmem:[%s9 + $0xb8] sm:$0xff]
      %v1428 = vld [vmem:[%s9 + $0xc0] sm:$0xff]
      %v1429 = vld [vmem:[%s9 + $0xc8] sm:$0xff]
      %v1430 = vld [vmem:[%s9 + $0xd0] sm:$0xff]
      %v1431 = vld [vmem:[%s9 + $0xd8] sm:$0xff]
      %v1432 = vld [vmem:[%s9 + $0xe0] sm:$0xff]
      %v1433 = vld [vmem:[%s9 + $0xe8] sm:$0xff]
      %v1434 = vld [vmem:[%s9 + $0xf0] sm:$0xff]
      %v1435 = vld [vmem:[%s9 + $0xf8] sm:$0xff]
      %v1436 = vld [vmem:[%s10] sm:$0xf]
      %v1438 = vperm.slane %v1436, 0
      %v1439 = vperm.slane %v1436, 1
      %v1440 = vperm.slane %v1436, 2
      %v1441 = vperm.slane %v1436, 3
      %v1478 = vunpack.c.l.b16 %v1404
      %v1479 = vunpack.c.h.b16 %v1404
      %v1480 = vunpack.c.l.b16 %v1405
      %v1481 = vunpack.c.h.b16 %v1405
      %v1482 = vunpack.c.l.b16 %v1406
      %v1483 = vunpack.c.h.b16 %v1406
      %v1484 = vunpack.c.l.b16 %v1407
      %v1485 = vunpack.c.h.b16 %v1407
      %v1486 = vunpack.c.l.b16 %v1408
      %v1487 = vunpack.c.h.b16 %v1408
      %v1488 = vunpack.c.l.b16 %v1409
      %v1489 = vunpack.c.h.b16 %v1409
      %v1490 = vunpack.c.l.b16 %v1410
      %v1491 = vunpack.c.h.b16 %v1410
      %v1492 = vunpack.c.l.b16 %v1411
      %v1493 = vunpack.c.h.b16 %v1411
      %v1494 = vunpack.c.l.b16 %v1412
      %v1495 = vunpack.c.h.b16 %v1412
      %v1496 = vunpack.c.l.b16 %v1413
      %v1497 = vunpack.c.h.b16 %v1413
      %v1498 = vunpack.c.l.b16 %v1414
      %v1499 = vunpack.c.h.b16 %v1414
      %v1500 = vunpack.c.l.b16 %v1415
      %v1501 = vunpack.c.h.b16 %v1415
      %v1502 = vunpack.c.l.b16 %v1416
      %v1503 = vunpack.c.h.b16 %v1416
      %v1504 = vunpack.c.l.b16 %v1417
      %v1505 = vunpack.c.h.b16 %v1417
      %v1506 = vunpack.c.l.b16 %v1418
      %v1507 = vunpack.c.h.b16 %v1418
      %v1508 = vunpack.c.l.b16 %v1419
      %v1509 = vunpack.c.h.b16 %v1419
      %v1510 = vunpack.c.l.b16 %v1420
      %v1511 = vunpack.c.h.b16 %v1420
      %v1512 = vunpack.c.l.b16 %v1421
      %v1513 = vunpack.c.h.b16 %v1421
      %v1514 = vunpack.c.l.b16 %v1422
      %v1515 = vunpack.c.h.b16 %v1422
      %v1516 = vunpack.c.l.b16 %v1423
      %v1517 = vunpack.c.h.b16 %v1423
      %v1518 = vunpack.c.l.b16 %v1424
      %v1519 = vunpack.c.h.b16 %v1424
      %v1520 = vunpack.c.l.b16 %v1425
      %v1521 = vunpack.c.h.b16 %v1425
      %v1522 = vunpack.c.l.b16 %v1426
      %v1523 = vunpack.c.h.b16 %v1426
      %v1524 = vunpack.c.l.b16 %v1427
      %v1525 = vunpack.c.h.b16 %v1427
      %v1526 = vunpack.c.l.b16 %v1428
      %v1527 = vunpack.c.h.b16 %v1428
      %v1528 = vunpack.c.l.b16 %v1429
      %v1529 = vunpack.c.h.b16 %v1429
      %v1530 = vunpack.c.l.b16 %v1430
      %v1531 = vunpack.c.h.b16 %v1430
      %v1532 = vunpack.c.l.b16 %v1431
      %v1533 = vunpack.c.h.b16 %v1431
      %v1534 = vunpack.c.l.b16 %v1432
      %v1535 = vunpack.c.h.b16 %v1432
      %v1536 = vunpack.c.l.b16 %v1433
      %v1537 = vunpack.c.h.b16 %v1433
      %v1538 = vunpack.c.l.b16 %v1434
      %v1539 = vunpack.c.h.b16 %v1434
      %v1540 = vunpack.c.l.b16 %v1435
      %v1541 = vunpack.c.h.b16 %v1435
      %v1542 = vpack.c.b16 %v1482, %v1478
      %v1543 = vpack.c.b16 %v1483, %v1479
      %v1544 = vpack.c.b16 %v1484, %v1480
      %v1545 = vpack.c.b16 %v1485, %v1481
      %v1546 = vpack.c.b16 %v1490, %v1486
      %v1547 = vpack.c.b16 %v1491, %v1487
      %v1548 = vpack.c.b16 %v1492, %v1488
      %v1549 = vpack.c.b16 %v1493, %v1489
      %v1550 = vpack.c.b16 %v1498, %v1494
      %v1551 = vpack.c.b16 %v1499, %v1495
      %v1552 = vpack.c.b16 %v1500, %v1496
      %v1553 = vpack.c.b16 %v1501, %v1497
      %v1554 = vpack.c.b16 %v1506, %v1502
      %v1555 = vpack.c.b16 %v1507, %v1503
      %v1556 = vpack.c.b16 %v1508, %v1504
      %v1557 = vpack.c.b16 %v1509, %v1505
      %v1558 = vpack.c.b16 %v1514, %v1510
      %v1559 = vpack.c.b16 %v1515, %v1511
      %v1560 = vpack.c.b16 %v1516, %v1512
      %v1561 = vpack.c.b16 %v1517, %v1513
      %v1562 = vpack.c.b16 %v1522, %v1518
      %v1563 = vpack.c.b16 %v1523, %v1519
      %v1564 = vpack.c.b16 %v1524, %v1520
      %v1565 = vpack.c.b16 %v1525, %v1521
      %v1566 = vpack.c.b16 %v1530, %v1526
      %v1567 = vpack.c.b16 %v1531, %v1527
      %v1568 = vpack.c.b16 %v1532, %v1528
      %v1569 = vpack.c.b16 %v1533, %v1529
      %v1570 = vpack.c.b16 %v1538, %v1534
      %v1571 = vpack.c.b16 %v1539, %v1535
      %v1572 = vpack.c.b16 %v1540, %v1536
      %v1573 = vpack.c.b16 %v1541, %v1537
      %1606 = vmatpush.bf16.msra.mxu0 %v1570
      %1607 = vmatpush.bf16.msra.mxu0 %v1566
      %1608 = vmatpush.bf16.msra.mxu0 %v1562
      %1609 = vmatpush.bf16.msra.mxu0 %v1558
      %1610 = vmatpush.bf16.msra.mxu0 %v1554
      %1611 = vmatpush.bf16.msra.mxu0 %v1550
      %1612 = vmatpush.bf16.msra.mxu0 %v1546
      %1613 = vmatpush.bf16.msra.mxu0 %v1542
      %1614 = vmatmul.bf16.gmra.mxu0 %v1402
      %v1615 = vpop.f32.mrf.mxu0
      %v1616 = vadd.f32 %v1438, %v1615
      %v1617 = vpop.f32.mrf.mxu0
      %v1618 = vadd.f32 %v1438, %v1617
      %1619 = vmatmul.bf16.gmra.mxu0 %v1403
      %v1620 = vpop.f32.mrf.mxu0
      %v1621 = vadd.f32 %v1438, %v1620
      %v1622 = vpop.f32.mrf.mxu0
      %1623 = vdwg.mxu0
      %1624 = vmatpush.bf16.msra.mxu0 %v1571
      %1625 = vmatpush.bf16.msra.mxu0 %v1567
      %1626 = vmatpush.bf16.msra.mxu0 %v1563
      %1627 = vmatpush.bf16.msra.mxu0 %v1559
      %1628 = vmatpush.bf16.msra.mxu0 %v1555
      %1629 = vmatpush.bf16.msra.mxu0 %v1551
      %1630 = vmatpush.bf16.msra.mxu0 %v1547
      %1631 = vmatpush.bf16.msra.mxu0 %v1543
      %1632 = vmatmul.bf16.gmra.mxu0 %v1402
      %v1633 = vpop.f32.mrf.mxu0
      %v1634 = vadd.f32 %v1439, %v1633
      %v1635 = vpop.f32.mrf.mxu0
      %v1636 = vadd.f32 %v1439, %v1635
      %1637 = vmatmul.bf16.gmra.mxu0 %v1403
      %v1638 = vpop.f32.mrf.mxu0
      %v1639 = vadd.f32 %v1439, %v1638
      %v1640 = vpop.f32.mrf.mxu0
      %1641 = vdwg.mxu0
      %1642 = vmatpush.bf16.msra.mxu0 %v1572
      %1643 = vmatpush.bf16.msra.mxu0 %v1568
      %1644 = vmatpush.bf16.msra.mxu0 %v1564
      %1645 = vmatpush.bf16.msra.mxu0 %v1560
      %1646 = vmatpush.bf16.msra.mxu0 %v1556
      %1647 = vmatpush.bf16.msra.mxu0 %v1552
      %1648 = vmatpush.bf16.msra.mxu0 %v1548
      %1649 = vmatpush.bf16.msra.mxu0 %v1544
      %1650 = vmatmul.bf16.gmra.mxu0 %v1402
      %v1651 = vpop.f32.mrf.mxu0
      %v1652 = vadd.f32 %v1440, %v1651
      %v1653 = vpop.f32.mrf.mxu0
      %v1654 = vadd.f32 %v1440, %v1653
      %1655 = vmatmul.bf16.gmra.mxu0 %v1403
      %v1656 = vpop.f32.mrf.mxu0
      %v1657 = vadd.f32 %v1440, %v1656
      %v1658 = vpop.f32.mrf.mxu0
      %1659 = vdwg.mxu0
      %1660 = vmatpush.bf16.msra.mxu0 %v1573
      %1661 = vmatpush.bf16.msra.mxu0 %v1569
      %1662 = vmatpush.bf16.msra.mxu0 %v1565
      %1663 = vmatpush.bf16.msra.mxu0 %v1561
      %1664 = vmatpush.bf16.msra.mxu0 %v1557
      %1665 = vmatpush.bf16.msra.mxu0 %v1553
      %1666 = vmatpush.bf16.msra.mxu0 %v1549
      %1667 = vmatpush.bf16.msra.mxu0 %v1545
      %1668 = vmatmul.bf16.gmra.mxu0 %v1402
      %v1669 = vpop.f32.mrf.mxu0
      %v1670 = vadd.f32 %v1441, %v1669
      %v1671 = vpop.f32.mrf.mxu0
      %v1672 = vadd.f32 %v1441, %v1671
      %1673 = vmatmul.bf16.gmra.mxu0 %v1403
      %v1674 = vpop.f32.mrf.mxu0
      %v1675 = vadd.f32 %v1441, %v1674
      %v1676 = vpop.f32.mrf.mxu0
      %1677 = vdwg.mxu0
      %v1678 = vmul.f32 %v1616, 0.5
      %v1679 = vmul.f32 %v1634, 0.5
      %v1680 = vmul.f32 %v1652, 0.5
      %v1681 = vmul.f32 %v1670, 0.5
      %v1682 = vmul.f32 %v1618, 0.5
      %v1683 = vmul.f32 %v1636, 0.5
      %v1684 = vmul.f32 %v1654, 0.5
      %v1685 = vmul.f32 %v1672, 0.5
      %v1686 = vmul.f32 %v1621, 0.5
      %v1687 = vmul.f32 %v1639, 0.5
      %v1688 = vmul.f32 %v1657, 0.5
      %v1689 = vmul.f32 %v1675, 0.5
      %v1690 = vmul.f32 %v1616, 0.70710677
      %v1691 = vmul.f32 %v1634, 0.70710677
      %v1692 = vmul.f32 %v1652, 0.70710677
      %v1693 = vmul.f32 %v1670, 0.70710677
      %v1694 = vmul.f32 %v1618, 0.70710677
      %v1695 = vmul.f32 %v1636, 0.70710677
      %v1696 = vmul.f32 %v1654, 0.70710677
      %v1697 = vmul.f32 %v1672, 0.70710677
      %v1698 = vmul.f32 %v1621, 0.70710677
      %v1699 = vmul.f32 %v1639, 0.70710677
      %v1700 = vmul.f32 %v1657, 0.70710677
      %v1701 = vmul.f32 %v1675, 0.70710677
      %v1702 = vmax.f32 %v1690, -4.0
      %v1703 = vmax.f32 %v1691, -4.0
      %v1704 = vmax.f32 %v1692, -4.0
      %v1705 = vmax.f32 %v1693, -4.0
      %v1706 = vmax.f32 %v1694, -4.0
      %v1707 = vmax.f32 %v1695, -4.0
      %v1708 = vmax.f32 %v1696, -4.0
      %v1709 = vmax.f32 %v1697, -4.0
      %v1710 = vmax.f32 %v1698, -4.0
      %v1711 = vmax.f32 %v1699, -4.0
      %v1712 = vmax.f32 %v1700, -4.0
      %v1713 = vmax.f32 %v1701, -4.0
      %v1714 = vmin.f32 %v1702, 4.0
      %v1715 = vmin.f32 %v1703, 4.0
      %v1716 = vmin.f32 %v1704, 4.0
      %v1717 = vmin.f32 %v1705, 4.0
      %v1718 = vmin.f32 %v1706, 4.0
      %v1719 = vmin.f32 %v1707, 4.0
      %v1720 = vmin.f32 %v1708, 4.0
      %v1721 = vmin.f32 %v1709, 4.0
      %v1722 = vmin.f32 %v1710, 4.0
      %v1723 = vmin.f32 %v1711, 4.0
      %v1724 = vmin.f32 %v1712, 4.0
      %v1725 = vmin.f32 %v1713, 4.0
      %v1726 = vmul.f32 %v1714, %v1714
      %v1727 = vmul.f32 %v1715, %v1715
      %v1728 = vmul.f32 %v1716, %v1716
      %v1729 = vmul.f32 %v1717, %v1717
      %v1730 = vmul.f32 %v1718, %v1718
      %v1731 = vmul.f32 %v1719, %v1719
      %v1732 = vmul.f32 %v1720, %v1720
      %v1733 = vmul.f32 %v1721, %v1721
      %v1734 = vmul.f32 %v1722, %v1722
      %v1735 = vmul.f32 %v1723, %v1723
      %v1736 = vmul.f32 %v1724, %v1724
      %v1737 = vmul.f32 %v1725, %v1725
      %v1738 = vmul.f32 %v1726, 0.00022905065
      %v1739 = vmul.f32 %v1727, 0.00022905065
      %v1740 = vmul.f32 %v1728, 0.00022905065
      %v1741 = vmul.f32 %v1729, 0.00022905065
      %v1742 = vmul.f32 %v1730, 0.00022905065
      %v1743 = vmul.f32 %v1731, 0.00022905065
      %v1744 = vmul.f32 %v1732, 0.00022905065
      %v1745 = vmul.f32 %v1733, 0.00022905065
      %v1746 = vmul.f32 %v1734, 0.00022905065
      %v1747 = vmul.f32 %v1735, 0.00022905065
      %v1748 = vmul.f32 %v1736, 0.00022905065
      %v1749 = vmul.f32 %v1737, 0.00022905065
      %v1750 = vadd.f32 %v1738, 0.003408291
      %v1751 = vadd.f32 %v1739, 0.003408291
      %v1752 = vadd.f32 %v1740, 0.003408291
      %v1753 = vadd.f32 %v1741, 0.003408291
      %v1754 = vadd.f32 %v1742, 0.003408291
      %v1755 = vadd.f32 %v1743, 0.003408291
      %v1756 = vadd.f32 %v1744, 0.003408291
      %v1757 = vadd.f32 %v1745, 0.003408291
      %v1758 = vadd.f32 %v1746, 0.003408291
      %v1759 = vadd.f32 %v1747, 0.003408291
      %v1760 = vadd.f32 %v1748, 0.003408291
      %v1761 = vadd.f32 %v1749, 0.003408291
      %v1762 = vmul.f32 %v1750, %v1726
      %v1763 = vmul.f32 %v1751, %v1727
      %v1764 = vmul.f32 %v1752, %v1728
      %v1765 = vmul.f32 %v1753, %v1729
      %v1766 = vmul.f32 %v1754, %v1730
      %v1767 = vmul.f32 %v1755, %v1731
      %v1768 = vmul.f32 %v1756, %v1732
      %v1769 = vmul.f32 %v1757, %v1733
      %v1770 = vmul.f32 %v1758, %v1734
      %v1771 = vmul.f32 %v1759, %v1735
      %v1772 = vmul.f32 %v1760, %v1736
      %v1773 = vmul.f32 %v1761, %v1737
      %v1774 = vadd.f32 %v1762, 0.050955694
      %v1775 = vadd.f32 %v1763, 0.050955694
      %v1776 = vadd.f32 %v1764, 0.050955694
      %v1777 = vadd.f32 %v1765, 0.050955694
      %v1778 = vadd.f32 %v1766, 0.050955694
      %v1779 = vadd.f32 %v1767, 0.050955694
      %v1780 = vadd.f32 %v1768, 0.050955694
      %v1781 = vadd.f32 %v1769, 0.050955694
      %v1782 = vadd.f32 %v1770, 0.050955694
      %v1783 = vadd.f32 %v1771, 0.050955694
      %v1784 = vadd.f32 %v1772, 0.050955694
      %v1785 = vadd.f32 %v1773, 0.050955694
      %v1786 = vmul.f32 %v1774, %v1726
      %v1787 = vmul.f32 %v1775, %v1727
      %v1788 = vmul.f32 %v1776, %v1728
      %v1789 = vmul.f32 %v1777, %v1729
      %v1790 = vmul.f32 %v1778, %v1730
      %v1791 = vmul.f32 %v1779, %v1731
      %v1792 = vmul.f32 %v1780, %v1732
      %v1793 = vmul.f32 %v1781, %v1733
      %v1794 = vmul.f32 %v1782, %v1734
      %v1795 = vmul.f32 %v1783, %v1735
      %v1796 = vmul.f32 %v1784, %v1736
      %v1797 = vmul.f32 %v1785, %v1737
      %v1798 = vadd.f32 %v1786, 0.18520832
      %v1799 = vadd.f32 %v1787, 0.18520832
      %v1800 = vadd.f32 %v1788, 0.18520832
      %v1801 = vadd.f32 %v1789, 0.18520832
      %v1802 = vadd.f32 %v1790, 0.18520832
      %v1803 = vadd.f32 %v1791, 0.18520832
      %v1804 = vadd.f32 %v1792, 0.18520832
      %v1805 = vadd.f32 %v1793, 0.18520832
      %v1806 = vadd.f32 %v1794, 0.18520832
      %v1807 = vadd.f32 %v1795, 0.18520832
      %v1808 = vadd.f32 %v1796, 0.18520832
      %v1809 = vadd.f32 %v1797, 0.18520832
      %v1810 = vmul.f32 %v1798, %v1726
      %v1811 = vmul.f32 %v1799, %v1727
      %v1812 = vmul.f32 %v1800, %v1728
      %v1813 = vmul.f32 %v1801, %v1729
      %v1814 = vmul.f32 %v1802, %v1730
      %v1815 = vmul.f32 %v1803, %v1731
      %v1816 = vmul.f32 %v1804, %v1732
      %v1817 = vmul.f32 %v1805, %v1733
      %v1818 = vmul.f32 %v1806, %v1734
      %v1819 = vmul.f32 %v1807, %v1735
      %v1820 = vmul.f32 %v1808, %v1736
      %v1821 = vmul.f32 %v1809, %v1737
      %v1822 = vadd.f32 %v1810, 1.1283791
      %v1823 = vadd.f32 %v1811, 1.1283791
      %v1824 = vadd.f32 %v1812, 1.1283791
      %v1825 = vadd.f32 %v1813, 1.1283791
      %v1826 = vadd.f32 %v1814, 1.1283791
      %v1827 = vadd.f32 %v1815, 1.1283791
      %v1828 = vadd.f32 %v1816, 1.1283791
      %v1829 = vadd.f32 %v1817, 1.1283791
      %v1830 = vadd.f32 %v1818, 1.1283791
      %v1831 = vadd.f32 %v1819, 1.1283791
      %v1832 = vadd.f32 %v1820, 1.1283791
      %v1833 = vadd.f32 %v1821, 1.1283791
      %v1834 = vmul.f32 %v1726, -1.1791603e-07
      %v1835 = vmul.f32 %v1727, -1.1791603e-07
      %v1836 = vmul.f32 %v1728, -1.1791603e-07
      %v1837 = vmul.f32 %v1729, -1.1791603e-07
      %v1838 = vmul.f32 %v1730, -1.1791603e-07
      %v1839 = vmul.f32 %v1731, -1.1791603e-07
      %v1840 = vmul.f32 %v1732, -1.1791603e-07
      %v1841 = vmul.f32 %v1733, -1.1791603e-07
      %v1842 = vmul.f32 %v1734, -1.1791603e-07
      %v1843 = vmul.f32 %v1735, -1.1791603e-07
      %v1844 = vmul.f32 %v1736, -1.1791603e-07
      %v1845 = vmul.f32 %v1737, -1.1791603e-07
      %v1846 = vadd.f32 %v1834, 2.3547966e-05
      %v1847 = vadd.f32 %v1835, 2.3547966e-05
      %v1848 = vadd.f32 %v1836, 2.3547966e-05
      %v1849 = vadd.f32 %v1837, 2.3547966e-05
      %v1850 = vadd.f32 %v1838, 2.3547966e-05
      %v1851 = vadd.f32 %v1839, 2.3547966e-05
      %v1852 = vadd.f32 %v1840, 2.3547966e-05
      %v1853 = vadd.f32 %v1841, 2.3547966e-05
      %v1854 = vadd.f32 %v1842, 2.3547966e-05
      %v1855 = vadd.f32 %v1843, 2.3547966e-05
      %v1856 = vadd.f32 %v1844, 2.3547966e-05
      %v1857 = vadd.f32 %v1845, 2.3547966e-05
      %v1858 = vmul.f32 %v1846, %v1726
      %v1859 = vmul.f32 %v1847, %v1727
      %v1860 = vmul.f32 %v1848, %v1728
      %v1861 = vmul.f32 %v1849, %v1729
      %v1862 = vmul.f32 %v1850, %v1730
      %v1863 = vmul.f32 %v1851, %v1731
      %v1864 = vmul.f32 %v1852, %v1732
      %v1865 = vmul.f32 %v1853, %v1733
      %v1866 = vmul.f32 %v1854, %v1734
      %v1867 = vmul.f32 %v1855, %v1735
      %v1868 = vmul.f32 %v1856, %v1736
      %v1869 = vmul.f32 %v1857, %v1737
      %v1870 = vadd.f32 %v1858, 0.0010179626
      %v1871 = vadd.f32 %v1859, 0.0010179626
      %v1872 = vadd.f32 %v1860, 0.0010179626
      %v1873 = vadd.f32 %v1861, 0.0010179626
      %v1874 = vadd.f32 %v1862, 0.0010179626
      %v1875 = vadd.f32 %v1863, 0.0010179626
      %v1876 = vadd.f32 %v1864, 0.0010179626
      %v1877 = vadd.f32 %v1865, 0.0010179626
      %v1878 = vadd.f32 %v1866, 0.0010179626
      %v1879 = vadd.f32 %v1867, 0.0010179626
      %v1880 = vadd.f32 %v1868, 0.0010179626
      %v1881 = vadd.f32 %v1869, 0.0010179626
      %v1882 = vmul.f32 %v1870, %v1726
      %v1883 = vmul.f32 %v1871, %v1727
      %v1884 = vmul.f32 %v1872, %v1728
      %v1885 = vmul.f32 %v1873, %v1729
      %v1886 = vmul.f32 %v1874, %v1730
      %v1887 = vmul.f32 %v1875, %v1731
      %v1888 = vmul.f32 %v1876, %v1732
      %v1889 = vmul.f32 %v1877, %v1733
      %v1890 = vmul.f32 %v1878, %v1734
      %v1891 = vmul.f32 %v1879, %v1735
      %v1892 = vmul.f32 %v1880, %v1736
      %v1893 = vmul.f32 %v1881, %v1737
      %v1894 = vadd.f32 %v1882, 0.01407047
      %v1895 = vadd.f32 %v1883, 0.01407047
      %v1896 = vadd.f32 %v1884, 0.01407047
      %v1897 = vadd.f32 %v1885, 0.01407047
      %v1898 = vadd.f32 %v1886, 0.01407047
      %v1899 = vadd.f32 %v1887, 0.01407047
      %v1900 = vadd.f32 %v1888, 0.01407047
      %v1901 = vadd.f32 %v1889, 0.01407047
      %v1902 = vadd.f32 %v1890, 0.01407047
      %v1903 = vadd.f32 %v1891, 0.01407047
      %v1904 = vadd.f32 %v1892, 0.01407047
      %v1905 = vadd.f32 %v1893, 0.01407047
      %v1906 = vmul.f32 %v1894, %v1726
      %v1907 = vmul.f32 %v1895, %v1727
      %v1908 = vmul.f32 %v1896, %v1728
      %v1909 = vmul.f32 %v1897, %v1729
      %v1910 = vmul.f32 %v1898, %v1730
      %v1911 = vmul.f32 %v1899, %v1731
      %v1912 = vmul.f32 %v1900, %v1732
      %v1913 = vmul.f32 %v1901, %v1733
      %v1914 = vmul.f32 %v1902, %v1734
      %v1915 = vmul.f32 %v1903, %v1735
      %v1916 = vmul.f32 %v1904, %v1736
      %v1917 = vmul.f32 %v1905, %v1737
      %v1918 = vadd.f32 %v1906, 0.11098505
      %v1919 = vadd.f32 %v1907, 0.11098505
      %v1920 = vadd.f32 %v1908, 0.11098505
      %v1921 = vadd.f32 %v1909, 0.11098505
      %v1922 = vadd.f32 %v1910, 0.11098505
      %v1923 = vadd.f32 %v1911, 0.11098505
      %v1924 = vadd.f32 %v1912, 0.11098505
      %v1925 = vadd.f32 %v1913, 0.11098505
      %v1926 = vadd.f32 %v1914, 0.11098505
      %v1927 = vadd.f32 %v1915, 0.11098505
      %v1928 = vadd.f32 %v1916, 0.11098505
      %v1929 = vadd.f32 %v1917, 0.11098505
      %v1930 = vmul.f32 %v1918, %v1726
      %v1931 = vmul.f32 %v1919, %v1727
      %v1932 = vmul.f32 %v1920, %v1728
      %v1933 = vmul.f32 %v1921, %v1729
      %v1934 = vmul.f32 %v1922, %v1730
      %v1935 = vmul.f32 %v1923, %v1731
      %v1936 = vmul.f32 %v1924, %v1732
      %v1937 = vmul.f32 %v1925, %v1733
      %v1938 = vmul.f32 %v1926, %v1734
      %v1939 = vmul.f32 %v1927, %v1735
      %v1940 = vmul.f32 %v1928, %v1736
      %v1941 = vmul.f32 %v1929, %v1737
      %v1942 = vadd.f32 %v1930, 0.49746925
      %v1943 = vadd.f32 %v1931, 0.49746925
      %v1944 = vadd.f32 %v1932, 0.49746925
      %v1945 = vadd.f32 %v1933, 0.49746925
      %v1946 = vadd.f32 %v1934, 0.49746925
      %v1947 = vadd.f32 %v1935, 0.49746925
      %v1948 = vadd.f32 %v1936, 0.49746925
      %v1949 = vadd.f32 %v1937, 0.49746925
      %v1950 = vadd.f32 %v1938, 0.49746925
      %v1951 = vadd.f32 %v1939, 0.49746925
      %v1952 = vadd.f32 %v1940, 0.49746925
      %v1953 = vadd.f32 %v1941, 0.49746925
      %v1954 = vmul.f32 %v1942, %v1726
      %v1955 = vmul.f32 %v1943, %v1727
      %v1956 = vmul.f32 %v1944, %v1728
      %v1957 = vmul.f32 %v1945, %v1729
      %v1958 = vmul.f32 %v1946, %v1730
      %v1959 = vmul.f32 %v1947, %v1731
      %v1960 = vmul.f32 %v1948, %v1732
      %v1961 = vmul.f32 %v1949, %v1733
      %v1962 = vmul.f32 %v1950, %v1734
      %v1963 = vmul.f32 %v1951, %v1735
      %v1964 = vmul.f32 %v1952, %v1736
      %v1965 = vmul.f32 %v1953, %v1737
      %v1966 = vadd.f32 %v1954, 1.0
      %v1967 = vadd.f32 %v1955, 1.0
      %v1968 = vadd.f32 %v1956, 1.0
      %v1969 = vadd.f32 %v1957, 1.0
      %v1970 = vadd.f32 %v1958, 1.0
      %v1971 = vadd.f32 %v1959, 1.0
      %v1972 = vadd.f32 %v1960, 1.0
      %v1973 = vadd.f32 %v1961, 1.0
      %v1974 = vadd.f32 %v1962, 1.0
      %v1975 = vadd.f32 %v1963, 1.0
      %v1976 = vadd.f32 %v1964, 1.0
      %v1977 = vadd.f32 %v1965, 1.0
      %v1978 = vmul.f32 %v1714, %v1822
      %v1979 = vmul.f32 %v1715, %v1823
      %v1980 = vmul.f32 %v1716, %v1824
      %v1981 = vmul.f32 %v1717, %v1825
      %v1982 = vmul.f32 %v1718, %v1826
      %v1983 = vmul.f32 %v1719, %v1827
      %v1984 = vmul.f32 %v1720, %v1828
      %v1985 = vmul.f32 %v1721, %v1829
      %v1986 = vmul.f32 %v1722, %v1830
      %v1987 = vmul.f32 %v1723, %v1831
      %v1988 = vmul.f32 %v1724, %v1832
      %v1989 = vmul.f32 %v1725, %v1833
      %v1990 = vrcp.pop %v1966
      %v1991 = vmul.f32 %v1966, %v1990
      %v1992 = vsub.f32 1.0, %v1991
      %v1993 = vmul.f32 %v1990, %v1992
      %v1994 = vadd.f32 %v1990, %v1993
      %vm1995 = vweird.f32 %v1966
      %vm1996 = vweird.f32 %v1990
      %vm1997 = vmor %vm1995, %vm1996
      %v1998 = vsel %vm1997, %v1990, %v1994
      %v1999 = vand.u32 2147483647, %v1966
      %vm2000 = vcmp.eq.f32.partialorder %v1999, 8.507059e+37
      %v2001 = vand.u32 %v1966, 2147483648
      %v2002 = vor.u32 1.1754944e-38, %v2001
      %v2003 = vsel %vm2000, %v2002, %v1998
      %v2004 = vrcp.pop %v1967
      %v2005 = vmul.f32 %v1967, %v2004
      %v2006 = vsub.f32 1.0, %v2005
      %v2007 = vmul.f32 %v2004, %v2006
      %v2008 = vadd.f32 %v2004, %v2007
      %vm2009 = vweird.f32 %v1967
      %vm2010 = vweird.f32 %v2004
      %vm2011 = vmor %vm2009, %vm2010
      %v2012 = vsel %vm2011, %v2004, %v2008
      %v2013 = vand.u32 2147483647, %v1967
      %vm2014 = vcmp.eq.f32.partialorder %v2013, 8.507059e+37
      %v2015 = vand.u32 %v1967, 2147483648
      %v2016 = vor.u32 1.1754944e-38, %v2015
      %v2017 = vsel %vm2014, %v2016, %v2012
      %v2018 = vrcp.pop %v1968
      %v2019 = vmul.f32 %v1968, %v2018
      %v2020 = vsub.f32 1.0, %v2019
      %v2021 = vmul.f32 %v2018, %v2020
      %v2022 = vadd.f32 %v2018, %v2021
      %vm2023 = vweird.f32 %v1968
      %vm2024 = vweird.f32 %v2018
      %vm2025 = vmor %vm2023, %vm2024
      %v2026 = vsel %vm2025, %v2018, %v2022
      %v2027 = vand.u32 2147483647, %v1968
      %vm2028 = vcmp.eq.f32.partialorder %v2027, 8.507059e+37
      %v2029 = vand.u32 %v1968, 2147483648
      %v2030 = vor.u32 1.1754944e-38, %v2029
      %v2031 = vsel %vm2028, %v2030, %v2026
      %v2032 = vrcp.pop %v1969
      %v2033 = vmul.f32 %v1969, %v2032
      %v2034 = vsub.f32 1.0, %v2033
      %v2035 = vmul.f32 %v2032, %v2034
      %v2036 = vadd.f32 %v2032, %v2035
      %vm2037 = vweird.f32 %v1969
      %vm2038 = vweird.f32 %v2032
      %vm2039 = vmor %vm2037, %vm2038
      %v2040 = vsel %vm2039, %v2032, %v2036
      %v2041 = vand.u32 2147483647, %v1969
      %vm2042 = vcmp.eq.f32.partialorder %v2041, 8.507059e+37
      %v2043 = vand.u32 %v1969, 2147483648
      %v2044 = vor.u32 1.1754944e-38, %v2043
      %v2045 = vsel %vm2042, %v2044, %v2040
      %v2046 = vrcp.pop %v1970
      %v2047 = vmul.f32 %v1970, %v2046
      %v2048 = vsub.f32 1.0, %v2047
      %v2049 = vmul.f32 %v2046, %v2048
      %v2050 = vadd.f32 %v2046, %v2049
      %vm2051 = vweird.f32 %v1970
      %vm2052 = vweird.f32 %v2046
      %vm2053 = vmor %vm2051, %vm2052
      %v2054 = vsel %vm2053, %v2046, %v2050
      %v2055 = vand.u32 2147483647, %v1970
      %vm2056 = vcmp.eq.f32.partialorder %v2055, 8.507059e+37
      %v2057 = vand.u32 %v1970, 2147483648
      %v2058 = vor.u32 1.1754944e-38, %v2057
      %v2059 = vsel %vm2056, %v2058, %v2054
      %v2060 = vrcp.pop %v1971
      %v2061 = vmul.f32 %v1971, %v2060
      %v2062 = vsub.f32 1.0, %v2061
      %v2063 = vmul.f32 %v2060, %v2062
      %v2064 = vadd.f32 %v2060, %v2063
      %vm2065 = vweird.f32 %v1971
      %vm2066 = vweird.f32 %v2060
      %vm2067 = vmor %vm2065, %vm2066
      %v2068 = vsel %vm2067, %v2060, %v2064
      %v2069 = vand.u32 2147483647, %v1971
      %vm2070 = vcmp.eq.f32.partialorder %v2069, 8.507059e+37
      %v2071 = vand.u32 %v1971, 2147483648
      %v2072 = vor.u32 1.1754944e-38, %v2071
      %v2073 = vsel %vm2070, %v2072, %v2068
      %v2074 = vrcp.pop %v1972
      %v2075 = vmul.f32 %v1972, %v2074
      %v2076 = vsub.f32 1.0, %v2075
      %v2077 = vmul.f32 %v2074, %v2076
      %v2078 = vadd.f32 %v2074, %v2077
      %vm2079 = vweird.f32 %v1972
      %vm2080 = vweird.f32 %v2074
      %vm2081 = vmor %vm2079, %vm2080
      %v2082 = vsel %vm2081, %v2074, %v2078
      %v2083 = vand.u32 2147483647, %v1972
      %vm2084 = vcmp.eq.f32.partialorder %v2083, 8.507059e+37
      %v2085 = vand.u32 %v1972, 2147483648
      %v2086 = vor.u32 1.1754944e-38, %v2085
      %v2087 = vsel %vm2084, %v2086, %v2082
      %v2088 = vrcp.pop %v1973
      %v2089 = vmul.f32 %v1973, %v2088
      %v2090 = vsub.f32 1.0, %v2089
      %v2091 = vmul.f32 %v2088, %v2090
      %v2092 = vadd.f32 %v2088, %v2091
      %vm2093 = vweird.f32 %v1973
      %vm2094 = vweird.f32 %v2088
      %vm2095 = vmor %vm2093, %vm2094
      %v2096 = vsel %vm2095, %v2088, %v2092
      %v2097 = vand.u32 2147483647, %v1973
      %vm2098 = vcmp.eq.f32.partialorder %v2097, 8.507059e+37
      %v2099 = vand.u32 %v1973, 2147483648
      %v2100 = vor.u32 1.1754944e-38, %v2099
      %v2101 = vsel %vm2098, %v2100, %v2096
      %v2102 = vrcp.pop %v1974
      %v2103 = vmul.f32 %v1974, %v2102
      %v2104 = vsub.f32 1.0, %v2103
      %v2105 = vmul.f32 %v2102, %v2104
      %v2106 = vadd.f32 %v2102, %v2105
      %vm2107 = vweird.f32 %v1974
      %vm2108 = vweird.f32 %v2102
      %vm2109 = vmor %vm2107, %vm2108
      %v2110 = vsel %vm2109, %v2102, %v2106
      %v2111 = vand.u32 2147483647, %v1974
      %vm2112 = vcmp.eq.f32.partialorder %v2111, 8.507059e+37
      %v2113 = vand.u32 %v1974, 2147483648
      %v2114 = vor.u32 1.1754944e-38, %v2113
      %v2115 = vsel %vm2112, %v2114, %v2110
      %v2116 = vrcp.pop %v1975
      %v2117 = vmul.f32 %v1975, %v2116
      %v2118 = vsub.f32 1.0, %v2117
      %v2119 = vmul.f32 %v2116, %v2118
      %v2120 = vadd.f32 %v2116, %v2119
      %vm2121 = vweird.f32 %v1975
      %vm2122 = vweird.f32 %v2116
      %vm2123 = vmor %vm2121, %vm2122
      %v2124 = vsel %vm2123, %v2116, %v2120
      %v2125 = vand.u32 2147483647, %v1975
      %vm2126 = vcmp.eq.f32.partialorder %v2125, 8.507059e+37
      %v2127 = vand.u32 %v1975, 2147483648
      %v2128 = vor.u32 1.1754944e-38, %v2127
      %v2129 = vsel %vm2126, %v2128, %v2124
      %v2130 = vrcp.pop %v1976
      %v2131 = vmul.f32 %v1976, %v2130
      %v2132 = vsub.f32 1.0, %v2131
      %v2133 = vmul.f32 %v2130, %v2132
      %v2134 = vadd.f32 %v2130, %v2133
      %vm2135 = vweird.f32 %v1976
      %vm2136 = vweird.f32 %v2130
      %vm2137 = vmor %vm2135, %vm2136
      %v2138 = vsel %vm2137, %v2130, %v2134
      %v2139 = vand.u32 2147483647, %v1976
      %vm2140 = vcmp.eq.f32.partialorder %v2139, 8.507059e+37
      %v2141 = vand.u32 %v1976, 2147483648
      %v2142 = vor.u32 1.1754944e-38, %v2141
      %v2143 = vsel %vm2140, %v2142, %v2138
      %v2144 = vrcp.pop %v1977
      %v2145 = vmul.f32 %v1977, %v2144
      %v2146 = vsub.f32 1.0, %v2145
      %v2147 = vmul.f32 %v2144, %v2146
      %v2148 = vadd.f32 %v2144, %v2147
      %vm2149 = vweird.f32 %v1977
      %vm2150 = vweird.f32 %v2144
      %vm2151 = vmor %vm2149, %vm2150
      %v2152 = vsel %vm2151, %v2144, %v2148
      %v2153 = vand.u32 2147483647, %v1977
      %vm2154 = vcmp.eq.f32.partialorder %v2153, 8.507059e+37
      %v2155 = vand.u32 %v1977, 2147483648
      %v2156 = vor.u32 1.1754944e-38, %v2155
      %v2157 = vsel %vm2154, %v2156, %v2152
      %v2158 = vmul.f32 %v1978, %v2003
      %v2159 = vmul.f32 %v1979, %v2017
      %v2160 = vmul.f32 %v1980, %v2031
      %v2161 = vmul.f32 %v1981, %v2045
      %v2162 = vmul.f32 %v1982, %v2059
      %v2163 = vmul.f32 %v1983, %v2073
      %v2164 = vmul.f32 %v1984, %v2087
      %v2165 = vmul.f32 %v1985, %v2101
      %v2166 = vmul.f32 %v1986, %v2115
      %v2167 = vmul.f32 %v1987, %v2129
      %v2168 = vmul.f32 %v1988, %v2143
      %v2169 = vmul.f32 %v1989, %v2157
      %v2170 = vadd.f32 %v2158, 1.0
      %v2171 = vadd.f32 %v2159, 1.0
      %v2172 = vadd.f32 %v2160, 1.0
      %v2173 = vadd.f32 %v2161, 1.0
      %v2174 = vadd.f32 %v2162, 1.0
      %v2175 = vadd.f32 %v2163, 1.0
      %v2176 = vadd.f32 %v2164, 1.0
      %v2177 = vadd.f32 %v2165, 1.0
      %v2178 = vadd.f32 %v2166, 1.0
      %v2179 = vadd.f32 %v2167, 1.0
      %v2180 = vadd.f32 %v2168, 1.0
      %v2181 = vadd.f32 %v2169, 1.0
      %v2182 = vmul.f32 %v1678, %v2170
      %v2183 = vmul.f32 %v1679, %v2171
      %v2184 = vmul.f32 %v1680, %v2172
      %v2185 = vmul.f32 %v1681, %v2173
      %v2186 = vmul.f32 %v1682, %v2174
      %v2187 = vmul.f32 %v1683, %v2175
      %v2188 = vmul.f32 %v1684, %v2176
      %v2189 = vmul.f32 %v1685, %v2177
      %v2190 = vmul.f32 %v1686, %v2178
      %v2191 = vmul.f32 %v1687, %v2179
      %v2192 = vmul.f32 %v1688, %v2180
      %v2193 = vmul.f32 %v1689, %v2181
      %v2194 = vpack.c.bf16 %v2186, %v2182
      %v2195 = vpack.c.bf16 %v2187, %v2183
      %v2196 = vpack.c.bf16 %v2188, %v2184
      %v2197 = vpack.c.bf16 %v2189, %v2185
      %v2198 = vpack.c.bf16 %v2190, %v2190
      %v2199 = vpack.c.bf16 %v2191, %v2191
      %v2200 = vpack.c.bf16 %v2192, %v2192
      %v2201 = vpack.c.bf16 %v2193, %v2193
      %v2202 = vld [vmem:[%s11] sm:$0xf]
      %v2203 = vld [vmem:[%s11 + $0x4] sm:$0xf]
      %v2204 = vld [vmem:[%s11 + $0x8] sm:$0xf]
      %v2205 = vld [vmem:[%s11 + $0xc] sm:$0xf]
      %v2206 = vld [vmem:[%s11 + $0x10] sm:$0xf]
      %v2207 = vld [vmem:[%s11 + $0x14] sm:$0xf]
      %v2208 = vld [vmem:[%s11 + $0x18] sm:$0xf]
      %v2209 = vld [vmem:[%s11 + $0x1c] sm:$0xf]
      %v2210 = vld [vmem:[%s11 + $0x20] sm:$0xf]
      %v2211 = vld [vmem:[%s11 + $0x24] sm:$0xf]
      %v2212 = vld [vmem:[%s11 + $0x28] sm:$0xf]
      %v2213 = vld [vmem:[%s11 + $0x2c] sm:$0xf]
      %v2214 = vld [vmem:[%s11 + $0x30] sm:$0xf]
      %v2215 = vld [vmem:[%s11 + $0x34] sm:$0xf]
      %v2216 = vld [vmem:[%s11 + $0x38] sm:$0xf]
      %v2217 = vld [vmem:[%s11 + $0x3c] sm:$0xf]
      %v2218 = vld [vmem:[%s11 + $0x40] sm:$0xf]
      %v2219 = vld [vmem:[%s11 + $0x44] sm:$0xf]
      %v2220 = vld [vmem:[%s11 + $0x48] sm:$0xf]
      %v2221 = vld [vmem:[%s11 + $0x4c] sm:$0xf]
      %v2222 = vld [vmem:[%s11 + $0x50] sm:$0xf]
      %v2223 = vld [vmem:[%s11 + $0x54] sm:$0xf]
      %v2224 = vld [vmem:[%s11 + $0x58] sm:$0xf]
      %v2225 = vld [vmem:[%s11 + $0x5c] sm:$0xf]
      %v2226 = vld [vmem:[%s11 + $0x60] sm:$0xf]
      %v2227 = vld [vmem:[%s11 + $0x64] sm:$0xf]
      %v2228 = vld [vmem:[%s11 + $0x68] sm:$0xf]
      %v2229 = vld [vmem:[%s11 + $0x6c] sm:$0xf]
      %v2230 = vld [vmem:[%s11 + $0x70] sm:$0xf]
      %v2231 = vld [vmem:[%s11 + $0x74] sm:$0xf]
      %v2232 = vld [vmem:[%s11 + $0x78] sm:$0xf]
      %v2233 = vld [vmem:[%s11 + $0x7c] sm:$0xf]
      %v2234 = vld [vmem:[%s11 + $0x80] sm:$0xf]
      %v2235 = vld [vmem:[%s11 + $0x84] sm:$0xf]
      %v2236 = vld [vmem:[%s11 + $0x88] sm:$0xf]
      %v2237 = vld [vmem:[%s11 + $0x8c] sm:$0xf]
      %v2238 = vld [vmem:[%s11 + $0x90] sm:$0xf]
      %v2239 = vld [vmem:[%s11 + $0x94] sm:$0xf]
      %v2240 = vld [vmem:[%s11 + $0x98] sm:$0xf]
      %v2241 = vld [vmem:[%s11 + $0x9c] sm:$0xf]
      %v2242 = vld [vmem:[%s11 + $0xa0] sm:$0xf]
      %v2243 = vld [vmem:[%s11 + $0xa4] sm:$0xf]
      %v2244 = vld [vmem:[%s11 + $0xa8] sm:$0xf]
      %v2245 = vld [vmem:[%s11 + $0xac] sm:$0xf]
      %v2246 = vld [vmem:[%s11 + $0xb0] sm:$0xf]
      %v2247 = vld [vmem:[%s11 + $0xb4] sm:$0xf]
      %v2248 = vld [vmem:[%s11 + $0xb8] sm:$0xf]
      %v2249 = vld [vmem:[%s11 + $0xbc] sm:$0xf]
      %v2250 = vld [vmem:[%s11 + $0xc0] sm:$0xf]
      %v2251 = vld [vmem:[%s11 + $0xc4] sm:$0xf]
      %v2252 = vld [vmem:[%s11 + $0xc8] sm:$0xf]
      %v2253 = vld [vmem:[%s11 + $0xcc] sm:$0xf]
      %v2254 = vld [vmem:[%s11 + $0xd0] sm:$0xf]
      %v2255 = vld [vmem:[%s11 + $0xd4] sm:$0xf]
      %v2256 = vld [vmem:[%s11 + $0xd8] sm:$0xf]
      %v2257 = vld [vmem:[%s11 + $0xdc] sm:$0xf]
      %v2258 = vld [vmem:[%s11 + $0xe0] sm:$0xf]
      %v2259 = vld [vmem:[%s11 + $0xe4] sm:$0xf]
      %v2260 = vld [vmem:[%s11 + $0xe8] sm:$0xf]
      %v2261 = vld [vmem:[%s11 + $0xec] sm:$0xf]
      %v2262 = vld [vmem:[%s11 + $0xf0] sm:$0xf]
      %v2263 = vld [vmem:[%s11 + $0xf4] sm:$0xf]
      %v2264 = vld [vmem:[%s11 + $0xf8] sm:$0xf]
      %v2265 = vld [vmem:[%s11 + $0xfc] sm:$0xf]
      %v2330 = vunpack.c.l.b16 %v2202
      %v2331 = vunpack.c.l.b16 %v2203
      %v2332 = vunpack.c.l.b16 %v2204
      %v2333 = vunpack.c.l.b16 %v2205
      %v2334 = vunpack.c.l.b16 %v2206
      %v2335 = vunpack.c.l.b16 %v2207
      %v2336 = vunpack.c.l.b16 %v2208
      %v2337 = vunpack.c.l.b16 %v2209
      %v2338 = vunpack.c.l.b16 %v2210
      %v2339 = vunpack.c.l.b16 %v2211
      %v2340 = vunpack.c.l.b16 %v2212
      %v2341 = vunpack.c.l.b16 %v2213
      %v2342 = vunpack.c.l.b16 %v2214
      %v2343 = vunpack.c.l.b16 %v2215
      %v2344 = vunpack.c.l.b16 %v2216
      %v2345 = vunpack.c.l.b16 %v2217
      %v2346 = vunpack.c.l.b16 %v2218
      %v2347 = vunpack.c.l.b16 %v2219
      %v2348 = vunpack.c.l.b16 %v2220
      %v2349 = vunpack.c.l.b16 %v2221
      %v2350 = vunpack.c.l.b16 %v2222
      %v2351 = vunpack.c.l.b16 %v2223
      %v2352 = vunpack.c.l.b16 %v2224
      %v2353 = vunpack.c.l.b16 %v2225
      %v2354 = vunpack.c.l.b16 %v2226
      %v2355 = vunpack.c.l.b16 %v2227
      %v2356 = vunpack.c.l.b16 %v2228
      %v2357 = vunpack.c.l.b16 %v2229
      %v2358 = vunpack.c.l.b16 %v2230
      %v2359 = vunpack.c.l.b16 %v2231
      %v2360 = vunpack.c.l.b16 %v2232
      %v2361 = vunpack.c.l.b16 %v2233
      %v2362 = vunpack.c.l.b16 %v2234
      %v2363 = vunpack.c.l.b16 %v2235
      %v2364 = vunpack.c.l.b16 %v2236
      %v2365 = vunpack.c.l.b16 %v2237
      %v2366 = vunpack.c.l.b16 %v2238
      %v2367 = vunpack.c.l.b16 %v2239
      %v2368 = vunpack.c.l.b16 %v2240
      %v2369 = vunpack.c.l.b16 %v2241
      %v2370 = vunpack.c.l.b16 %v2242
      %v2371 = vunpack.c.l.b16 %v2243
      %v2372 = vunpack.c.l.b16 %v2244
      %v2373 = vunpack.c.l.b16 %v2245
      %v2374 = vunpack.c.l.b16 %v2246
      %v2375 = vunpack.c.l.b16 %v2247
      %v2376 = vunpack.c.l.b16 %v2248
      %v2377 = vunpack.c.l.b16 %v2249
      %v2378 = vunpack.c.l.b16 %v2250
      %v2379 = vunpack.c.l.b16 %v2251
      %v2380 = vunpack.c.l.b16 %v2252
      %v2381 = vunpack.c.l.b16 %v2253
      %v2382 = vunpack.c.l.b16 %v2254
      %v2383 = vunpack.c.l.b16 %v2255
      %v2384 = vunpack.c.l.b16 %v2256
      %v2385 = vunpack.c.l.b16 %v2257
      %v2386 = vunpack.c.l.b16 %v2258
      %v2387 = vunpack.c.l.b16 %v2259
      %v2388 = vunpack.c.l.b16 %v2260
      %v2389 = vunpack.c.l.b16 %v2261
      %v2390 = vunpack.c.l.b16 %v2262
      %v2391 = vunpack.c.l.b16 %v2263
      %v2392 = vunpack.c.l.b16 %v2264
      %v2393 = vunpack.c.l.b16 %v2265
      %v2394 = vpack.c.b16 %v2331, %v2330
      %v2395 = vpack.c.b16 %v2333, %v2332
      %v2396 = vpack.c.b16 %v2335, %v2334
      %v2397 = vpack.c.b16 %v2337, %v2336
      %v2398 = vpack.c.b16 %v2339, %v2338
      %v2399 = vpack.c.b16 %v2341, %v2340
      %v2400 = vpack.c.b16 %v2343, %v2342
      %v2401 = vpack.c.b16 %v2345, %v2344
      %v2402 = vpack.c.b16 %v2347, %v2346
      %v2403 = vpack.c.b16 %v2349, %v2348
      %v2404 = vpack.c.b16 %v2351, %v2350
      %v2405 = vpack.c.b16 %v2353, %v2352
      %v2406 = vpack.c.b16 %v2355, %v2354
      %v2407 = vpack.c.b16 %v2357, %v2356
      %v2408 = vpack.c.b16 %v2359, %v2358
      %v2409 = vpack.c.b16 %v2361, %v2360
      %v2410 = vpack.c.b16 %v2363, %v2362
      %v2411 = vpack.c.b16 %v2365, %v2364
      %v2412 = vpack.c.b16 %v2367, %v2366
      %v2413 = vpack.c.b16 %v2369, %v2368
      %v2414 = vpack.c.b16 %v2371, %v2370
      %v2415 = vpack.c.b16 %v2373, %v2372
      %v2416 = vpack.c.b16 %v2375, %v2374
      %v2417 = vpack.c.b16 %v2377, %v2376
      %v2418 = vpack.c.b16 %v2379, %v2378
      %v2419 = vpack.c.b16 %v2381, %v2380
      %v2420 = vpack.c.b16 %v2383, %v2382
      %v2421 = vpack.c.b16 %v2385, %v2384
      %v2422 = vpack.c.b16 %v2387, %v2386
      %v2423 = vpack.c.b16 %v2389, %v2388
      %v2424 = vpack.c.b16 %v2391, %v2390
      %v2425 = vpack.c.b16 %v2393, %v2392
      %2458 = vmatpush.bf16.msra.mxu0 %v2401
      %2459 = vmatpush.bf16.msra.mxu0 %v2400
      %2460 = vmatpush.bf16.msra.mxu0 %v2399
      %2461 = vmatpush.bf16.msra.mxu0 %v2398
      %2462 = vmatpush.bf16.msra.mxu0 %v2397
      %2463 = vmatpush.bf16.msra.mxu0 %v2396
      %2464 = vmatpush.bf16.msra.mxu0 %v2395
      %2465 = vmatpush.bf16.msra.mxu0 %v2394
      %2466 = vmatmul.bf16.gmra.mxu0 %v2194
      %v2467 = vpop.f32.mrf.mxu0
      %v2468 = vadd.f32 0.0, %v2467
      %v2469 = vpop.f32.mrf.mxu0
      %v2470 = vadd.f32 0.0, %v2469
      %2471 = vmatmul.bf16.gmra.mxu0 %v2198
      %v2472 = vpop.f32.mrf.mxu0
      %v2473 = vadd.f32 0.0, %v2472
      %v2474 = vpop.f32.mrf.mxu0
      %2475 = vdwg.mxu0
      %2476 = vmatpush.bf16.msra.mxu0 %v2409
      %2477 = vmatpush.bf16.msra.mxu0 %v2408
      %2478 = vmatpush.bf16.msra.mxu0 %v2407
      %2479 = vmatpush.bf16.msra.mxu0 %v2406
      %2480 = vmatpush.bf16.msra.mxu0 %v2405
      %2481 = vmatpush.bf16.msra.mxu0 %v2404
      %2482 = vmatpush.bf16.msra.mxu0 %v2403
      %2483 = vmatpush.bf16.msra.mxu0 %v2402
      %2484 = vmatmul.bf16.gmra.mxu0 %v2195
      %v2485 = vpop.f32.mrf.mxu0
      %v2486 = vadd.f32 %v2468, %v2485
      %v2487 = vpop.f32.mrf.mxu0
      %v2488 = vadd.f32 %v2470, %v2487
      %2489 = vmatmul.bf16.gmra.mxu0 %v2199
      %v2490 = vpop.f32.mrf.mxu0
      %v2491 = vadd.f32 %v2473, %v2490
      %v2492 = vpop.f32.mrf.mxu0
      %2493 = vdwg.mxu0
      %2494 = vmatpush.bf16.msra.mxu0 %v2417
      %2495 = vmatpush.bf16.msra.mxu0 %v2416
      %2496 = vmatpush.bf16.msra.mxu0 %v2415
      %2497 = vmatpush.bf16.msra.mxu0 %v2414
      %2498 = vmatpush.bf16.msra.mxu0 %v2413
      %2499 = vmatpush.bf16.msra.mxu0 %v2412
      %2500 = vmatpush.bf16.msra.mxu0 %v2411
      %2501 = vmatpush.bf16.msra.mxu0 %v2410
      %2502 = vmatmul.bf16.gmra.mxu0 %v2196
      %v2503 = vpop.f32.mrf.mxu0
      %v2504 = vadd.f32 %v2486, %v2503
      %v2505 = vpop.f32.mrf.mxu0
      %v2506 = vadd.f32 %v2488, %v2505
      %2507 = vmatmul.bf16.gmra.mxu0 %v2200
      %v2508 = vpop.f32.mrf.mxu0
      %v2509 = vadd.f32 %v2491, %v2508
      %v2510 = vpop.f32.mrf.mxu0
      %2511 = vdwg.mxu0
      %2512 = vmatpush.bf16.msra.mxu0 %v2425
      %2513 = vmatpush.bf16.msra.mxu0 %v2424
      %2514 = vmatpush.bf16.msra.mxu0 %v2423
      %2515 = vmatpush.bf16.msra.mxu0 %v2422
      %2516 = vmatpush.bf16.msra.mxu0 %v2421
      %2517 = vmatpush.bf16.msra.mxu0 %v2420
      %2518 = vmatpush.bf16.msra.mxu0 %v2419
      %2519 = vmatpush.bf16.msra.mxu0 %v2418
      %2520 = vmatmul.bf16.gmra.mxu0 %v2197
      %v2521 = vpop.f32.mrf.mxu0
      %v2522 = vadd.f32 %v2504, %v2521
      %v2523 = vpop.f32.mrf.mxu0
      %v2524 = vadd.f32 %v2506, %v2523
      %2525 = vmatmul.bf16.gmra.mxu0 %v2201
      %v2526 = vpop.f32.mrf.mxu0
      %v2527 = vadd.f32 %v2509, %v2526
      %v2528 = vpop.f32.mrf.mxu0
      %2529 = vdwg.mxu0
      %v2530 = vadd.f32 %v1325, %v2522
      %v2531 = vadd.f32 %v1326, %v2524
      %v2532 = vadd.f32 %v1327, %v2527
      %v2533 = vld [vmem:[%s12] sm:$0x1]
      %v2535 = vperm.slane %v2533, 0
      %v2537 = vadd.f32 %v2530, %v2535
      %v2538 = vadd.f32 %v2531, %v2535
      %v2539 = vadd.f32 %v2532, %v2535
      %2540 = vst [vmem:[%s440] sm:$0xff] %v2537
      %2541 = vst [vmem:[%s440 + $0x8] sm:$0xff] %v2538
      %2542 = vst [vmem:[%s440 + $0x10] sm:$0xff] %v2539
      %p2543 = scmp.lt.s32.totalorder %s24, 1
      %s2544 = scalar_select %p2543, %s24, 1
      %s2545 = smul.addr %s2544, 3
      %s2546 = smul.addr %s2545, 8
      %s2547 = scalar_lea.vmem %s13, %s2546
      // Predicated region
      $region73: #{vit_forward.5} parent=71 // pred_check
        %p2548 = pneg %p320
      $region74: #{vit_forward.5} parent=71 // pred_check_branch
        %2550 = sbr.rel (%p2548) target = $region76
      $region75: #{vit_forward.5} parent=71 // pred_region
        _
      $region76: #{vit_forward.5} parent=71 // pred_fallthru
        _
    $region72: #{vit_forward.5} parent=5 // pred_fallthru
      _
    %p2551 = scmp.le.s32.totalorder 2, %s19
    // Predicated region
    $region77: #{vit_forward.5} parent=5 // pred_check
      %p2552 = pneg %p2551
    $region78: #{vit_forward.5} parent=5 // pred_check_branch
      %2554 = sbr.rel (%p2552) target = $region80
    $region79: #{vit_forward.5} parent=5 // pred_region
      %s2555 = ssub.s32 %s19, 2
      // Predicated region
      $region81: #{vit_forward.5} parent=79 // pred_check
        %p2556 = pneg %p326
      $region82: #{vit_forward.5} parent=79 // pred_check_branch
        %2558 = sbr.rel (%p2556) target = $region84
      $region83: #{vit_forward.5} parent=79 // pred_region
        %p2559 = scmp.lt.s32.totalorder %s25, 1
        %s2560 = scalar_select %p2559, %s25, 1
        %s2561 = smul.addr %s2560, 3
        %s2562 = smul.addr %s2561, 8
        %s2563 = scalar_lea.vmem %s13, %s2562
      $region84: #{vit_forward.5} parent=79 // pred_fallthru
        _
    $region80: #{vit_forward.5} parent=5 // pred_fallthru
      _
  $region6: #{vit_forward.5} parent=0 // loop_footer
    %s23 = sadd.s32 1, %s19
  $region7: #{vit_forward.5} parent=0 // loop_footer_branch
    %18 = sbr.rel target = $region3
  $region8: #{vit_forward.5} parent=0 // loop_exit
    _

</llo_original>
